<compile_context>
chip_gen: v7x
topology: tpu7x:2x2x1
jax: 0.10.0
libtpu: 0.0.40
codegen_flags: <defaults>
</compile_context>

<pallas_src>
import functools
import math

import jax
import jax.numpy as jnp
from jax import lax
from jax.experimental import pallas as pl
from jax.experimental.pallas import tpu as pltpu


# ----------------------------------------------------------------------------
# Pallas kernels
# ----------------------------------------------------------------------------
def _embed_kernel(x_ref, w_ref, b_ref, pe_ref, o_ref):
    # y = x @ W + b + pe   (embedding with positional encoding fused in)
    y = jnp.dot(x_ref[...], w_ref[...], preferred_element_type=jnp.float32)
    o_ref[...] = (y + b_ref[...] + pe_ref[...]).astype(o_ref.dtype)


def _linear_kernel(x_ref, w_ref, b_ref, o_ref):
    # y = x @ W + b   (fused QKV projection)
    y = jnp.dot(x_ref[...], w_ref[...], preferred_element_type=jnp.float32)
    o_ref[...] = (y + b_ref[...]).astype(o_ref.dtype)


def _attn_kernel(q_ref, k_ref, v_ref, o_ref, *, scale):
    # q/k/v refs: (BH, S, Dh) -- whole tensor resident in VMEM, one grid step.
    q = q_ref[...]
    k = k_ref[...]
    v = v_ref[...]
    s = jnp.einsum("bqd,bkd->bqk", q, k, preferred_element_type=jnp.float32)
    s = s * scale
    m = jnp.max(s, axis=-1, keepdims=True)
    p = jnp.exp(s - m)
    l = jnp.sum(p, axis=-1, keepdims=True)
    o = jnp.einsum("bqk,bkd->bqd", p, v, preferred_element_type=jnp.float32)
    o_ref[...] = (o / l).astype(o_ref.dtype)


def _proj_add_ln_kernel(a_ref, w_ref, b_ref, res_ref, g_ref, beta_ref, o_ref,
                        *, eps):
    # LayerNorm(res + a @ W + b) * gamma + beta   (attention output epilogue)
    y = jnp.dot(a_ref[...], w_ref[...], preferred_element_type=jnp.float32)
    y = y + b_ref[...] + res_ref[...]
    mean = jnp.mean(y, axis=-1, keepdims=True)
    yc = y - mean
    var = jnp.mean(yc * yc, axis=-1, keepdims=True)
    inv = lax.rsqrt(var + eps)
    o_ref[...] = (yc * inv * g_ref[...] + beta_ref[...]).astype(o_ref.dtype)


def _ffn_add_ln_kernel(x_ref, w1_ref, b1_ref, w2_ref, b2_ref, g_ref, beta_ref,
                       o_ref, *, eps):
    # LayerNorm(x + relu(x @ W1 + b1) @ W2 + b2) * gamma + beta
    x = x_ref[...]
    h = jnp.dot(x, w1_ref[...], preferred_element_type=jnp.float32) + b1_ref[...]
    h = jnp.maximum(h, 0.0)
    y = jnp.dot(h, w2_ref[...], preferred_element_type=jnp.float32) + b2_ref[...]
    y = y + x
    mean = jnp.mean(y, axis=-1, keepdims=True)
    yc = y - mean
    var = jnp.mean(yc * yc, axis=-1, keepdims=True)
    inv = lax.rsqrt(var + eps)
    o_ref[...] = (yc * inv * g_ref[...] + beta_ref[...]).astype(o_ref.dtype)


# ----------------------------------------------------------------------------
# pallas_call wrappers
# ----------------------------------------------------------------------------
_PARALLEL_1D = pltpu.CompilerParams(dimension_semantics=("parallel",))


def _pick_row_tile(t):
    """Largest tile that divides t and respects sublane tiling (8-divisible),
    falling back to the full extent (block == full array dim is always legal)."""
    for cand in (512, 256, 128, 64, 32, 16, 8):
        if t % cand == 0:
            return cand
    return t


def _row_spec(tm, ncols):
    return pl.BlockSpec((tm, ncols), lambda i: (i, 0))


def _bcast_spec(shape):
    return pl.BlockSpec(shape, lambda i: (0, 0))


def pallas_embed(x, w, b, pe):
    """(x @ w + b + pe); x:(T,K) w:(K,D) b:(1,D) pe:(T,D)."""
    T, K = x.shape
    D = w.shape[1]
    tm = _pick_row_tile(T)
    return pl.pallas_call(
        _embed_kernel,
        out_shape=jax.ShapeDtypeStruct((T, D), jnp.float32),
        grid=(T // tm,),
        in_specs=[_row_spec(tm, K), _bcast_spec((K, D)), _bcast_spec((1, D)),
                  _row_spec(tm, D)],
        out_specs=_row_spec(tm, D),
        compiler_params=_PARALLEL_1D,
    )(x, w, b, pe)


def pallas_linear(x, w, b):
    """x @ w + b; x:(T,K) w:(K,N) b:(1,N)."""
    T, K = x.shape
    N = w.shape[1]
    tm = _pick_row_tile(T)
    return pl.pallas_call(
        _linear_kernel,
        out_shape=jax.ShapeDtypeStruct((T, N), jnp.float32),
        grid=(T // tm,),
        in_specs=[_row_spec(tm, K), _bcast_spec((K, N)), _bcast_spec((1, N))],
        out_specs=_row_spec(tm, N),
        compiler_params=_PARALLEL_1D,
    )(x, w, b)


def pallas_attention(q, k, v, scale):
    """Batched softmax attention; q/k/v: (B*H, S, Dh)."""
    BH, S, Dh = q.shape
    kernel = functools.partial(_attn_kernel, scale=float(scale))
    spec = pl.BlockSpec((BH, S, Dh), lambda i: (0, 0, 0))
    return pl.pallas_call(
        kernel,
        out_shape=jax.ShapeDtypeStruct((BH, S, Dh), jnp.float32),
        grid=(1,),
        in_specs=[spec, spec, spec],
        out_specs=spec,
        compiler_params=pltpu.CompilerParams(dimension_semantics=("arbitrary",)),
    )(q, k, v)


def pallas_proj_add_ln(a, w, b, res, gamma, beta, eps=1e-5):
    """LayerNorm(res + a @ w + b) * gamma + beta; a:(T,D) w:(D,D)."""
    T, D = a.shape
    N = w.shape[1]
    tm = _pick_row_tile(T)
    kernel = functools.partial(_proj_add_ln_kernel, eps=float(eps))
    return pl.pallas_call(
        kernel,
        out_shape=jax.ShapeDtypeStruct((T, N), jnp.float32),
        grid=(T // tm,),
        in_specs=[_row_spec(tm, D), _bcast_spec((D, N)), _bcast_spec((1, N)),
                  _row_spec(tm, N), _bcast_spec((1, N)), _bcast_spec((1, N))],
        out_specs=_row_spec(tm, N),
        compiler_params=_PARALLEL_1D,
    )(a, w, b, res, gamma, beta)


def pallas_ffn_add_ln(x, w1, b1, w2, b2, gamma, beta, eps=1e-5):
    """LayerNorm(x + relu(x @ w1 + b1) @ w2 + b2) * gamma + beta."""
    T, D = x.shape
    F = w1.shape[1]
    tm = _pick_row_tile(T)
    kernel = functools.partial(_ffn_add_ln_kernel, eps=float(eps))
    return pl.pallas_call(
        kernel,
        out_shape=jax.ShapeDtypeStruct((T, D), jnp.float32),
        grid=(T // tm,),
        in_specs=[_row_spec(tm, D), _bcast_spec((D, F)), _bcast_spec((1, F)),
                  _bcast_spec((F, D)), _bcast_spec((1, D)),
                  _bcast_spec((1, D)), _bcast_spec((1, D))],
        out_specs=_row_spec(tm, D),
        compiler_params=_PARALLEL_1D,
    )(x, w1, b1, w2, b2, gamma, beta)


# ----------------------------------------------------------------------------
# Model: parameters + forward
# ----------------------------------------------------------------------------
def make_positional_encoding(max_len, d_model):
    position = jnp.arange(max_len, dtype=jnp.float32)[:, None]
    div_term = jnp.exp(
        jnp.arange(0, d_model, 2, dtype=jnp.float32) * (-math.log(10000.0) / d_model)
    )
    angles = position * div_term
    pe = jnp.zeros((max_len, d_model), jnp.float32)
    pe = pe.at[:, 0::2].set(jnp.sin(angles))
    pe = pe.at[:, 1::2].set(jnp.cos(angles))
    return pe


def _init_linear(key, fan_in, fan_out):
    kw, kb = jax.random.split(key)
    w = jax.random.normal(kw, (fan_in, fan_out), jnp.float32) / jnp.sqrt(
        jnp.float32(fan_in)
    )
    b = 0.01 * jax.random.normal(kb, (1, fan_out), jnp.float32)
    return w, b


def init_params(key, input_dim, d_model, nhead, num_layers, dim_feedforward,
                max_len=64):
    assert d_model % nhead == 0
    keys = jax.random.split(key, 1 + num_layers)
    emb_w, emb_b = _init_linear(keys[0], input_dim, d_model)
    layers = []
    for l in range(num_layers):
        lk = jax.random.split(keys[1 + l], 4)
        qkv_w, qkv_b = _init_linear(lk[0], d_model, 3 * d_model)
        out_w, out_b = _init_linear(lk[1], d_model, d_model)
        ff1_w, ff1_b = _init_linear(lk[2], d_model, dim_feedforward)
        ff2_w, ff2_b = _init_linear(lk[3], dim_feedforward, d_model)
        layers.append(dict(
            qkv_w=qkv_w, qkv_b=qkv_b, out_w=out_w, out_b=out_b,
            ff1_w=ff1_w, ff1_b=ff1_b, ff2_w=ff2_w, ff2_b=ff2_b,
            ln1_g=jnp.ones((1, d_model), jnp.float32),
            ln1_b=jnp.zeros((1, d_model), jnp.float32),
            ln2_g=jnp.ones((1, d_model), jnp.float32),
            ln2_b=jnp.zeros((1, d_model), jnp.float32),
        ))
    pe = make_positional_encoding(max_len, d_model)
    return dict(emb_w=emb_w, emb_b=emb_b, pe=pe, layers=layers)


def transformer_encoder_forward(src, params, *, nhead):
    """src: (S, B, input_dim) -> (S, B, d_model); eval-mode, mask=None."""
    S, B, In = src.shape
    D = params["emb_w"].shape[1]
    H = nhead
    Dh = D // H
    T = S * B

    x2d = src.reshape(T, In).astype(jnp.float32)
    # Positional-encoding slab broadcast over batch (layout plumbing only),
    # fused into the embedding matmul kernel as an extra add operand.
    pe_slab = jnp.broadcast_to(params["pe"][:S][:, None, :], (S, B, D)).reshape(T, D)
    x = pallas_embed(x2d, params["emb_w"], params["emb_b"], pe_slab)

    def split_heads(t):  # (T, D) -> (B*H, S, Dh)
        return t.reshape(S, B, H, Dh).transpose(1, 2, 0, 3).reshape(B * H, S, Dh)

    def merge_heads(t):  # (B*H, S, Dh) -> (T, D)
        return t.reshape(B, H, S, Dh).transpose(2, 0, 1, 3).reshape(T, D)

    scale = 1.0 / math.sqrt(Dh)
    for lyr in params["layers"]:
        # --- self attention ---
        qkv = pallas_linear(x, lyr["qkv_w"], lyr["qkv_b"])          # (T, 3D)
        q, k, v = jnp.split(qkv, 3, axis=-1)
        attn = pallas_attention(split_heads(q), split_heads(k), split_heads(v),
                                scale)
        # out-projection + residual + LayerNorm fused in one kernel
        x = pallas_proj_add_ln(merge_heads(attn), lyr["out_w"], lyr["out_b"],
                               x, lyr["ln1_g"], lyr["ln1_b"])
        # --- feed forward (linear1 + ReLU + linear2 + residual + LN fused) ---
        x = pallas_ffn_add_ln(x, lyr["ff1_w"], lyr["ff1_b"],
                              lyr["ff2_w"], lyr["ff2_b"],
                              lyr["ln2_g"], lyr["ln2_b"])

    return x.reshape(S, B, D)


# ----------------------------------------------------------------------------
# Pure-JAX reference (same math) for correctness checking
# ----------------------------------------------------------------------------
def _layernorm_ref(x, g, b, eps=1e-5):
    m = jnp.mean(x, axis=-1, keepdims=True)
    v = jnp.mean((x - m) ** 2, axis=-1, keepdims=True)
    return (x - m) * lax.rsqrt(v + eps) * g + b


def reference_forward(src, params, *, nhead):
    S, B, In = src.shape
    D = params["emb_w"].shape[1]
    H = nhead
    Dh = D // H
    T = S * B
    hi = lax.Precision.HIGHEST

    x = jnp.dot(src.reshape(T, In), params["emb_w"], precision=hi) + params["emb_b"]
    x = x + jnp.broadcast_to(params["pe"][:S][:, None, :], (S, B, D)).reshape(T, D)

    def heads(t):
        return t.reshape(S, B, H, Dh).transpose(1, 2, 0, 3).reshape(B * H, S, Dh)

    for lyr in params["layers"]:
        qkv = jnp.dot(x, lyr["qkv_w"], precision=hi) + lyr["qkv_b"]
        q, k, v = jnp.split(qkv, 3, axis=-1)
        qh, kh, vh = heads(q), heads(k), heads(v)
        s = jnp.einsum("bqd,bkd->bqk", qh, kh, precision=hi) / math.sqrt(Dh)
        p = jax.nn.softmax(s, axis=-1)
        a = jnp.einsum("bqk,bkd->bqd", p, vh, precision=hi)
        a2d = a.reshape(B, H, S, Dh).transpose(2, 0, 1, 3).reshape(T, D)
        attn_out = jnp.dot(a2d, lyr["out_w"], precision=hi) + lyr["out_b"]
        x = _layernorm_ref(x + attn_out, lyr["ln1_g"], lyr["ln1_b"])
        h = jnp.maximum(jnp.dot(x, lyr["ff1_w"], precision=hi) + lyr["ff1_b"], 0.0)
        y = jnp.dot(h, lyr["ff2_w"], precision=hi) + lyr["ff2_b"]
        x = _layernorm_ref(x + y, lyr["ln2_g"], lyr["ln2_b"])
    return x.reshape(S, B, D)


# ----------------------------------------------------------------------------
if __name__ == "__main__":
    key = jax.random.PRNGKey(0)
    k_src, k_par = jax.random.split(key)

    seq_len, batch, input_dim = 8, 2, 16
    d_model, nhead, num_layers, dim_ff = 32, 4, 2, 64

    src = jax.random.normal(k_src, (seq_len, batch, input_dim), dtype=jnp.float32)
    params = init_params(k_par, input_dim, d_model, nhead, num_layers, dim_ff,
                         max_len=64)

    fwd = jax.jit(functools.partial(transformer_encoder_forward, nhead=nhead))
    out = jax.block_until_ready(fwd(src, params))
    assert out.shape == (seq_len, batch, d_model)

    ref = reference_forward(src, params, nhead=nhead)
    max_err = float(jnp.max(jnp.abs(out - ref)))
    assert jnp.allclose(out, ref, rtol=2e-3, atol=2e-3), max_err

    print("KERNEL_OK")
</pallas_src>

<mosaic_0001>
module attributes {stable_mosaic.version = 11 : i64} {
  func.func @_embed_kernel(%arg0: i32, %arg1: memref<16x16xf32, #tpu.memory_space<vmem>>, %arg2: memref<16x32xf32, #tpu.memory_space<vmem>>, %arg3: memref<1x32xf32, #tpu.memory_space<vmem>>, %arg4: memref<16x32xf32, #tpu.memory_space<vmem>>, %arg5: memref<16x32xf32, #tpu.memory_space<vmem>>) attributes {dimension_semantics = [#tpu.dimension_semantics<parallel>], iteration_bounds = array<i64: 1>, scalar_prefetch = 0 : i64, scratch_operands = 0 : i64, tpu.core_type = #tpu.core_type<tc>, window_params = [{transform_indices = @transform_0, window_bounds = array<i64: 16, 16>}, {pipeline_mode = #tpu.pipeline_mode<synchronous>, transform_indices = @transform_1, window_bounds = array<i64: 16, 32>}, {pipeline_mode = #tpu.pipeline_mode<synchronous>, transform_indices = @transform_2, window_bounds = array<i64: 1, 32>}, {transform_indices = @transform_3, window_bounds = array<i64: 16, 32>}, {transform_indices = @transform_4, window_bounds = array<i64: 16, 32>}]} {
    %c0 = arith.constant 0 : index
    %c0_0 = arith.constant 0 : index
    %0 = vector.load %arg1[%c0, %c0_0] : memref<16x16xf32, #tpu.memory_space<vmem>>, vector<16x16xf32>
    %c0_1 = arith.constant 0 : index
    %c0_2 = arith.constant 0 : index
    %1 = vector.load %arg2[%c0_1, %c0_2] : memref<16x32xf32, #tpu.memory_space<vmem>>, vector<16x32xf32>
    %cst = arith.constant dense<0.000000e+00> : vector<16x32xf32>
    %2 = tpu.matmul %0, %1, %cst {dimension_numbers = #tpu.dot_dimension_numbers<[1], [0], [0], [1], [0, 0, 1, 1], [], []>} : vector<16x16xf32>, vector<16x32xf32>, vector<16x32xf32> -> vector<16x32xf32>
    %c0_3 = arith.constant 0 : index
    %c0_4 = arith.constant 0 : index
    %3 = vector.load %arg3[%c0_3, %c0_4] : memref<1x32xf32, #tpu.memory_space<vmem>>, vector<1x32xf32>
    %4 = vector.broadcast %3 : vector<1x32xf32> to vector<16x32xf32>
    %5 = arith.addf %2, %4 : vector<16x32xf32>
    %c0_5 = arith.constant 0 : index
    %c0_6 = arith.constant 0 : index
    %6 = vector.load %arg4[%c0_5, %c0_6] : memref<16x32xf32, #tpu.memory_space<vmem>>, vector<16x32xf32>
    %7 = arith.addf %5, %6 : vector<16x32xf32>
    %c0_7 = arith.constant 0 : index
    %c0_8 = arith.constant 0 : index
    %8 = vector.load %arg5[%c0_7, %c0_8] : memref<16x32xf32, #tpu.memory_space<vmem>>, vector<16x32xf32>
    tpu.vector_store %arg5[%c0_7, %c0_8], %7 {strides = array<i32>} : memref<16x32xf32, #tpu.memory_space<vmem>>, vector<16x32xf32>,
    return
  }
  func.func @transform_0(%arg0: i32) -> (i32, i32) {
    %c0_i32 = arith.constant 0 : i32
    %c0_i32_0 = arith.constant 0 : i32
    return %arg0, %c0_i32 : i32, i32
  }
  func.func @transform_1(%arg0: i32) -> (i32, i32) {
    %c0_i32 = arith.constant 0 : i32
    %c0_i32_0 = arith.constant 0 : i32
    %c0_i32_1 = arith.constant 0 : i32
    return %c0_i32, %c0_i32_0 : i32, i32
  }
  func.func @transform_2(%arg0: i32) -> (i32, i32) {
    %c0_i32 = arith.constant 0 : i32
    %c0_i32_0 = arith.constant 0 : i32
    %c0_i32_1 = arith.constant 0 : i32
    return %c0_i32, %c0_i32_0 : i32, i32
  }
  func.func @transform_3(%arg0: i32) -> (i32, i32) {
    %c0_i32 = arith.constant 0 : i32
    %c0_i32_0 = arith.constant 0 : i32
    return %arg0, %c0_i32 : i32, i32
  }
  func.func @transform_4(%arg0: i32) -> (i32, i32) {
    %c0_i32 = arith.constant 0 : i32
    %c0_i32_0 = arith.constant 0 : i32
    return %arg0, %c0_i32 : i32, i32
  }
}

module attributes {stable_mosaic.version = 11 : i64} {
  func.func @_linear_kernel(%arg0: i32, %arg1: memref<16x32xf32, #tpu.memory_space<vmem>>, %arg2: memref<32x96xf32, #tpu.memory_space<vmem>>, %arg3: memref<1x96xf32, #tpu.memory_space<vmem>>, %arg4: memref<16x96xf32, #tpu.memory_space<vmem>>) attributes {dimension_semantics = [#tpu.dimension_semantics<parallel>], iteration_bounds = array<i64: 1>, scalar_prefetch = 0 : i64, scratch_operands = 0 : i64, tpu.core_type = #tpu.core_type<tc>, window_params = [{transform_indices = @transform_0, window_bounds = array<i64: 16, 32>}, {pipeline_mode = #tpu.pipeline_mode<synchronous>, transform_indices = @transform_1, window_bounds = array<i64: 32, 96>}, {pipeline_mode = #tpu.pipeline_mode<synchronous>, transform_indices = @transform_2, window_bounds = array<i64: 1, 96>}, {transform_indices = @transform_3, window_bounds = array<i64: 16, 96>}]} {
    %c0 = arith.constant 0 : index
    %c0_0 = arith.constant 0 : index
    %0 = vector.load %arg1[%c0, %c0_0] : memref<16x32xf32, #tpu.memory_space<vmem>>, vector<16x32xf32>
    %c0_1 = arith.constant 0 : index
    %c0_2 = arith.constant 0 : index
    %1 = vector.load %arg2[%c0_1, %c0_2] : memref<32x96xf32, #tpu.memory_space<vmem>>, vector<32x96xf32>
    %cst = arith.constant dense<0.000000e+00> : vector<16x96xf32>
    %2 = tpu.matmul %0, %1, %cst {dimension_numbers = #tpu.dot_dimension_numbers<[1], [0], [0], [1], [0, 0, 1, 1], [], []>} : vector<16x32xf32>, vector<32x96xf32>, vector<16x96xf32> -> vector<16x96xf32>
    %c0_3 = arith.constant 0 : index
    %c0_4 = arith.constant 0 : index
    %3 = vector.load %arg3[%c0_3, %c0_4] : memref<1x96xf32, #tpu.memory_space<vmem>>, vector<1x96xf32>
    %4 = vector.broadcast %3 : vector<1x96xf32> to vector<16x96xf32>
    %5 = arith.addf %2, %4 : vector<16x96xf32>
    %c0_5 = arith.constant 0 : index
    %c0_6 = arith.constant 0 : index
    %6 = vector.load %arg4[%c0_5, %c0_6] : memref<16x96xf32, #tpu.memory_space<vmem>>, vector<16x96xf32>
    tpu.vector_store %arg4[%c0_5, %c0_6], %5 {strides = array<i32>} : memref<16x96xf32, #tpu.memory_space<vmem>>, vector<16x96xf32>,
    return
  }
  func.func @transform_0(%arg0: i32) -> (i32, i32) {
    %c0_i32 = arith.constant 0 : i32
    %c0_i32_0 = arith.constant 0 : i32
    return %arg0, %c0_i32 : i32, i32
  }
  func.func @transform_1(%arg0: i32) -> (i32, i32) {
    %c0_i32 = arith.constant 0 : i32
    %c0_i32_0 = arith.constant 0 : i32
    %c0_i32_1 = arith.constant 0 : i32
    return %c0_i32, %c0_i32_0 : i32, i32
  }
  func.func @transform_2(%arg0: i32) -> (i32, i32) {
    %c0_i32 = arith.constant 0 : i32
    %c0_i32_0 = arith.constant 0 : i32
    %c0_i32_1 = arith.constant 0 : i32
    return %c0_i32, %c0_i32_0 : i32, i32
  }
  func.func @transform_3(%arg0: i32) -> (i32, i32) {
    %c0_i32 = arith.constant 0 : i32
    %c0_i32_0 = arith.constant 0 : i32
    return %arg0, %c0_i32 : i32, i32
  }
}

module attributes {stable_mosaic.version = 11 : i64} {
  func.func @_attn_kernel(%arg0: i32, %arg1: memref<8x8x8xf32, #tpu.memory_space<vmem>>, %arg2: memref<8x8x8xf32, #tpu.memory_space<vmem>>, %arg3: memref<8x8x8xf32, #tpu.memory_space<vmem>>, %arg4: memref<8x8x8xf32, #tpu.memory_space<vmem>>) attributes {dimension_semantics = [#tpu.dimension_semantics<arbitrary>], iteration_bounds = array<i64: 1>, scalar_prefetch = 0 : i64, scratch_operands = 0 : i64, tpu.core_type = #tpu.core_type<tc>, window_params = [{pipeline_mode = #tpu.pipeline_mode<synchronous>, transform_indices = @transform_0, window_bounds = array<i64: 8, 8, 8>}, {pipeline_mode = #tpu.pipeline_mode<synchronous>, transform_indices = @transform_1, window_bounds = array<i64: 8, 8, 8>}, {pipeline_mode = #tpu.pipeline_mode<synchronous>, transform_indices = @transform_2, window_bounds = array<i64: 8, 8, 8>}, {pipeline_mode = #tpu.pipeline_mode<synchronous>, transform_indices = @transform_3, window_bounds = array<i64: 8, 8, 8>}]} {
    %c0 = arith.constant 0 : index
    %c0_0 = arith.constant 0 : index
    %c0_1 = arith.constant 0 : index
    %0 = vector.load %arg1[%c0, %c0_0, %c0_1] : memref<8x8x8xf32, #tpu.memory_space<vmem>>, vector<8x8x8xf32>
    %c0_2 = arith.constant 0 : index
    %c0_3 = arith.constant 0 : index
    %c0_4 = arith.constant 0 : index
    %1 = vector.load %arg2[%c0_2, %c0_3, %c0_4] : memref<8x8x8xf32, #tpu.memory_space<vmem>>, vector<8x8x8xf32>
    %c0_5 = arith.constant 0 : index
    %c0_6 = arith.constant 0 : index
    %c0_7 = arith.constant 0 : index
    %2 = vector.load %arg3[%c0_5, %c0_6, %c0_7] : memref<8x8x8xf32, #tpu.memory_space<vmem>>, vector<8x8x8xf32>
    "tpu.trace_start"() <{level = 10 : i32, message = "bqd,bkd->bqk"}> : () -> ()
    %cst = arith.constant dense<0.000000e+00> : vector<8x8x8xf32>
    %3 = tpu.matmul %0, %1, %cst {dimension_numbers = #tpu.dot_dimension_numbers<[2], [2], [1], [1], [0, 0, 0, 1, 1, 1], [0], [0]>} : vector<8x8x8xf32>, vector<8x8x8xf32>, vector<8x8x8xf32> -> vector<8x8x8xf32>
    "tpu.trace_stop"() : () -> ()
    %cst_8 = arith.constant 0.353553385 : f32
    %4 = vector.broadcast %cst_8 : f32 to vector<8x8x8xf32>
    %5 = arith.mulf %3, %4 : vector<8x8x8xf32>
    %cst_9 = arith.constant dense<0xFF800000> : vector<8x8xf32>
    %6 = vector.multi_reduction <maximumf>, %5, %cst_9 [2] : vector<8x8x8xf32> to vector<8x8xf32>
    %7 = vector.shape_cast %6 : vector<8x8xf32> to vector<8x8x1xf32>
    %8 = vector.broadcast %7 : vector<8x8x1xf32> to vector<8x8x8xf32>
    %9 = arith.subf %5, %8 : vector<8x8x8xf32>
    %10 = math.exp %9 : vector<8x8x8xf32>
    %cst_10 = arith.constant dense<0.000000e+00> : vector<8x8xf32>
    %11 = vector.multi_reduction <add>, %10, %cst_10 [2] : vector<8x8x8xf32> to vector<8x8xf32>
    %12 = vector.shape_cast %11 : vector<8x8xf32> to vector<8x8x1xf32>
    "tpu.trace_start"() <{level = 10 : i32, message = "bqk,bkd->bqd"}> : () -> ()
    %cst_11 = arith.constant dense<0.000000e+00> : vector<8x8x8xf32>
    %13 = tpu.matmul %10, %2, %cst_11 {dimension_numbers = #tpu.dot_dimension_numbers<[2], [1], [1], [2], [0, 0, 0, 1, 1, 2], [0], [0]>} : vector<8x8x8xf32>, vector<8x8x8xf32>, vector<8x8x8xf32> -> vector<8x8x8xf32>
    "tpu.trace_stop"() : () -> ()
    %14 = vector.broadcast %12 : vector<8x8x1xf32> to vector<8x8x8xf32>
    %15 = arith.divf %13, %14 : vector<8x8x8xf32>
    %c0_12 = arith.constant 0 : index
    %c0_13 = arith.constant 0 : index
    %c0_14 = arith.constant 0 : index
    %16 = vector.load %arg4[%c0_12, %c0_13, %c0_14] : memref<8x8x8xf32, #tpu.memory_space<vmem>>, vector<8x8x8xf32>
    tpu.vector_store %arg4[%c0_12, %c0_13, %c0_14], %15 {strides = array<i32>} : memref<8x8x8xf32, #tpu.memory_space<vmem>>, vector<8x8x8xf32>,
    return
  }
  func.func @transform_0(%arg0: i32) -> (i32, i32, i32) {
    %c0_i32 = arith.constant 0 : i32
    %c0_i32_0 = arith.constant 0 : i32
    %c0_i32_1 = arith.constant 0 : i32
    %c0_i32_2 = arith.constant 0 : i32
    return %c0_i32, %c0_i32_0, %c0_i32_1 : i32, i32, i32
  }
  func.func @transform_1(%arg0: i32) -> (i32, i32, i32) {
    %c0_i32 = arith.constant 0 : i32
    %c0_i32_0 = arith.constant 0 : i32
    %c0_i32_1 = arith.constant 0 : i32
    %c0_i32_2 = arith.constant 0 : i32
    return %c0_i32, %c0_i32_0, %c0_i32_1 : i32, i32, i32
  }
  func.func @transform_2(%arg0: i32) -> (i32, i32, i32) {
    %c0_i32 = arith.constant 0 : i32
    %c0_i32_0 = arith.constant 0 : i32
    %c0_i32_1 = arith.constant 0 : i32
    %c0_i32_2 = arith.constant 0 : i32
    return %c0_i32, %c0_i32_0, %c0_i32_1 : i32, i32, i32
  }
  func.func @transform_3(%arg0: i32) -> (i32, i32, i32) {
    %c0_i32 = arith.constant 0 : i32
    %c0_i32_0 = arith.constant 0 : i32
    %c0_i32_1 = arith.constant 0 : i32
    %c0_i32_2 = arith.constant 0 : i32
    return %c0_i32, %c0_i32_0, %c0_i32_1 : i32, i32, i32
  }
}

module attributes {stable_mosaic.version = 11 : i64} {
  func.func @_ffn_add_ln_kernel(%arg0: i32, %arg1: memref<16x32xf32, #tpu.memory_space<vmem>>, %arg2: memref<32x64xf32, #tpu.memory_space<vmem>>, %arg3: memref<1x64xf32, #tpu.memory_space<vmem>>, %arg4: memref<64x32xf32, #tpu.memory_space<vmem>>, %arg5: memref<1x32xf32, #tpu.memory_space<vmem>>, %arg6: memref<1x32xf32, #tpu.memory_space<vmem>>, %arg7: memref<1x32xf32, #tpu.memory_space<vmem>>, %arg8: memref<16x32xf32, #tpu.memory_space<vmem>>) attributes {dimension_semantics = [#tpu.dimension_semantics<parallel>], iteration_bounds = array<i64: 1>, scalar_prefetch = 0 : i64, scratch_operands = 0 : i64, tpu.core_type = #tpu.core_type<tc>, window_params = [{transform_indices = @transform_0, window_bounds = array<i64: 16, 32>}, {pipeline_mode = #tpu.pipeline_mode<synchronous>, transform_indices = @transform_1, window_bounds = array<i64: 32, 64>}, {pipeline_mode = #tpu.pipeline_mode<synchronous>, transform_indices = @transform_2, window_bounds = array<i64: 1, 64>}, {pipeline_mode = #tpu.pipeline_mode<synchronous>, transform_indices = @transform_3, window_bounds = array<i64: 64, 32>}, {pipeline_mode = #tpu.pipeline_mode<synchronous>, transform_indices = @transform_4, window_bounds = array<i64: 1, 32>}, {pipeline_mode = #tpu.pipeline_mode<synchronous>, transform_indices = @transform_5, window_bounds = array<i64: 1, 32>}, {pipeline_mode = #tpu.pipeline_mode<synchronous>, transform_indices = @transform_6, window_bounds = array<i64: 1, 32>}, {transform_indices = @transform_7, window_bounds = array<i64: 16, 32>}]} {
    %c0 = arith.constant 0 : index
    %c0_0 = arith.constant 0 : index
    %0 = vector.load %arg1[%c0, %c0_0] : memref<16x32xf32, #tpu.memory_space<vmem>>, vector<16x32xf32>
    %c0_1 = arith.constant 0 : index
    %c0_2 = arith.constant 0 : index
    %1 = vector.load %arg2[%c0_1, %c0_2] : memref<32x64xf32, #tpu.memory_space<vmem>>, vector<32x64xf32>
    %cst = arith.constant dense<0.000000e+00> : vector<16x64xf32>
    %2 = tpu.matmul %0, %1, %cst {dimension_numbers = #tpu.dot_dimension_numbers<[1], [0], [0], [1], [0, 0, 1, 1], [], []>} : vector<16x32xf32>, vector<32x64xf32>, vector<16x64xf32> -> vector<16x64xf32>
    %c0_3 = arith.constant 0 : index
    %c0_4 = arith.constant 0 : index
    %3 = vector.load %arg3[%c0_3, %c0_4] : memref<1x64xf32, #tpu.memory_space<vmem>>, vector<1x64xf32>
    %4 = vector.broadcast %3 : vector<1x64xf32> to vector<16x64xf32>
    %5 = arith.addf %2, %4 : vector<16x64xf32>
    %cst_5 = arith.constant 0.000000e+00 : f32
    %6 = vector.broadcast %cst_5 : f32 to vector<16x64xf32>
    %7 = arith.maximumf %5, %6 : vector<16x64xf32>
    %c0_6 = arith.constant 0 : index
    %c0_7 = arith.constant 0 : index
    %8 = vector.load %arg4[%c0_6, %c0_7] : memref<64x32xf32, #tpu.memory_space<vmem>>, vector<64x32xf32>
    %cst_8 = arith.constant dense<0.000000e+00> : vector<16x32xf32>
    %9 = tpu.matmul %7, %8, %cst_8 {dimension_numbers = #tpu.dot_dimension_numbers<[1], [0], [0], [1], [0, 0, 1, 1], [], []>} : vector<16x64xf32>, vector<64x32xf32>, vector<16x32xf32> -> vector<16x32xf32>
    %c0_9 = arith.constant 0 : index
    %c0_10 = arith.constant 0 : index
    %10 = vector.load %arg5[%c0_9, %c0_10] : memref<1x32xf32, #tpu.memory_space<vmem>>, vector<1x32xf32>
    %11 = vector.broadcast %10 : vector<1x32xf32> to vector<16x32xf32>
    %12 = arith.addf %9, %11 : vector<16x32xf32>
    %13 = arith.addf %12, %0 : vector<16x32xf32>
    %cst_11 = arith.constant dense<0.000000e+00> : vector<16xf32>
    %14 = vector.multi_reduction <add>, %13, %cst_11 [1] : vector<16x32xf32> to vector<16xf32>
    %15 = vector.shape_cast %14 : vector<16xf32> to vector<16x1xf32>
    %cst_12 = arith.constant 3.200000e+01 : f32
    %16 = vector.broadcast %cst_12 : f32 to vector<16x1xf32>
    %17 = arith.divf %15, %16 : vector<16x1xf32>
    %18 = vector.broadcast %17 : vector<16x1xf32> to vector<16x32xf32>
    %19 = arith.subf %13, %18 : vector<16x32xf32>
    %20 = arith.mulf %19, %19 : vector<16x32xf32>
    %cst_13 = arith.constant dense<0.000000e+00> : vector<16xf32>
    %21 = vector.multi_reduction <add>, %20, %cst_13 [1] : vector<16x32xf32> to vector<16xf32>
    %22 = vector.shape_cast %21 : vector<16xf32> to vector<16x1xf32>
    %cst_14 = arith.constant 3.200000e+01 : f32
    %23 = vector.broadcast %cst_14 : f32 to vector<16x1xf32>
    %24 = arith.divf %22, %23 : vector<16x1xf32>
    %cst_15 = arith.constant 9.99999974E-6 : f32
    %25 = vector.broadcast %cst_15 : f32 to vector<16x1xf32>
    %26 = arith.addf %24, %25 : vector<16x1xf32>
    %27 = math.rsqrt %26 : vector<16x1xf32>
    %28 = vector.broadcast %27 : vector<16x1xf32> to vector<16x32xf32>
    %29 = arith.mulf %19, %28 : vector<16x32xf32>
    %c0_16 = arith.constant 0 : index
    %c0_17 = arith.constant 0 : index
    %30 = vector.load %arg6[%c0_16, %c0_17] : memref<1x32xf32, #tpu.memory_space<vmem>>, vector<1x32xf32>
    %31 = vector.broadcast %30 : vector<1x32xf32> to vector<16x32xf32>
    %32 = arith.mulf %29, %31 : vector<16x32xf32>
    %c0_18 = arith.constant 0 : index
    %c0_19 = arith.constant 0 : index
    %33 = vector.load %arg7[%c0_18, %c0_19] : memref<1x32xf32, #tpu.memory_space<vmem>>, vector<1x32xf32>
    %34 = vector.broadcast %33 : vector<1x32xf32> to vector<16x32xf32>
    %35 = arith.addf %32, %34 : vector<16x32xf32>
    %c0_20 = arith.constant 0 : index
    %c0_21 = arith.constant 0 : index
    %36 = vector.load %arg8[%c0_20, %c0_21] : memref<16x32xf32, #tpu.memory_space<vmem>>, vector<16x32xf32>
    tpu.vector_store %arg8[%c0_20, %c0_21], %35 {strides = array<i32>} : memref<16x32xf32, #tpu.memory_space<vmem>>, vector<16x32xf32>,
    return
  }
  func.func @transform_0(%arg0: i32) -> (i32, i32) {
    %c0_i32 = arith.constant 0 : i32
    %c0_i32_0 = arith.constant 0 : i32
    return %arg0, %c0_i32 : i32, i32
  }
  func.func @transform_1(%arg0: i32) -> (i32, i32) {
    %c0_i32 = arith.constant 0 : i32
    %c0_i32_0 = arith.constant 0 : i32
    %c0_i32_1 = arith.constant 0 : i32
    return %c0_i32, %c0_i32_0 : i32, i32
  }
  func.func @transform_2(%arg0: i32) -> (i32, i32) {
    %c0_i32 = arith.constant 0 : i32
    %c0_i32_0 = arith.constant 0 : i32
    %c0_i32_1 = arith.constant 0 : i32
    return %c0_i32, %c0_i32_0 : i32, i32
  }
  func.func @transform_3(%arg0: i32) -> (i32, i32) {
    %c0_i32 = arith.constant 0 : i32
    %c0_i32_0 = arith.constant 0 : i32
    %c0_i32_1 = arith.constant 0 : i32
    return %c0_i32, %c0_i32_0 : i32, i32
  }
  func.func @transform_4(%arg0: i32) -> (i32, i32) {
    %c0_i32 = arith.constant 0 : i32
    %c0_i32_0 = arith.constant 0 : i32
    %c0_i32_1 = arith.constant 0 : i32
    return %c0_i32, %c0_i32_0 : i32, i32
  }
  func.func @transform_5(%arg0: i32) -> (i32, i32) {
    %c0_i32 = arith.constant 0 : i32
    %c0_i32_0 = arith.constant 0 : i32
    %c0_i32_1 = arith.constant 0 : i32
    return %c0_i32, %c0_i32_0 : i32, i32
  }
  func.func @transform_6(%arg0: i32) -> (i32, i32) {
    %c0_i32 = arith.constant 0 : i32
    %c0_i32_0 = arith.constant 0 : i32
    %c0_i32_1 = arith.constant 0 : i32
    return %c0_i32, %c0_i32_0 : i32, i32
  }
  func.func @transform_7(%arg0: i32) -> (i32, i32) {
    %c0_i32 = arith.constant 0 : i32
    %c0_i32_0 = arith.constant 0 : i32
    return %arg0, %c0_i32 : i32, i32
  }
}

module attributes {stable_mosaic.version = 11 : i64} {
  func.func @_proj_add_ln_kernel(%arg0: i32, %arg1: memref<16x32xf32, #tpu.memory_space<vmem>>, %arg2: memref<32x32xf32, #tpu.memory_space<vmem>>, %arg3: memref<1x32xf32, #tpu.memory_space<vmem>>, %arg4: memref<16x32xf32, #tpu.memory_space<vmem>>, %arg5: memref<1x32xf32, #tpu.memory_space<vmem>>, %arg6: memref<1x32xf32, #tpu.memory_space<vmem>>, %arg7: memref<16x32xf32, #tpu.memory_space<vmem>>) attributes {dimension_semantics = [#tpu.dimension_semantics<parallel>], iteration_bounds = array<i64: 1>, scalar_prefetch = 0 : i64, scratch_operands = 0 : i64, tpu.core_type = #tpu.core_type<tc>, window_params = [{transform_indices = @transform_0, window_bounds = array<i64: 16, 32>}, {pipeline_mode = #tpu.pipeline_mode<synchronous>, transform_indices = @transform_1, window_bounds = array<i64: 32, 32>}, {pipeline_mode = #tpu.pipeline_mode<synchronous>, transform_indices = @transform_2, window_bounds = array<i64: 1, 32>}, {transform_indices = @transform_3, window_bounds = array<i64: 16, 32>}, {pipeline_mode = #tpu.pipeline_mode<synchronous>, transform_indices = @transform_4, window_bounds = array<i64: 1, 32>}, {pipeline_mode = #tpu.pipeline_mode<synchronous>, transform_indices = @transform_5, window_bounds = array<i64: 1, 32>}, {transform_indices = @transform_6, window_bounds = array<i64: 16, 32>}]} {
    %c0 = arith.constant 0 : index
    %c0_0 = arith.constant 0 : index
    %0 = vector.load %arg1[%c0, %c0_0] : memref<16x32xf32, #tpu.memory_space<vmem>>, vector<16x32xf32>
    %c0_1 = arith.constant 0 : index
    %c0_2 = arith.constant 0 : index
    %1 = vector.load %arg2[%c0_1, %c0_2] : memref<32x32xf32, #tpu.memory_space<vmem>>, vector<32x32xf32>
    %cst = arith.constant dense<0.000000e+00> : vector<16x32xf32>
    %2 = tpu.matmul %0, %1, %cst {dimension_numbers = #tpu.dot_dimension_numbers<[1], [0], [0], [1], [0, 0, 1, 1], [], []>} : vector<16x32xf32>, vector<32x32xf32>, vector<16x32xf32> -> vector<16x32xf32>
    %c0_3 = arith.constant 0 : index
    %c0_4 = arith.constant 0 : index
    %3 = vector.load %arg3[%c0_3, %c0_4] : memref<1x32xf32, #tpu.memory_space<vmem>>, vector<1x32xf32>
    %4 = vector.broadcast %3 : vector<1x32xf32> to vector<16x32xf32>
    %5 = arith.addf %2, %4 : vector<16x32xf32>
    %c0_5 = arith.constant 0 : index
    %c0_6 = arith.constant 0 : index
    %6 = vector.load %arg4[%c0_5, %c0_6] : memref<16x32xf32, #tpu.memory_space<vmem>>, vector<16x32xf32>
    %7 = arith.addf %5, %6 : vector<16x32xf32>
    %cst_7 = arith.constant dense<0.000000e+00> : vector<16xf32>
    %8 = vector.multi_reduction <add>, %7, %cst_7 [1] : vector<16x32xf32> to vector<16xf32>
    %9 = vector.shape_cast %8 : vector<16xf32> to vector<16x1xf32>
    %cst_8 = arith.constant 3.200000e+01 : f32
    %10 = vector.broadcast %cst_8 : f32 to vector<16x1xf32>
    %11 = arith.divf %9, %10 : vector<16x1xf32>
    %12 = vector.broadcast %11 : vector<16x1xf32> to vector<16x32xf32>
    %13 = arith.subf %7, %12 : vector<16x32xf32>
    %14 = arith.mulf %13, %13 : vector<16x32xf32>
    %cst_9 = arith.constant dense<0.000000e+00> : vector<16xf32>
    %15 = vector.multi_reduction <add>, %14, %cst_9 [1] : vector<16x32xf32> to vector<16xf32>
    %16 = vector.shape_cast %15 : vector<16xf32> to vector<16x1xf32>
    %cst_10 = arith.constant 3.200000e+01 : f32
    %17 = vector.broadcast %cst_10 : f32 to vector<16x1xf32>
    %18 = arith.divf %16, %17 : vector<16x1xf32>
    %cst_11 = arith.constant 9.99999974E-6 : f32
    %19 = vector.broadcast %cst_11 : f32 to vector<16x1xf32>
    %20 = arith.addf %18, %19 : vector<16x1xf32>
    %21 = math.rsqrt %20 : vector<16x1xf32>
    %22 = vector.broadcast %21 : vector<16x1xf32> to vector<16x32xf32>
    %23 = arith.mulf %13, %22 : vector<16x32xf32>
    %c0_12 = arith.constant 0 : index
    %c0_13 = arith.constant 0 : index
    %24 = vector.load %arg5[%c0_12, %c0_13] : memref<1x32xf32, #tpu.memory_space<vmem>>, vector<1x32xf32>
    %25 = vector.broadcast %24 : vector<1x32xf32> to vector<16x32xf32>
    %26 = arith.mulf %23, %25 : vector<16x32xf32>
    %c0_14 = arith.constant 0 : index
    %c0_15 = arith.constant 0 : index
    %27 = vector.load %arg6[%c0_14, %c0_15] : memref<1x32xf32, #tpu.memory_space<vmem>>, vector<1x32xf32>
    %28 = vector.broadcast %27 : vector<1x32xf32> to vector<16x32xf32>
    %29 = arith.addf %26, %28 : vector<16x32xf32>
    %c0_16 = arith.constant 0 : index
    %c0_17 = arith.constant 0 : index
    %30 = vector.load %arg7[%c0_16, %c0_17] : memref<16x32xf32, #tpu.memory_space<vmem>>, vector<16x32xf32>
    tpu.vector_store %arg7[%c0_16, %c0_17], %29 {strides = array<i32>} : memref<16x32xf32, #tpu.memory_space<vmem>>, vector<16x32xf32>,
    return
  }
  func.func @transform_0(%arg0: i32) -> (i32, i32) {
    %c0_i32 = arith.constant 0 : i32
    %c0_i32_0 = arith.constant 0 : i32
    return %arg0, %c0_i32 : i32, i32
  }
  func.func @transform_1(%arg0: i32) -> (i32, i32) {
    %c0_i32 = arith.constant 0 : i32
    %c0_i32_0 = arith.constant 0 : i32
    %c0_i32_1 = arith.constant 0 : i32
    return %c0_i32, %c0_i32_0 : i32, i32
  }
  func.func @transform_2(%arg0: i32) -> (i32, i32) {
    %c0_i32 = arith.constant 0 : i32
    %c0_i32_0 = arith.constant 0 : i32
    %c0_i32_1 = arith.constant 0 : i32
    return %c0_i32, %c0_i32_0 : i32, i32
  }
  func.func @transform_3(%arg0: i32) -> (i32, i32) {
    %c0_i32 = arith.constant 0 : i32
    %c0_i32_0 = arith.constant 0 : i32
    return %arg0, %c0_i32 : i32, i32
  }
  func.func @transform_4(%arg0: i32) -> (i32, i32) {
    %c0_i32 = arith.constant 0 : i32
    %c0_i32_0 = arith.constant 0 : i32
    %c0_i32_1 = arith.constant 0 : i32
    return %c0_i32, %c0_i32_0 : i32, i32
  }
  func.func @transform_5(%arg0: i32) -> (i32, i32) {
    %c0_i32 = arith.constant 0 : i32
    %c0_i32_0 = arith.constant 0 : i32
    %c0_i32_1 = arith.constant 0 : i32
    return %c0_i32, %c0_i32_0 : i32, i32
  }
  func.func @transform_6(%arg0: i32) -> (i32, i32) {
    %c0_i32 = arith.constant 0 : i32
    %c0_i32_0 = arith.constant 0 : i32
    return %arg0, %c0_i32 : i32, i32
  }
}

module attributes {stable_mosaic.version = 11 : i64} {
  func.func @_ffn_add_ln_kernel(%arg0: i32, %arg1: memref<16x32xf32, #tpu.memory_space<vmem>>, %arg2: memref<32x64xf32, #tpu.memory_space<vmem>>, %arg3: memref<1x64xf32, #tpu.memory_space<vmem>>, %arg4: memref<64x32xf32, #tpu.memory_space<vmem>>, %arg5: memref<1x32xf32, #tpu.memory_space<vmem>>, %arg6: memref<1x32xf32, #tpu.memory_space<vmem>>, %arg7: memref<1x32xf32, #tpu.memory_space<vmem>>, %arg8: memref<16x32xf32, #tpu.memory_space<vmem>>) attributes {dimension_semantics = [#tpu.dimension_semantics<parallel>], iteration_bounds = array<i64: 1>, scalar_prefetch = 0 : i64, scratch_operands = 0 : i64, tpu.core_type = #tpu.core_type<tc>, window_params = [{transform_indices = @transform_0, window_bounds = array<i64: 16, 32>}, {pipeline_mode = #tpu.pipeline_mode<synchronous>, transform_indices = @transform_1, window_bounds = array<i64: 32, 64>}, {pipeline_mode = #tpu.pipeline_mode<synchronous>, transform_indices = @transform_2, window_bounds = array<i64: 1, 64>}, {pipeline_mode = #tpu.pipeline_mode<synchronous>, transform_indices = @transform_3, window_bounds = array<i64: 64, 32>}, {pipeline_mode = #tpu.pipeline_mode<synchronous>, transform_indices = @transform_4, window_bounds = array<i64: 1, 32>}, {pipeline_mode = #tpu.pipeline_mode<synchronous>, transform_indices = @transform_5, window_bounds = array<i64: 1, 32>}, {pipeline_mode = #tpu.pipeline_mode<synchronous>, transform_indices = @transform_6, window_bounds = array<i64: 1, 32>}, {transform_indices = @transform_7, window_bounds = array<i64: 16, 32>}]} {
    %c0 = arith.constant 0 : index
    %c0_0 = arith.constant 0 : index
    %0 = vector.load %arg1[%c0, %c0_0] : memref<16x32xf32, #tpu.memory_space<vmem>>, vector<16x32xf32>
    %c0_1 = arith.constant 0 : index
    %c0_2 = arith.constant 0 : index
    %1 = vector.load %arg2[%c0_1, %c0_2] : memref<32x64xf32, #tpu.memory_space<vmem>>, vector<32x64xf32>
    %cst = arith.constant dense<0.000000e+00> : vector<16x64xf32>
    %2 = tpu.matmul %0, %1, %cst {dimension_numbers = #tpu.dot_dimension_numbers<[1], [0], [0], [1], [0, 0, 1, 1], [], []>} : vector<16x32xf32>, vector<32x64xf32>, vector<16x64xf32> -> vector<16x64xf32>
    %c0_3 = arith.constant 0 : index
    %c0_4 = arith.constant 0 : index
    %3 = vector.load %arg3[%c0_3, %c0_4] : memref<1x64xf32, #tpu.memory_space<vmem>>, vector<1x64xf32>
    %4 = vector.broadcast %3 : vector<1x64xf32> to vector<16x64xf32>
    %5 = arith.addf %2, %4 : vector<16x64xf32>
    %cst_5 = arith.constant 0.000000e+00 : f32
    %6 = vector.broadcast %cst_5 : f32 to vector<16x64xf32>
    %7 = arith.maximumf %5, %6 : vector<16x64xf32>
    %c0_6 = arith.constant 0 : index
    %c0_7 = arith.constant 0 : index
    %8 = vector.load %arg4[%c0_6, %c0_7] : memref<64x32xf32, #tpu.memory_space<vmem>>, vector<64x32xf32>
    %cst_8 = arith.constant dense<0.000000e+00> : vector<16x32xf32>
    %9 = tpu.matmul %7, %8, %cst_8 {dimension_numbers = #tpu.dot_dimension_numbers<[1], [0], [0], [1], [0, 0, 1, 1], [], []>} : vector<16x64xf32>, vector<64x32xf32>, vector<16x32xf32> -> vector<16x32xf32>
    %c0_9 = arith.constant 0 : index
    %c0_10 = arith.constant 0 : index
    %10 = vector.load %arg5[%c0_9, %c0_10] : memref<1x32xf32, #tpu.memory_space<vmem>>, vector<1x32xf32>
    %11 = vector.broadcast %10 : vector<1x32xf32> to vector<16x32xf32>
    %12 = arith.addf %9, %11 : vector<16x32xf32>
    %13 = arith.addf %12, %0 : vector<16x32xf32>
    %cst_11 = arith.constant dense<0.000000e+00> : vector<16xf32>
    %14 = vector.multi_reduction <add>, %13, %cst_11 [1] : vector<16x32xf32> to vector<16xf32>
    %15 = vector.shape_cast %14 : vector<16xf32> to vector<16x1xf32>
    %cst_12 = arith.constant 3.200000e+01 : f32
    %16 = vector.broadcast %cst_12 : f32 to vector<16x1xf32>
    %17 = arith.divf %15, %16 : vector<16x1xf32>
    %18 = vector.broadcast %17 : vector<16x1xf32> to vector<16x32xf32>
    %19 = arith.subf %13, %18 : vector<16x32xf32>
    %20 = arith.mulf %19, %19 : vector<16x32xf32>
    %cst_13 = arith.constant dense<0.000000e+00> : vector<16xf32>
    %21 = vector.multi_reduction <add>, %20, %cst_13 [1] : vector<16x32xf32> to vector<16xf32>
    %22 = vector.shape_cast %21 : vector<16xf32> to vector<16x1xf32>
    %cst_14 = arith.constant 3.200000e+01 : f32
    %23 = vector.broadcast %cst_14 : f32 to vector<16x1xf32>
    %24 = arith.divf %22, %23 : vector<16x1xf32>
    %cst_15 = arith.constant 9.99999974E-6 : f32
    %25 = vector.broadcast %cst_15 : f32 to vector<16x1xf32>
    %26 = arith.addf %24, %25 : vector<16x1xf32>
    %27 = math.rsqrt %26 : vector<16x1xf32>
    %28 = vector.broadcast %27 : vector<16x1xf32> to vector<16x32xf32>
    %29 = arith.mulf %19, %28 : vector<16x32xf32>
    %c0_16 = arith.constant 0 : index
    %c0_17 = arith.constant 0 : index
    %30 = vector.load %arg6[%c0_16, %c0_17] : memref<1x32xf32, #tpu.memory_space<vmem>>, vector<1x32xf32>
    %31 = vector.broadcast %30 : vector<1x32xf32> to vector<16x32xf32>
    %32 = arith.mulf %29, %31 : vector<16x32xf32>
    %c0_18 = arith.constant 0 : index
    %c0_19 = arith.constant 0 : index
    %33 = vector.load %arg7[%c0_18, %c0_19] : memref<1x32xf32, #tpu.memory_space<vmem>>, vector<1x32xf32>
    %34 = vector.broadcast %33 : vector<1x32xf32> to vector<16x32xf32>
    %35 = arith.addf %32, %34 : vector<16x32xf32>
    %c0_20 = arith.constant 0 : index
    %c0_21 = arith.constant 0 : index
    %36 = vector.load %arg8[%c0_20, %c0_21] : memref<16x32xf32, #tpu.memory_space<vmem>>, vector<16x32xf32>
    tpu.vector_store %arg8[%c0_20, %c0_21], %35 {strides = array<i32>} : memref<16x32xf32, #tpu.memory_space<vmem>>, vector<16x32xf32>,
    return
  }
  func.func @transform_0(%arg0: i32) -> (i32, i32) {
    %c0_i32 = arith.constant 0 : i32
    %c0_i32_0 = arith.constant 0 : i32
    return %arg0, %c0_i32 : i32, i32
  }
  func.func @transform_1(%arg0: i32) -> (i32, i32) {
    %c0_i32 = arith.constant 0 : i32
    %c0_i32_0 = arith.constant 0 : i32
    %c0_i32_1 = arith.constant 0 : i32
    return %c0_i32, %c0_i32_0 : i32, i32
  }
  func.func @transform_2(%arg0: i32) -> (i32, i32) {
    %c0_i32 = arith.constant 0 : i32
    %c0_i32_0 = arith.constant 0 : i32
    %c0_i32_1 = arith.constant 0 : i32
    return %c0_i32, %c0_i32_0 : i32, i32
  }
  func.func @transform_3(%arg0: i32) -> (i32, i32) {
    %c0_i32 = arith.constant 0 : i32
    %c0_i32_0 = arith.constant 0 : i32
    %c0_i32_1 = arith.constant 0 : i32
    return %c0_i32, %c0_i32_0 : i32, i32
  }
  func.func @transform_4(%arg0: i32) -> (i32, i32) {
    %c0_i32 = arith.constant 0 : i32
    %c0_i32_0 = arith.constant 0 : i32
    %c0_i32_1 = arith.constant 0 : i32
    return %c0_i32, %c0_i32_0 : i32, i32
  }
  func.func @transform_5(%arg0: i32) -> (i32, i32) {
    %c0_i32 = arith.constant 0 : i32
    %c0_i32_0 = arith.constant 0 : i32
    %c0_i32_1 = arith.constant 0 : i32
    return %c0_i32, %c0_i32_0 : i32, i32
  }
  func.func @transform_6(%arg0: i32) -> (i32, i32) {
    %c0_i32 = arith.constant 0 : i32
    %c0_i32_0 = arith.constant 0 : i32
    %c0_i32_1 = arith.constant 0 : i32
    return %c0_i32, %c0_i32_0 : i32, i32
  }
  func.func @transform_7(%arg0: i32) -> (i32, i32) {
    %c0_i32 = arith.constant 0 : i32
    %c0_i32_0 = arith.constant 0 : i32
    return %arg0, %c0_i32 : i32, i32
  }
}

</mosaic_0001>

<llo_original>
// kernel: transformer_encoder_forward.9
$region0: #{transformer_encoder_forward.9}
  #allocation0 [shape = 'u32[]', space=smem, size = 0x4, offset = 0x4, fixed_abs, tag = 'smem constant byte address 0x4 - core index']
  #allocation1 [shape = 'u32[144,128]{1,0:T(1,128)}', space=vmem, size = 0x12000, scoped, tag = 'internal scratch']
  %s0 = inlined_call_operand.vmem [shape: f32[16,16], index: 0, kind: input, shape index: {}]
  %s1 = inlined_call_operand.vmem [shape: f32[16,32], index: 1, kind: input, shape index: {}]
  %s2 = inlined_call_operand.vmem [shape: f32[1,32], index: 2, kind: input, shape index: {}]
  %s3 = inlined_call_operand.vmem [shape: f32[16,32], index: 3, kind: input, shape index: {}]
  %s4 = inlined_call_operand.vmem [shape: f32[16,32], index: 4, kind: output, shape index: {}]
  %s5 = sld [smem:[#allocation0]]
  $region26: #{transformer_encoder_forward.9} parent=0
    _
  %s7 = ssub.s32 1, %s5
  %s8 = scalar_select 0, %s7, %s5
  // Predicated region
  $region2: #{transformer_encoder_forward.9} parent=0 // pred_check
    _
  $region3: #{transformer_encoder_forward.9} parent=0 // pred_check_branch
    %10 = sbr.rel (0) target = $region5
  $region4: #{transformer_encoder_forward.9} parent=0 // pred_region
    _
  $region5: #{transformer_encoder_forward.9} parent=0 // pred_fallthru
    _
  // Predicated region
  $region6: #{transformer_encoder_forward.9} parent=0 // pred_check
    _
  $region7: #{transformer_encoder_forward.9} parent=0 // pred_check_branch
    %12 = sbr.rel (0) target = $region9
  $region8: #{transformer_encoder_forward.9} parent=0 // pred_region
    _
  $region9: #{transformer_encoder_forward.9} parent=0 // pred_fallthru
    _
  // Predicated region
  $region10: #{transformer_encoder_forward.9} parent=0 // pred_check
    _
  $region11: #{transformer_encoder_forward.9} parent=0 // pred_check_branch
    %14 = sbr.rel (0) target = $region13
  $region12: #{transformer_encoder_forward.9} parent=0 // pred_region
    _
  $region13: #{transformer_encoder_forward.9} parent=0 // pred_fallthru
    _
  // Predicated region
  $region14: #{transformer_encoder_forward.9} parent=0 // pred_check
    _
  $region15: #{transformer_encoder_forward.9} parent=0 // pred_check_branch
    %16 = sbr.rel (0) target = $region17
  $region16: #{transformer_encoder_forward.9} parent=0 // pred_region
    _
  $region17: #{transformer_encoder_forward.9} parent=0 // pred_fallthru
    _
  %v17 = vld [vmem:[%s0] sm:$0xff]
  %v18 = vld [vmem:[%s0 + $0x8] sm:$0xff]
  %v19 = vld [vmem:[%s1] sm:$0xff]
  %v20 = vld [vmem:[%s1 + $0x8] sm:$0xff]
  %v21 = vld [vmem:[%s2] sm:$0x1]
  %v23 = vlaneseq
  %v24 = vshrl.u32 %v23, 7
  %v25 = vsub.s32 0, %v24
  %v26 = vrot.slane %v21, %v25
  %vm28 = vcmask 130048
  %v30 = vsel %vm28, %v17, 0
  %v33 = vsel %vm28, %v18, 0
  %35 = vmatprep.subr.mxu0 0.0
  %36 = vmatpush1.msra.mxu0 %v19
  %37 = vmatprep.subr.mxu0 0.0
  %38 = vmatpush1.msra.mxu0 %v20
  %39 = vmatprep.subr.mxu0 0.0
  %40 = vmatpush1.msra.mxu0 0.0
  %41 = vmatprep.subr.mxu0 0.0
  %42 = vmatpush1.msra.mxu0 0.0
  %43 = vmatprep.subr.mxu0 0.0
  %44 = vmatpush1.msra.mxu0 0.0
  %45 = vmatprep.subr.mxu0 0.0
  %46 = vmatpush1.msra.mxu0 0.0
  %47 = vmatprep.subr.mxu0 0.0
  %48 = vmatpush1.msra.mxu0 0.0
  %49 = vmatprep.subr.mxu0 0.0
  %50 = vmatpush1.msra.mxu0 0.0
  %51 = vmatprep.subr.mxu0 0.0
  %52 = vmatpush1.msra.mxu0 0.0
  %53 = vmatprep.subr.mxu0 0.0
  %54 = vmatpush1.msra.mxu0 0.0
  %55 = vmatprep.subr.mxu0 0.0
  %56 = vmatpush1.msra.mxu0 0.0
  %57 = vmatprep.subr.mxu0 0.0
  %58 = vmatpush1.msra.mxu0 0.0
  %59 = vmatprep.subr.mxu0 0.0
  %60 = vmatpush1.msra.mxu0 0.0
  %61 = vmatprep.subr.mxu0 0.0
  %62 = vmatpush1.msra.mxu0 0.0
  %63 = vmatprep.subr.mxu0 0.0
  %64 = vmatpush1.msra.mxu0 0.0
  %65 = vmatprep.subr.mxu0 0.0
  %66 = vmatpush1.msra.mxu0 0.0
  %67 = vmatprep.subr.mxu0 0.0
  %68 = vmatpush1.msra.mxu0 0.0
  %69 = vmatprep.subr.mxu0 0.0
  %70 = vmatpush1.msra.mxu0 0.0
  %71 = vmatprep.subr.mxu0 0.0
  %72 = vmatpush1.msra.mxu0 0.0
  %73 = vmatprep.subr.mxu0 0.0
  %74 = vmatpush1.msra.mxu0 0.0
  %75 = vmatprep.subr.mxu0 0.0
  %76 = vmatpush1.msra.mxu0 0.0
  %77 = vmatprep.subr.mxu0 0.0
  %78 = vmatpush1.msra.mxu0 0.0
  %79 = vmatprep.subr.mxu0 0.0
  %80 = vmatpush1.msra.mxu0 0.0
  %81 = vmatprep.subr.mxu0 0.0
  %82 = vmatpush1.msra.mxu0 0.0
  %83 = vmatprep.subr.mxu0 0.0
  %84 = vmatpush1.msra.mxu0 0.0
  %85 = vmatprep.subr.mxu0 0.0
  %86 = vmatpush1.msra.mxu0 0.0
  %87 = vmatprep.subr.mxu0 0.0
  %88 = vmatpush1.msra.mxu0 0.0
  %89 = vmatprep.subr.mxu0 0.0
  %90 = vmatpush1.msra.mxu0 0.0
  %91 = vmatprep.subr.mxu0 0.0
  %92 = vmatpush1.msra.mxu0 0.0
  %93 = vmatprep.subr.mxu0 0.0
  %94 = vmatpush1.msra.mxu0 0.0
  %95 = vmatprep.subr.mxu0 0.0
  %96 = vmatpush1.msra.mxu0 0.0
  %97 = vmatprep.subr.mxu0 0.0
  %98 = vmatpush1.msra.mxu0 0.0
  %99 = vmatprep.mubr.f32.mxu0 0.0
  %100 = vmatmul.mubr.f32.gmra.mrb[0].mxu0 %v30
  %v101 = vpop.f32.mrb[0].mxu0
  %v102 = vadd.f32 %v26, %v101
  %v103 = vpop.f32.mrb[0].mxu0
  %104 = vmatprep.mubr.f32.mxu0 0.0
  %105 = vmatmul.mubr.f32.gmra.mrb[0].mxu0 %v33
  %v106 = vpop.f32.mrb[0].mxu0
  %v107 = vadd.f32 %v26, %v106
  %v108 = vpop.f32.mrb[0].mxu0
  %109 = vdwg.mxu0
  %v110 = vld [vmem:[%s3] sm:$0xff]
  %v111 = vld [vmem:[%s3 + $0x8] sm:$0xff]
  %v112 = vadd.f32 %v102, %v110
  %v113 = vadd.f32 %v107, %v111
  %vm114 = vcmask 261120
  %115 = vst.msk [vmem:[%s4] sm:$0xff] %vm114, %v112
  %116 = vst.msk [vmem:[%s4 + $0x8] sm:$0xff] %vm114, %v113
  // Predicated region
  $region18: #{transformer_encoder_forward.9} parent=0 // pred_check
    _
  $region19: #{transformer_encoder_forward.9} parent=0 // pred_check_branch
    %118 = sbr.rel (0) target = $region21
  $region20: #{transformer_encoder_forward.9} parent=0 // pred_region
    _
  $region21: #{transformer_encoder_forward.9} parent=0 // pred_fallthru
    _
  // Predicated region
  $region22: #{transformer_encoder_forward.9} parent=0 // pred_check
    _
  $region23: #{transformer_encoder_forward.9} parent=0 // pred_check_branch
    %120 = sbr.rel (0) target = $region25
  $region24: #{transformer_encoder_forward.9} parent=0 // pred_region
    _
  $region25: #{transformer_encoder_forward.9} parent=0 // pred_fallthru
    _

// kernel: transformer_encoder_forward.10
$region0: #{transformer_encoder_forward.10}
  #allocation0 [shape = 'u32[]', space=smem, size = 0x4, offset = 0x4, fixed_abs, tag = 'smem constant byte address 0x4 - core index']
  #allocation1 [shape = 'u32[144,128]{1,0:T(1,128)}', space=vmem, size = 0x12000, scoped, tag = 'internal scratch']
  %s0 = inlined_call_operand.vmem [shape: f32[16,32], index: 0, kind: input, shape index: {}]
  %s1 = inlined_call_operand.vmem [shape: f32[32,96], index: 1, kind: input, shape index: {}]
  %s2 = inlined_call_operand.vmem [shape: f32[1,96], index: 2, kind: input, shape index: {}]
  %s3 = inlined_call_operand.vmem [shape: f32[16,96], index: 3, kind: output, shape index: {}]
  %s4 = sld [smem:[#allocation0]]
  $region22: #{transformer_encoder_forward.10} parent=0
    _
  %s6 = ssub.s32 1, %s4
  %s7 = scalar_select 0, %s6, %s4
  // Predicated region
  $region2: #{transformer_encoder_forward.10} parent=0 // pred_check
    _
  $region3: #{transformer_encoder_forward.10} parent=0 // pred_check_branch
    %9 = sbr.rel (0) target = $region5
  $region4: #{transformer_encoder_forward.10} parent=0 // pred_region
    _
  $region5: #{transformer_encoder_forward.10} parent=0 // pred_fallthru
    _
  // Predicated region
  $region6: #{transformer_encoder_forward.10} parent=0 // pred_check
    _
  $region7: #{transformer_encoder_forward.10} parent=0 // pred_check_branch
    %11 = sbr.rel (0) target = $region9
  $region8: #{transformer_encoder_forward.10} parent=0 // pred_region
    _
  $region9: #{transformer_encoder_forward.10} parent=0 // pred_fallthru
    _
  // Predicated region
  $region10: #{transformer_encoder_forward.10} parent=0 // pred_check
    _
  $region11: #{transformer_encoder_forward.10} parent=0 // pred_check_branch
    %13 = sbr.rel (0) target = $region13
  $region12: #{transformer_encoder_forward.10} parent=0 // pred_region
    _
  $region13: #{transformer_encoder_forward.10} parent=0 // pred_fallthru
    _
  %v14 = vld [vmem:[%s0] sm:$0xff]
  %v15 = vld [vmem:[%s0 + $0x8] sm:$0xff]
  %v16 = vld [vmem:[%s1] sm:$0xff]
  %v17 = vld [vmem:[%s1 + $0x8] sm:$0xff]
  %v18 = vld [vmem:[%s1 + $0x10] sm:$0xff]
  %v19 = vld [vmem:[%s1 + $0x18] sm:$0xff]
  %v20 = vld [vmem:[%s2] sm:$0x1]
  %v22 = vlaneseq
  %v23 = vshrl.u32 %v22, 7
  %v24 = vsub.s32 0, %v23
  %v25 = vrot.slane %v20, %v24
  %vm27 = vcmask 261120
  %v29 = vsel %vm27, %v14, 0
  %v32 = vsel %vm27, %v15, 0
  %34 = vmatprep.subr.mxu0 0.0
  %35 = vmatpush1.msra.mxu0 %v16
  %36 = vmatprep.subr.mxu0 0.0
  %37 = vmatpush1.msra.mxu0 %v17
  %38 = vmatprep.subr.mxu0 0.0
  %39 = vmatpush1.msra.mxu0 %v18
  %40 = vmatprep.subr.mxu0 0.0
  %41 = vmatpush1.msra.mxu0 %v19
  %42 = vmatprep.subr.mxu0 0.0
  %43 = vmatpush1.msra.mxu0 0.0
  %44 = vmatprep.subr.mxu0 0.0
  %45 = vmatpush1.msra.mxu0 0.0
  %46 = vmatprep.subr.mxu0 0.0
  %47 = vmatpush1.msra.mxu0 0.0
  %48 = vmatprep.subr.mxu0 0.0
  %49 = vmatpush1.msra.mxu0 0.0
  %50 = vmatprep.subr.mxu0 0.0
  %51 = vmatpush1.msra.mxu0 0.0
  %52 = vmatprep.subr.mxu0 0.0
  %53 = vmatpush1.msra.mxu0 0.0
  %54 = vmatprep.subr.mxu0 0.0
  %55 = vmatpush1.msra.mxu0 0.0
  %56 = vmatprep.subr.mxu0 0.0
  %57 = vmatpush1.msra.mxu0 0.0
  %58 = vmatprep.subr.mxu0 0.0
  %59 = vmatpush1.msra.mxu0 0.0
  %60 = vmatprep.subr.mxu0 0.0
  %61 = vmatpush1.msra.mxu0 0.0
  %62 = vmatprep.subr.mxu0 0.0
  %63 = vmatpush1.msra.mxu0 0.0
  %64 = vmatprep.subr.mxu0 0.0
  %65 = vmatpush1.msra.mxu0 0.0
  %66 = vmatprep.subr.mxu0 0.0
  %67 = vmatpush1.msra.mxu0 0.0
  %68 = vmatprep.subr.mxu0 0.0
  %69 = vmatpush1.msra.mxu0 0.0
  %70 = vmatprep.subr.mxu0 0.0
  %71 = vmatpush1.msra.mxu0 0.0
  %72 = vmatprep.subr.mxu0 0.0
  %73 = vmatpush1.msra.mxu0 0.0
  %74 = vmatprep.subr.mxu0 0.0
  %75 = vmatpush1.msra.mxu0 0.0
  %76 = vmatprep.subr.mxu0 0.0
  %77 = vmatpush1.msra.mxu0 0.0
  %78 = vmatprep.subr.mxu0 0.0
  %79 = vmatpush1.msra.mxu0 0.0
  %80 = vmatprep.subr.mxu0 0.0
  %81 = vmatpush1.msra.mxu0 0.0
  %82 = vmatprep.subr.mxu0 0.0
  %83 = vmatpush1.msra.mxu0 0.0
  %84 = vmatprep.subr.mxu0 0.0
  %85 = vmatpush1.msra.mxu0 0.0
  %86 = vmatprep.subr.mxu0 0.0
  %87 = vmatpush1.msra.mxu0 0.0
  %88 = vmatprep.subr.mxu0 0.0
  %89 = vmatpush1.msra.mxu0 0.0
  %90 = vmatprep.subr.mxu0 0.0
  %91 = vmatpush1.msra.mxu0 0.0
  %92 = vmatprep.subr.mxu0 0.0
  %93 = vmatpush1.msra.mxu0 0.0
  %94 = vmatprep.subr.mxu0 0.0
  %95 = vmatpush1.msra.mxu0 0.0
  %96 = vmatprep.subr.mxu0 0.0
  %97 = vmatpush1.msra.mxu0 0.0
  %98 = vmatprep.mubr.f32.mxu0 0.0
  %99 = vmatmul.mubr.f32.gmra.mrb[0].mxu0 %v29
  %v100 = vpop.f32.mrb[0].mxu0
  %v101 = vadd.f32 %v25, %v100
  %v102 = vpop.f32.mrb[0].mxu0
  %103 = vmatprep.mubr.f32.mxu0 0.0
  %104 = vmatmul.mubr.f32.gmra.mrb[0].mxu0 %v32
  %v105 = vpop.f32.mrb[0].mxu0
  %v106 = vadd.f32 %v25, %v105
  %v107 = vpop.f32.mrb[0].mxu0
  %108 = vdwg.mxu0
  %vm109 = vcmask 785408
  %110 = vst.msk [vmem:[%s3] sm:$0xff] %vm109, %v101
  %111 = vst.msk [vmem:[%s3 + $0x8] sm:$0xff] %vm109, %v106
  // Predicated region
  $region14: #{transformer_encoder_forward.10} parent=0 // pred_check
    _
  $region15: #{transformer_encoder_forward.10} parent=0 // pred_check_branch
    %113 = sbr.rel (0) target = $region17
  $region16: #{transformer_encoder_forward.10} parent=0 // pred_region
    _
  $region17: #{transformer_encoder_forward.10} parent=0 // pred_fallthru
    _
  // Predicated region
  $region18: #{transformer_encoder_forward.10} parent=0 // pred_check
    _
  $region19: #{transformer_encoder_forward.10} parent=0 // pred_check_branch
    %115 = sbr.rel (0) target = $region21
  $region20: #{transformer_encoder_forward.10} parent=0 // pred_region
    _
  $region21: #{transformer_encoder_forward.10} parent=0 // pred_fallthru
    _

// kernel: transformer_encoder_forward.11
$region0: #{transformer_encoder_forward.11}
  #allocation0 [shape = 'u32[]', space=smem, size = 0x4, offset = 0x4, fixed_abs, tag = 'smem constant byte address 0x4 - core index']
  #allocation1 [shape = 'u32[144,128]{1,0:T(1,128)}', space=vmem, size = 0x12000, scoped, tag = 'internal scratch']
  %s0 = inlined_call_operand.vmem [shape: f32[8,8,8], index: 0, kind: input, shape index: {}]
  %s1 = inlined_call_operand.vmem [shape: f32[8,8,8], index: 1, kind: input, shape index: {}]
  %s2 = inlined_call_operand.vmem [shape: f32[8,8,8], index: 2, kind: input, shape index: {}]
  %s3 = inlined_call_operand.vmem [shape: f32[8,8,8], index: 3, kind: output, shape index: {}]
  %s4 = sld [smem:[#allocation0]]
  $region22: #{transformer_encoder_forward.11} parent=0
    _
  %s6 = ssub.s32 1, %s4
  %s7 = scalar_select 0, %s6, %s4
  // Predicated region
  $region2: #{transformer_encoder_forward.11} parent=0 // pred_check
    _
  $region3: #{transformer_encoder_forward.11} parent=0 // pred_check_branch
    %9 = sbr.rel (0) target = $region5
  $region4: #{transformer_encoder_forward.11} parent=0 // pred_region
    _
  $region5: #{transformer_encoder_forward.11} parent=0 // pred_fallthru
    _
  // Predicated region
  $region6: #{transformer_encoder_forward.11} parent=0 // pred_check
    _
  $region7: #{transformer_encoder_forward.11} parent=0 // pred_check_branch
    %11 = sbr.rel (0) target = $region9
  $region8: #{transformer_encoder_forward.11} parent=0 // pred_region
    _
  $region9: #{transformer_encoder_forward.11} parent=0 // pred_fallthru
    _
  // Predicated region
  $region10: #{transformer_encoder_forward.11} parent=0 // pred_check
    _
  $region11: #{transformer_encoder_forward.11} parent=0 // pred_check_branch
    %13 = sbr.rel (0) target = $region13
  $region12: #{transformer_encoder_forward.11} parent=0 // pred_region
    _
  $region13: #{transformer_encoder_forward.11} parent=0 // pred_fallthru
    _
  %v14 = vld [vmem:[%s0] sm:$0xff]
  %v15 = vld [vmem:[%s0 + $0x8] sm:$0xff]
  %v16 = vld [vmem:[%s0 + $0x10] sm:$0xff]
  %v17 = vld [vmem:[%s0 + $0x18] sm:$0xff]
  %v18 = vld [vmem:[%s0 + $0x20] sm:$0xff]
  %v19 = vld [vmem:[%s0 + $0x28] sm:$0xff]
  %v20 = vld [vmem:[%s0 + $0x30] sm:$0xff]
  %v21 = vld [vmem:[%s0 + $0x38] sm:$0xff]
  %v22 = vld [vmem:[%s1] sm:$0xff]
  %v23 = vld [vmem:[%s1 + $0x8] sm:$0xff]
  %v24 = vld [vmem:[%s1 + $0x10] sm:$0xff]
  %v25 = vld [vmem:[%s1 + $0x18] sm:$0xff]
  %v26 = vld [vmem:[%s1 + $0x20] sm:$0xff]
  %v27 = vld [vmem:[%s1 + $0x28] sm:$0xff]
  %v28 = vld [vmem:[%s1 + $0x30] sm:$0xff]
  %v29 = vld [vmem:[%s1 + $0x38] sm:$0xff]
  %v30 = vld [vmem:[%s2] sm:$0xff]
  %v31 = vld [vmem:[%s2 + $0x8] sm:$0xff]
  %v32 = vld [vmem:[%s2 + $0x10] sm:$0xff]
  %v33 = vld [vmem:[%s2 + $0x18] sm:$0xff]
  %v34 = vld [vmem:[%s2 + $0x20] sm:$0xff]
  %v35 = vld [vmem:[%s2 + $0x28] sm:$0xff]
  %v36 = vld [vmem:[%s2 + $0x30] sm:$0xff]
  %v37 = vld [vmem:[%s2 + $0x38] sm:$0xff]
  %vm38 = vcmask 64512
  %v40 = vsel %vm38, %v14, 0
  %v43 = vsel %vm38, %v22, 0
  %45 = vmatprep.subr.mxu0 0.0
  %46 = vmatpush1.xpose.msra.mxu0 %v43
  %47 = vmatprep.subr.mxu0 0.0
  %48 = vmatpush1.xpose.msra.mxu0 0.0
  %49 = vmatprep.subr.mxu0 0.0
  %50 = vmatpush1.xpose.msra.mxu0 0.0
  %51 = vmatprep.subr.mxu0 0.0
  %52 = vmatpush1.xpose.msra.mxu0 0.0
  %53 = vmatprep.subr.mxu0 0.0
  %54 = vmatpush1.xpose.msra.mxu0 0.0
  %55 = vmatprep.subr.mxu0 0.0
  %56 = vmatpush1.xpose.msra.mxu0 0.0
  %57 = vmatprep.subr.mxu0 0.0
  %58 = vmatpush1.xpose.msra.mxu0 0.0
  %59 = vmatprep.subr.mxu0 0.0
  %60 = vmatpush1.xpose.msra.mxu0 0.0
  %61 = vmatprep.subr.mxu0 0.0
  %62 = vmatpush1.xpose.msra.mxu0 0.0
  %63 = vmatprep.subr.mxu0 0.0
  %64 = vmatpush1.xpose.msra.mxu0 0.0
  %65 = vmatprep.subr.mxu0 0.0
  %66 = vmatpush1.xpose.msra.mxu0 0.0
  %67 = vmatprep.subr.mxu0 0.0
  %68 = vmatpush1.xpose.msra.mxu0 0.0
  %69 = vmatprep.subr.mxu0 0.0
  %70 = vmatpush1.xpose.msra.mxu0 0.0
  %71 = vmatprep.subr.mxu0 0.0
  %72 = vmatpush1.xpose.msra.mxu0 0.0
  %73 = vmatprep.subr.mxu0 0.0
  %74 = vmatpush1.xpose.msra.mxu0 0.0
  %75 = vmatprep.subr.mxu0 0.0
  %76 = vmatpush1.xpose.msra.mxu0 0.0
  %77 = vmatprep.subr.mxu0 0.0
  %78 = vmatpush1.xpose.msra.mxu0 0.0
  %79 = vmatprep.subr.mxu0 0.0
  %80 = vmatpush1.xpose.msra.mxu0 0.0
  %81 = vmatprep.subr.mxu0 0.0
  %82 = vmatpush1.xpose.msra.mxu0 0.0
  %83 = vmatprep.subr.mxu0 0.0
  %84 = vmatpush1.xpose.msra.mxu0 0.0
  %85 = vmatprep.subr.mxu0 0.0
  %86 = vmatpush1.xpose.msra.mxu0 0.0
  %87 = vmatprep.subr.mxu0 0.0
  %88 = vmatpush1.xpose.msra.mxu0 0.0
  %89 = vmatprep.subr.mxu0 0.0
  %90 = vmatpush1.xpose.msra.mxu0 0.0
  %91 = vmatprep.subr.mxu0 0.0
  %92 = vmatpush1.xpose.msra.mxu0 0.0
  %93 = vmatprep.subr.mxu0 0.0
  %94 = vmatpush1.xpose.msra.mxu0 0.0
  %95 = vmatprep.subr.mxu0 0.0
  %96 = vmatpush1.xpose.msra.mxu0 0.0
  %97 = vmatprep.subr.mxu0 0.0
  %98 = vmatpush1.xpose.msra.mxu0 0.0
  %99 = vmatprep.subr.mxu0 0.0
  %100 = vmatpush1.xpose.msra.mxu0 0.0
  %101 = vmatprep.subr.mxu0 0.0
  %102 = vmatpush1.xpose.msra.mxu0 0.0
  %103 = vmatprep.subr.mxu0 0.0
  %104 = vmatpush1.xpose.msra.mxu0 0.0
  %105 = vmatprep.subr.mxu0 0.0
  %106 = vmatpush1.xpose.msra.mxu0 0.0
  %107 = vmatprep.subr.mxu0 0.0
  %108 = vmatpush1.xpose.msra.mxu0 0.0
  %109 = vmatprep.mubr.f32.mxu0 0.0
  %110 = vmatmul.mubr.f32.gmra.mrb[0].mxu0 %v40
  %v111 = vpop.f32.mrb[0].mxu0
  %v112 = vadd.f32 0.0, %v111
  %v113 = vpop.f32.mrb[0].mxu0
  %114 = vdwg.mxu0
  %v116 = vsel %vm38, %v15, 0
  %v119 = vsel %vm38, %v23, 0
  %121 = vmatprep.subr.mxu0 0.0
  %122 = vmatpush1.xpose.msra.mxu0 %v119
  %123 = vmatprep.subr.mxu0 0.0
  %124 = vmatpush1.xpose.msra.mxu0 0.0
  %125 = vmatprep.subr.mxu0 0.0
  %126 = vmatpush1.xpose.msra.mxu0 0.0
  %127 = vmatprep.subr.mxu0 0.0
  %128 = vmatpush1.xpose.msra.mxu0 0.0
  %129 = vmatprep.subr.mxu0 0.0
  %130 = vmatpush1.xpose.msra.mxu0 0.0
  %131 = vmatprep.subr.mxu0 0.0
  %132 = vmatpush1.xpose.msra.mxu0 0.0
  %133 = vmatprep.subr.mxu0 0.0
  %134 = vmatpush1.xpose.msra.mxu0 0.0
  %135 = vmatprep.subr.mxu0 0.0
  %136 = vmatpush1.xpose.msra.mxu0 0.0
  %137 = vmatprep.subr.mxu0 0.0
  %138 = vmatpush1.xpose.msra.mxu0 0.0
  %139 = vmatprep.subr.mxu0 0.0
  %140 = vmatpush1.xpose.msra.mxu0 0.0
  %141 = vmatprep.subr.mxu0 0.0
  %142 = vmatpush1.xpose.msra.mxu0 0.0
  %143 = vmatprep.subr.mxu0 0.0
  %144 = vmatpush1.xpose.msra.mxu0 0.0
  %145 = vmatprep.subr.mxu0 0.0
  %146 = vmatpush1.xpose.msra.mxu0 0.0
  %147 = vmatprep.subr.mxu0 0.0
  %148 = vmatpush1.xpose.msra.mxu0 0.0
  %149 = vmatprep.subr.mxu0 0.0
  %150 = vmatpush1.xpose.msra.mxu0 0.0
  %151 = vmatprep.subr.mxu0 0.0
  %152 = vmatpush1.xpose.msra.mxu0 0.0
  %153 = vmatprep.subr.mxu0 0.0
  %154 = vmatpush1.xpose.msra.mxu0 0.0
  %155 = vmatprep.subr.mxu0 0.0
  %156 = vmatpush1.xpose.msra.mxu0 0.0
  %157 = vmatprep.subr.mxu0 0.0
  %158 = vmatpush1.xpose.msra.mxu0 0.0
  %159 = vmatprep.subr.mxu0 0.0
  %160 = vmatpush1.xpose.msra.mxu0 0.0
  %161 = vmatprep.subr.mxu0 0.0
  %162 = vmatpush1.xpose.msra.mxu0 0.0
  %163 = vmatprep.subr.mxu0 0.0
  %164 = vmatpush1.xpose.msra.mxu0 0.0
  %165 = vmatprep.subr.mxu0 0.0
  %166 = vmatpush1.xpose.msra.mxu0 0.0
  %167 = vmatprep.subr.mxu0 0.0
  %168 = vmatpush1.xpose.msra.mxu0 0.0
  %169 = vmatprep.subr.mxu0 0.0
  %170 = vmatpush1.xpose.msra.mxu0 0.0
  %171 = vmatprep.subr.mxu0 0.0
  %172 = vmatpush1.xpose.msra.mxu0 0.0
  %173 = vmatprep.subr.mxu0 0.0
  %174 = vmatpush1.xpose.msra.mxu0 0.0
  %175 = vmatprep.subr.mxu0 0.0
  %176 = vmatpush1.xpose.msra.mxu0 0.0
  %177 = vmatprep.subr.mxu0 0.0
  %178 = vmatpush1.xpose.msra.mxu0 0.0
  %179 = vmatprep.subr.mxu0 0.0
  %180 = vmatpush1.xpose.msra.mxu0 0.0
  %181 = vmatprep.subr.mxu0 0.0
  %182 = vmatpush1.xpose.msra.mxu0 0.0
  %183 = vmatprep.subr.mxu0 0.0
  %184 = vmatpush1.xpose.msra.mxu0 0.0
  %185 = vmatprep.mubr.f32.mxu0 0.0
  %186 = vmatmul.mubr.f32.gmra.mrb[0].mxu0 %v116
  %v187 = vpop.f32.mrb[0].mxu0
  %v188 = vadd.f32 0.0, %v187
  %v189 = vpop.f32.mrb[0].mxu0
  %190 = vdwg.mxu0
  %v192 = vsel %vm38, %v16, 0
  %v195 = vsel %vm38, %v24, 0
  %197 = vmatprep.subr.mxu0 0.0
  %198 = vmatpush1.xpose.msra.mxu0 %v195
  %199 = vmatprep.subr.mxu0 0.0
  %200 = vmatpush1.xpose.msra.mxu0 0.0
  %201 = vmatprep.subr.mxu0 0.0
  %202 = vmatpush1.xpose.msra.mxu0 0.0
  %203 = vmatprep.subr.mxu0 0.0
  %204 = vmatpush1.xpose.msra.mxu0 0.0
  %205 = vmatprep.subr.mxu0 0.0
  %206 = vmatpush1.xpose.msra.mxu0 0.0
  %207 = vmatprep.subr.mxu0 0.0
  %208 = vmatpush1.xpose.msra.mxu0 0.0
  %209 = vmatprep.subr.mxu0 0.0
  %210 = vmatpush1.xpose.msra.mxu0 0.0
  %211 = vmatprep.subr.mxu0 0.0
  %212 = vmatpush1.xpose.msra.mxu0 0.0
  %213 = vmatprep.subr.mxu0 0.0
  %214 = vmatpush1.xpose.msra.mxu0 0.0
  %215 = vmatprep.subr.mxu0 0.0
  %216 = vmatpush1.xpose.msra.mxu0 0.0
  %217 = vmatprep.subr.mxu0 0.0
  %218 = vmatpush1.xpose.msra.mxu0 0.0
  %219 = vmatprep.subr.mxu0 0.0
  %220 = vmatpush1.xpose.msra.mxu0 0.0
  %221 = vmatprep.subr.mxu0 0.0
  %222 = vmatpush1.xpose.msra.mxu0 0.0
  %223 = vmatprep.subr.mxu0 0.0
  %224 = vmatpush1.xpose.msra.mxu0 0.0
  %225 = vmatprep.subr.mxu0 0.0
  %226 = vmatpush1.xpose.msra.mxu0 0.0
  %227 = vmatprep.subr.mxu0 0.0
  %228 = vmatpush1.xpose.msra.mxu0 0.0
  %229 = vmatprep.subr.mxu0 0.0
  %230 = vmatpush1.xpose.msra.mxu0 0.0
  %231 = vmatprep.subr.mxu0 0.0
  %232 = vmatpush1.xpose.msra.mxu0 0.0
  %233 = vmatprep.subr.mxu0 0.0
  %234 = vmatpush1.xpose.msra.mxu0 0.0
  %235 = vmatprep.subr.mxu0 0.0
  %236 = vmatpush1.xpose.msra.mxu0 0.0
  %237 = vmatprep.subr.mxu0 0.0
  %238 = vmatpush1.xpose.msra.mxu0 0.0
  %239 = vmatprep.subr.mxu0 0.0
  %240 = vmatpush1.xpose.msra.mxu0 0.0
  %241 = vmatprep.subr.mxu0 0.0
  %242 = vmatpush1.xpose.msra.mxu0 0.0
  %243 = vmatprep.subr.mxu0 0.0
  %244 = vmatpush1.xpose.msra.mxu0 0.0
  %245 = vmatprep.subr.mxu0 0.0
  %246 = vmatpush1.xpose.msra.mxu0 0.0
  %247 = vmatprep.subr.mxu0 0.0
  %248 = vmatpush1.xpose.msra.mxu0 0.0
  %249 = vmatprep.subr.mxu0 0.0
  %250 = vmatpush1.xpose.msra.mxu0 0.0
  %251 = vmatprep.subr.mxu0 0.0
  %252 = vmatpush1.xpose.msra.mxu0 0.0
  %253 = vmatprep.subr.mxu0 0.0
  %254 = vmatpush1.xpose.msra.mxu0 0.0
  %255 = vmatprep.subr.mxu0 0.0
  %256 = vmatpush1.xpose.msra.mxu0 0.0
  %257 = vmatprep.subr.mxu0 0.0
  %258 = vmatpush1.xpose.msra.mxu0 0.0
  %259 = vmatprep.subr.mxu0 0.0
  %260 = vmatpush1.xpose.msra.mxu0 0.0
  %261 = vmatprep.mubr.f32.mxu0 0.0
  %262 = vmatmul.mubr.f32.gmra.mrb[0].mxu0 %v192
  %v263 = vpop.f32.mrb[0].mxu0
  %v264 = vadd.f32 0.0, %v263
  %v265 = vpop.f32.mrb[0].mxu0
  %266 = vdwg.mxu0
  %v268 = vsel %vm38, %v17, 0
  %v271 = vsel %vm38, %v25, 0
  %273 = vmatprep.subr.mxu0 0.0
  %274 = vmatpush1.xpose.msra.mxu0 %v271
  %275 = vmatprep.subr.mxu0 0.0
  %276 = vmatpush1.xpose.msra.mxu0 0.0
  %277 = vmatprep.subr.mxu0 0.0
  %278 = vmatpush1.xpose.msra.mxu0 0.0
  %279 = vmatprep.subr.mxu0 0.0
  %280 = vmatpush1.xpose.msra.mxu0 0.0
  %281 = vmatprep.subr.mxu0 0.0
  %282 = vmatpush1.xpose.msra.mxu0 0.0
  %283 = vmatprep.subr.mxu0 0.0
  %284 = vmatpush1.xpose.msra.mxu0 0.0
  %285 = vmatprep.subr.mxu0 0.0
  %286 = vmatpush1.xpose.msra.mxu0 0.0
  %287 = vmatprep.subr.mxu0 0.0
  %288 = vmatpush1.xpose.msra.mxu0 0.0
  %289 = vmatprep.subr.mxu0 0.0
  %290 = vmatpush1.xpose.msra.mxu0 0.0
  %291 = vmatprep.subr.mxu0 0.0
  %292 = vmatpush1.xpose.msra.mxu0 0.0
  %293 = vmatprep.subr.mxu0 0.0
  %294 = vmatpush1.xpose.msra.mxu0 0.0
  %295 = vmatprep.subr.mxu0 0.0
  %296 = vmatpush1.xpose.msra.mxu0 0.0
  %297 = vmatprep.subr.mxu0 0.0
  %298 = vmatpush1.xpose.msra.mxu0 0.0
  %299 = vmatprep.subr.mxu0 0.0
  %300 = vmatpush1.xpose.msra.mxu0 0.0
  %301 = vmatprep.subr.mxu0 0.0
  %302 = vmatpush1.xpose.msra.mxu0 0.0
  %303 = vmatprep.subr.mxu0 0.0
  %304 = vmatpush1.xpose.msra.mxu0 0.0
  %305 = vmatprep.subr.mxu0 0.0
  %306 = vmatpush1.xpose.msra.mxu0 0.0
  %307 = vmatprep.subr.mxu0 0.0
  %308 = vmatpush1.xpose.msra.mxu0 0.0
  %309 = vmatprep.subr.mxu0 0.0
  %310 = vmatpush1.xpose.msra.mxu0 0.0
  %311 = vmatprep.subr.mxu0 0.0
  %312 = vmatpush1.xpose.msra.mxu0 0.0
  %313 = vmatprep.subr.mxu0 0.0
  %314 = vmatpush1.xpose.msra.mxu0 0.0
  %315 = vmatprep.subr.mxu0 0.0
  %316 = vmatpush1.xpose.msra.mxu0 0.0
  %317 = vmatprep.subr.mxu0 0.0
  %318 = vmatpush1.xpose.msra.mxu0 0.0
  %319 = vmatprep.subr.mxu0 0.0
  %320 = vmatpush1.xpose.msra.mxu0 0.0
  %321 = vmatprep.subr.mxu0 0.0
  %322 = vmatpush1.xpose.msra.mxu0 0.0
  %323 = vmatprep.subr.mxu0 0.0
  %324 = vmatpush1.xpose.msra.mxu0 0.0
  %325 = vmatprep.subr.mxu0 0.0
  %326 = vmatpush1.xpose.msra.mxu0 0.0
  %327 = vmatprep.subr.mxu0 0.0
  %328 = vmatpush1.xpose.msra.mxu0 0.0
  %329 = vmatprep.subr.mxu0 0.0
  %330 = vmatpush1.xpose.msra.mxu0 0.0
  %331 = vmatprep.subr.mxu0 0.0
  %332 = vmatpush1.xpose.msra.mxu0 0.0
  %333 = vmatprep.subr.mxu0 0.0
  %334 = vmatpush1.xpose.msra.mxu0 0.0
  %335 = vmatprep.subr.mxu0 0.0
  %336 = vmatpush1.xpose.msra.mxu0 0.0
  %337 = vmatprep.mubr.f32.mxu0 0.0
  %338 = vmatmul.mubr.f32.gmra.mrb[0].mxu0 %v268
  %v339 = vpop.f32.mrb[0].mxu0
  %v340 = vadd.f32 0.0, %v339
  %v341 = vpop.f32.mrb[0].mxu0
  %342 = vdwg.mxu0
  %v344 = vsel %vm38, %v18, 0
  %v347 = vsel %vm38, %v26, 0
  %349 = vmatprep.subr.mxu0 0.0
  %350 = vmatpush1.xpose.msra.mxu0 %v347
  %351 = vmatprep.subr.mxu0 0.0
  %352 = vmatpush1.xpose.msra.mxu0 0.0
  %353 = vmatprep.subr.mxu0 0.0
  %354 = vmatpush1.xpose.msra.mxu0 0.0
  %355 = vmatprep.subr.mxu0 0.0
  %356 = vmatpush1.xpose.msra.mxu0 0.0
  %357 = vmatprep.subr.mxu0 0.0
  %358 = vmatpush1.xpose.msra.mxu0 0.0
  %359 = vmatprep.subr.mxu0 0.0
  %360 = vmatpush1.xpose.msra.mxu0 0.0
  %361 = vmatprep.subr.mxu0 0.0
  %362 = vmatpush1.xpose.msra.mxu0 0.0
  %363 = vmatprep.subr.mxu0 0.0
  %364 = vmatpush1.xpose.msra.mxu0 0.0
  %365 = vmatprep.subr.mxu0 0.0
  %366 = vmatpush1.xpose.msra.mxu0 0.0
  %367 = vmatprep.subr.mxu0 0.0
  %368 = vmatpush1.xpose.msra.mxu0 0.0
  %369 = vmatprep.subr.mxu0 0.0
  %370 = vmatpush1.xpose.msra.mxu0 0.0
  %371 = vmatprep.subr.mxu0 0.0
  %372 = vmatpush1.xpose.msra.mxu0 0.0
  %373 = vmatprep.subr.mxu0 0.0
  %374 = vmatpush1.xpose.msra.mxu0 0.0
  %375 = vmatprep.subr.mxu0 0.0
  %376 = vmatpush1.xpose.msra.mxu0 0.0
  %377 = vmatprep.subr.mxu0 0.0
  %378 = vmatpush1.xpose.msra.mxu0 0.0
  %379 = vmatprep.subr.mxu0 0.0
  %380 = vmatpush1.xpose.msra.mxu0 0.0
  %381 = vmatprep.subr.mxu0 0.0
  %382 = vmatpush1.xpose.msra.mxu0 0.0
  %383 = vmatprep.subr.mxu0 0.0
  %384 = vmatpush1.xpose.msra.mxu0 0.0
  %385 = vmatprep.subr.mxu0 0.0
  %386 = vmatpush1.xpose.msra.mxu0 0.0
  %387 = vmatprep.subr.mxu0 0.0
  %388 = vmatpush1.xpose.msra.mxu0 0.0
  %389 = vmatprep.subr.mxu0 0.0
  %390 = vmatpush1.xpose.msra.mxu0 0.0
  %391 = vmatprep.subr.mxu0 0.0
  %392 = vmatpush1.xpose.msra.mxu0 0.0
  %393 = vmatprep.subr.mxu0 0.0
  %394 = vmatpush1.xpose.msra.mxu0 0.0
  %395 = vmatprep.subr.mxu0 0.0
  %396 = vmatpush1.xpose.msra.mxu0 0.0
  %397 = vmatprep.subr.mxu0 0.0
  %398 = vmatpush1.xpose.msra.mxu0 0.0
  %399 = vmatprep.subr.mxu0 0.0
  %400 = vmatpush1.xpose.msra.mxu0 0.0
  %401 = vmatprep.subr.mxu0 0.0
  %402 = vmatpush1.xpose.msra.mxu0 0.0
  %403 = vmatprep.subr.mxu0 0.0
  %404 = vmatpush1.xpose.msra.mxu0 0.0
  %405 = vmatprep.subr.mxu0 0.0
  %406 = vmatpush1.xpose.msra.mxu0 0.0
  %407 = vmatprep.subr.mxu0 0.0
  %408 = vmatpush1.xpose.msra.mxu0 0.0
  %409 = vmatprep.subr.mxu0 0.0
  %410 = vmatpush1.xpose.msra.mxu0 0.0
  %411 = vmatprep.subr.mxu0 0.0
  %412 = vmatpush1.xpose.msra.mxu0 0.0
  %413 = vmatprep.mubr.f32.mxu0 0.0
  %414 = vmatmul.mubr.f32.gmra.mrb[0].mxu0 %v344
  %v415 = vpop.f32.mrb[0].mxu0
  %v416 = vadd.f32 0.0, %v415
  %v417 = vpop.f32.mrb[0].mxu0
  %418 = vdwg.mxu0
  %v420 = vsel %vm38, %v19, 0
  %v423 = vsel %vm38, %v27, 0
  %425 = vmatprep.subr.mxu0 0.0
  %426 = vmatpush1.xpose.msra.mxu0 %v423
  %427 = vmatprep.subr.mxu0 0.0
  %428 = vmatpush1.xpose.msra.mxu0 0.0
  %429 = vmatprep.subr.mxu0 0.0
  %430 = vmatpush1.xpose.msra.mxu0 0.0
  %431 = vmatprep.subr.mxu0 0.0
  %432 = vmatpush1.xpose.msra.mxu0 0.0
  %433 = vmatprep.subr.mxu0 0.0
  %434 = vmatpush1.xpose.msra.mxu0 0.0
  %435 = vmatprep.subr.mxu0 0.0
  %436 = vmatpush1.xpose.msra.mxu0 0.0
  %437 = vmatprep.subr.mxu0 0.0
  %438 = vmatpush1.xpose.msra.mxu0 0.0
  %439 = vmatprep.subr.mxu0 0.0
  %440 = vmatpush1.xpose.msra.mxu0 0.0
  %441 = vmatprep.subr.mxu0 0.0
  %442 = vmatpush1.xpose.msra.mxu0 0.0
  %443 = vmatprep.subr.mxu0 0.0
  %444 = vmatpush1.xpose.msra.mxu0 0.0
  %445 = vmatprep.subr.mxu0 0.0
  %446 = vmatpush1.xpose.msra.mxu0 0.0
  %447 = vmatprep.subr.mxu0 0.0
  %448 = vmatpush1.xpose.msra.mxu0 0.0
  %449 = vmatprep.subr.mxu0 0.0
  %450 = vmatpush1.xpose.msra.mxu0 0.0
  %451 = vmatprep.subr.mxu0 0.0
  %452 = vmatpush1.xpose.msra.mxu0 0.0
  %453 = vmatprep.subr.mxu0 0.0
  %454 = vmatpush1.xpose.msra.mxu0 0.0
  %455 = vmatprep.subr.mxu0 0.0
  %456 = vmatpush1.xpose.msra.mxu0 0.0
  %457 = vmatprep.subr.mxu0 0.0
  %458 = vmatpush1.xpose.msra.mxu0 0.0
  %459 = vmatprep.subr.mxu0 0.0
  %460 = vmatpush1.xpose.msra.mxu0 0.0
  %461 = vmatprep.subr.mxu0 0.0
  %462 = vmatpush1.xpose.msra.mxu0 0.0
  %463 = vmatprep.subr.mxu0 0.0
  %464 = vmatpush1.xpose.msra.mxu0 0.0
  %465 = vmatprep.subr.mxu0 0.0
  %466 = vmatpush1.xpose.msra.mxu0 0.0
  %467 = vmatprep.subr.mxu0 0.0
  %468 = vmatpush1.xpose.msra.mxu0 0.0
  %469 = vmatprep.subr.mxu0 0.0
  %470 = vmatpush1.xpose.msra.mxu0 0.0
  %471 = vmatprep.subr.mxu0 0.0
  %472 = vmatpush1.xpose.msra.mxu0 0.0
  %473 = vmatprep.subr.mxu0 0.0
  %474 = vmatpush1.xpose.msra.mxu0 0.0
  %475 = vmatprep.subr.mxu0 0.0
  %476 = vmatpush1.xpose.msra.mxu0 0.0
  %477 = vmatprep.subr.mxu0 0.0
  %478 = vmatpush1.xpose.msra.mxu0 0.0
  %479 = vmatprep.subr.mxu0 0.0
  %480 = vmatpush1.xpose.msra.mxu0 0.0
  %481 = vmatprep.subr.mxu0 0.0
  %482 = vmatpush1.xpose.msra.mxu0 0.0
  %483 = vmatprep.subr.mxu0 0.0
  %484 = vmatpush1.xpose.msra.mxu0 0.0
  %485 = vmatprep.subr.mxu0 0.0
  %486 = vmatpush1.xpose.msra.mxu0 0.0
  %487 = vmatprep.subr.mxu0 0.0
  %488 = vmatpush1.xpose.msra.mxu0 0.0
  %489 = vmatprep.mubr.f32.mxu0 0.0
  %490 = vmatmul.mubr.f32.gmra.mrb[0].mxu0 %v420
  %v491 = vpop.f32.mrb[0].mxu0
  %v492 = vadd.f32 0.0, %v491
  %v493 = vpop.f32.mrb[0].mxu0
  %494 = vdwg.mxu0
  %v496 = vsel %vm38, %v20, 0
  %v499 = vsel %vm38, %v28, 0
  %501 = vmatprep.subr.mxu0 0.0
  %502 = vmatpush1.xpose.msra.mxu0 %v499
  %503 = vmatprep.subr.mxu0 0.0
  %504 = vmatpush1.xpose.msra.mxu0 0.0
  %505 = vmatprep.subr.mxu0 0.0
  %506 = vmatpush1.xpose.msra.mxu0 0.0
  %507 = vmatprep.subr.mxu0 0.0
  %508 = vmatpush1.xpose.msra.mxu0 0.0
  %509 = vmatprep.subr.mxu0 0.0
  %510 = vmatpush1.xpose.msra.mxu0 0.0
  %511 = vmatprep.subr.mxu0 0.0
  %512 = vmatpush1.xpose.msra.mxu0 0.0
  %513 = vmatprep.subr.mxu0 0.0
  %514 = vmatpush1.xpose.msra.mxu0 0.0
  %515 = vmatprep.subr.mxu0 0.0
  %516 = vmatpush1.xpose.msra.mxu0 0.0
  %517 = vmatprep.subr.mxu0 0.0
  %518 = vmatpush1.xpose.msra.mxu0 0.0
  %519 = vmatprep.subr.mxu0 0.0
  %520 = vmatpush1.xpose.msra.mxu0 0.0
  %521 = vmatprep.subr.mxu0 0.0
  %522 = vmatpush1.xpose.msra.mxu0 0.0
  %523 = vmatprep.subr.mxu0 0.0
  %524 = vmatpush1.xpose.msra.mxu0 0.0
  %525 = vmatprep.subr.mxu0 0.0
  %526 = vmatpush1.xpose.msra.mxu0 0.0
  %527 = vmatprep.subr.mxu0 0.0
  %528 = vmatpush1.xpose.msra.mxu0 0.0
  %529 = vmatprep.subr.mxu0 0.0
  %530 = vmatpush1.xpose.msra.mxu0 0.0
  %531 = vmatprep.subr.mxu0 0.0
  %532 = vmatpush1.xpose.msra.mxu0 0.0
  %533 = vmatprep.subr.mxu0 0.0
  %534 = vmatpush1.xpose.msra.mxu0 0.0
  %535 = vmatprep.subr.mxu0 0.0
  %536 = vmatpush1.xpose.msra.mxu0 0.0
  %537 = vmatprep.subr.mxu0 0.0
  %538 = vmatpush1.xpose.msra.mxu0 0.0
  %539 = vmatprep.subr.mxu0 0.0
  %540 = vmatpush1.xpose.msra.mxu0 0.0
  %541 = vmatprep.subr.mxu0 0.0
  %542 = vmatpush1.xpose.msra.mxu0 0.0
  %543 = vmatprep.subr.mxu0 0.0
  %544 = vmatpush1.xpose.msra.mxu0 0.0
  %545 = vmatprep.subr.mxu0 0.0
  %546 = vmatpush1.xpose.msra.mxu0 0.0
  %547 = vmatprep.subr.mxu0 0.0
  %548 = vmatpush1.xpose.msra.mxu0 0.0
  %549 = vmatprep.subr.mxu0 0.0
  %550 = vmatpush1.xpose.msra.mxu0 0.0
  %551 = vmatprep.subr.mxu0 0.0
  %552 = vmatpush1.xpose.msra.mxu0 0.0
  %553 = vmatprep.subr.mxu0 0.0
  %554 = vmatpush1.xpose.msra.mxu0 0.0
  %555 = vmatprep.subr.mxu0 0.0
  %556 = vmatpush1.xpose.msra.mxu0 0.0
  %557 = vmatprep.subr.mxu0 0.0
  %558 = vmatpush1.xpose.msra.mxu0 0.0
  %559 = vmatprep.subr.mxu0 0.0
  %560 = vmatpush1.xpose.msra.mxu0 0.0
  %561 = vmatprep.subr.mxu0 0.0
  %562 = vmatpush1.xpose.msra.mxu0 0.0
  %563 = vmatprep.subr.mxu0 0.0
  %564 = vmatpush1.xpose.msra.mxu0 0.0
  %565 = vmatprep.mubr.f32.mxu0 0.0
  %566 = vmatmul.mubr.f32.gmra.mrb[0].mxu0 %v496
  %v567 = vpop.f32.mrb[0].mxu0
  %v568 = vadd.f32 0.0, %v567
  %v569 = vpop.f32.mrb[0].mxu0
  %570 = vdwg.mxu0
  %v572 = vsel %vm38, %v21, 0
  %v575 = vsel %vm38, %v29, 0
  %577 = vmatprep.subr.mxu0 0.0
  %578 = vmatpush1.xpose.msra.mxu0 %v575
  %579 = vmatprep.subr.mxu0 0.0
  %580 = vmatpush1.xpose.msra.mxu0 0.0
  %581 = vmatprep.subr.mxu0 0.0
  %582 = vmatpush1.xpose.msra.mxu0 0.0
  %583 = vmatprep.subr.mxu0 0.0
  %584 = vmatpush1.xpose.msra.mxu0 0.0
  %585 = vmatprep.subr.mxu0 0.0
  %586 = vmatpush1.xpose.msra.mxu0 0.0
  %587 = vmatprep.subr.mxu0 0.0
  %588 = vmatpush1.xpose.msra.mxu0 0.0
  %589 = vmatprep.subr.mxu0 0.0
  %590 = vmatpush1.xpose.msra.mxu0 0.0
  %591 = vmatprep.subr.mxu0 0.0
  %592 = vmatpush1.xpose.msra.mxu0 0.0
  %593 = vmatprep.subr.mxu0 0.0
  %594 = vmatpush1.xpose.msra.mxu0 0.0
  %595 = vmatprep.subr.mxu0 0.0
  %596 = vmatpush1.xpose.msra.mxu0 0.0
  %597 = vmatprep.subr.mxu0 0.0
  %598 = vmatpush1.xpose.msra.mxu0 0.0
  %599 = vmatprep.subr.mxu0 0.0
  %600 = vmatpush1.xpose.msra.mxu0 0.0
  %601 = vmatprep.subr.mxu0 0.0
  %602 = vmatpush1.xpose.msra.mxu0 0.0
  %603 = vmatprep.subr.mxu0 0.0
  %604 = vmatpush1.xpose.msra.mxu0 0.0
  %605 = vmatprep.subr.mxu0 0.0
  %606 = vmatpush1.xpose.msra.mxu0 0.0
  %607 = vmatprep.subr.mxu0 0.0
  %608 = vmatpush1.xpose.msra.mxu0 0.0
  %609 = vmatprep.subr.mxu0 0.0
  %610 = vmatpush1.xpose.msra.mxu0 0.0
  %611 = vmatprep.subr.mxu0 0.0
  %612 = vmatpush1.xpose.msra.mxu0 0.0
  %613 = vmatprep.subr.mxu0 0.0
  %614 = vmatpush1.xpose.msra.mxu0 0.0
  %615 = vmatprep.subr.mxu0 0.0
  %616 = vmatpush1.xpose.msra.mxu0 0.0
  %617 = vmatprep.subr.mxu0 0.0
  %618 = vmatpush1.xpose.msra.mxu0 0.0
  %619 = vmatprep.subr.mxu0 0.0
  %620 = vmatpush1.xpose.msra.mxu0 0.0
  %621 = vmatprep.subr.mxu0 0.0
  %622 = vmatpush1.xpose.msra.mxu0 0.0
  %623 = vmatprep.subr.mxu0 0.0
  %624 = vmatpush1.xpose.msra.mxu0 0.0
  %625 = vmatprep.subr.mxu0 0.0
  %626 = vmatpush1.xpose.msra.mxu0 0.0
  %627 = vmatprep.subr.mxu0 0.0
  %628 = vmatpush1.xpose.msra.mxu0 0.0
  %629 = vmatprep.subr.mxu0 0.0
  %630 = vmatpush1.xpose.msra.mxu0 0.0
  %631 = vmatprep.subr.mxu0 0.0
  %632 = vmatpush1.xpose.msra.mxu0 0.0
  %633 = vmatprep.subr.mxu0 0.0
  %634 = vmatpush1.xpose.msra.mxu0 0.0
  %635 = vmatprep.subr.mxu0 0.0
  %636 = vmatpush1.xpose.msra.mxu0 0.0
  %637 = vmatprep.subr.mxu0 0.0
  %638 = vmatpush1.xpose.msra.mxu0 0.0
  %639 = vmatprep.subr.mxu0 0.0
  %640 = vmatpush1.xpose.msra.mxu0 0.0
  %641 = vmatprep.mubr.f32.mxu0 0.0
  %642 = vmatmul.mubr.f32.gmra.mrb[0].mxu0 %v572
  %v643 = vpop.f32.mrb[0].mxu0
  %v644 = vadd.f32 0.0, %v643
  %v645 = vpop.f32.mrb[0].mxu0
  %646 = vdwg.mxu0
  %v647 = vmul.f32 %v112, 0.35355338
  %v648 = vmul.f32 %v188, 0.35355338
  %v649 = vmul.f32 %v264, 0.35355338
  %v650 = vmul.f32 %v340, 0.35355338
  %v651 = vmul.f32 %v416, 0.35355338
  %v652 = vmul.f32 %v492, 0.35355338
  %v653 = vmul.f32 %v568, 0.35355338
  %v654 = vmul.f32 %v644, 0.35355338
  %v655 = vsel %vm38, %v647, -inf
  %656 = vmax.xlane.f32.xlu0 %v655
  %v657 = vpop.xlane.xlu0 %656
  %v658 = vsel %vm38, %v648, -inf
  %659 = vmax.xlane.f32.xlu0 %v658
  %v660 = vpop.xlane.xlu0 %659
  %v661 = vsel %vm38, %v649, -inf
  %662 = vmax.xlane.f32.xlu0 %v661
  %v663 = vpop.xlane.xlu0 %662
  %v664 = vsel %vm38, %v650, -inf
  %665 = vmax.xlane.f32.xlu0 %v664
  %v666 = vpop.xlane.xlu0 %665
  %v667 = vsel %vm38, %v651, -inf
  %668 = vmax.xlane.f32.xlu0 %v667
  %v669 = vpop.xlane.xlu0 %668
  %v670 = vsel %vm38, %v652, -inf
  %671 = vmax.xlane.f32.xlu0 %v670
  %v672 = vpop.xlane.xlu0 %671
  %v673 = vsel %vm38, %v653, -inf
  %674 = vmax.xlane.f32.xlu0 %v673
  %v675 = vpop.xlane.xlu0 %674
  %v676 = vsel %vm38, %v654, -inf
  %677 = vmax.xlane.f32.xlu0 %v676
  %v678 = vpop.xlane.xlu0 %677
  %v679 = vsub.f32 %v647, %v657
  %v680 = vsub.f32 %v648, %v660
  %v681 = vsub.f32 %v649, %v663
  %v682 = vsub.f32 %v650, %v666
  %v683 = vsub.f32 %v651, %v669
  %v684 = vsub.f32 %v652, %v672
  %v685 = vsub.f32 %v653, %v675
  %v686 = vsub.f32 %v654, %v678
  %v687 = vmul.f32 %v679, 1.442695
  %v688 = vpow.pop %v687
  %v689 = vmul.f32 %v680, 1.442695
  %v690 = vpow.pop %v689
  %v691 = vmul.f32 %v681, 1.442695
  %v692 = vpow.pop %v691
  %v693 = vmul.f32 %v682, 1.442695
  %v694 = vpow.pop %v693
  %v695 = vmul.f32 %v683, 1.442695
  %v696 = vpow.pop %v695
  %v697 = vmul.f32 %v684, 1.442695
  %v698 = vpow.pop %v697
  %v699 = vmul.f32 %v685, 1.442695
  %v700 = vpow.pop %v699
  %v701 = vmul.f32 %v686, 1.442695
  %v702 = vpow.pop %v701
  %v703 = vsel %vm38, %v688, 0.0
  %704 = vadd.xlane.f32.xlu0 %v703
  %v705 = vpop.xlane.xlu0 %704
  %v706 = vsel %vm38, %v690, 0.0
  %707 = vadd.xlane.f32.xlu0 %v706
  %v708 = vpop.xlane.xlu0 %707
  %v709 = vsel %vm38, %v692, 0.0
  %710 = vadd.xlane.f32.xlu0 %v709
  %v711 = vpop.xlane.xlu0 %710
  %v712 = vsel %vm38, %v694, 0.0
  %713 = vadd.xlane.f32.xlu0 %v712
  %v714 = vpop.xlane.xlu0 %713
  %v715 = vsel %vm38, %v696, 0.0
  %716 = vadd.xlane.f32.xlu0 %v715
  %v717 = vpop.xlane.xlu0 %716
  %v718 = vsel %vm38, %v698, 0.0
  %719 = vadd.xlane.f32.xlu0 %v718
  %v720 = vpop.xlane.xlu0 %719
  %v721 = vsel %vm38, %v700, 0.0
  %722 = vadd.xlane.f32.xlu0 %v721
  %v723 = vpop.xlane.xlu0 %722
  %v724 = vsel %vm38, %v702, 0.0
  %725 = vadd.xlane.f32.xlu0 %v724
  %v726 = vpop.xlane.xlu0 %725
  %v728 = vsel %vm38, %v688, 0
  %730 = vmatprep.subr.mxu0 0.0
  %731 = vmatpush1.msra.mxu0 %v30
  %732 = vmatprep.subr.mxu0 0.0
  %733 = vmatpush1.msra.mxu0 0.0
  %734 = vmatprep.subr.mxu0 0.0
  %735 = vmatpush1.msra.mxu0 0.0
  %736 = vmatprep.subr.mxu0 0.0
  %737 = vmatpush1.msra.mxu0 0.0
  %738 = vmatprep.subr.mxu0 0.0
  %739 = vmatpush1.msra.mxu0 0.0
  %740 = vmatprep.subr.mxu0 0.0
  %741 = vmatpush1.msra.mxu0 0.0
  %742 = vmatprep.subr.mxu0 0.0
  %743 = vmatpush1.msra.mxu0 0.0
  %744 = vmatprep.subr.mxu0 0.0
  %745 = vmatpush1.msra.mxu0 0.0
  %746 = vmatprep.subr.mxu0 0.0
  %747 = vmatpush1.msra.mxu0 0.0
  %748 = vmatprep.subr.mxu0 0.0
  %749 = vmatpush1.msra.mxu0 0.0
  %750 = vmatprep.subr.mxu0 0.0
  %751 = vmatpush1.msra.mxu0 0.0
  %752 = vmatprep.subr.mxu0 0.0
  %753 = vmatpush1.msra.mxu0 0.0
  %754 = vmatprep.subr.mxu0 0.0
  %755 = vmatpush1.msra.mxu0 0.0
  %756 = vmatprep.subr.mxu0 0.0
  %757 = vmatpush1.msra.mxu0 0.0
  %758 = vmatprep.subr.mxu0 0.0
  %759 = vmatpush1.msra.mxu0 0.0
  %760 = vmatprep.subr.mxu0 0.0
  %761 = vmatpush1.msra.mxu0 0.0
  %762 = vmatprep.subr.mxu0 0.0
  %763 = vmatpush1.msra.mxu0 0.0
  %764 = vmatprep.subr.mxu0 0.0
  %765 = vmatpush1.msra.mxu0 0.0
  %766 = vmatprep.subr.mxu0 0.0
  %767 = vmatpush1.msra.mxu0 0.0
  %768 = vmatprep.subr.mxu0 0.0
  %769 = vmatpush1.msra.mxu0 0.0
  %770 = vmatprep.subr.mxu0 0.0
  %771 = vmatpush1.msra.mxu0 0.0
  %772 = vmatprep.subr.mxu0 0.0
  %773 = vmatpush1.msra.mxu0 0.0
  %774 = vmatprep.subr.mxu0 0.0
  %775 = vmatpush1.msra.mxu0 0.0
  %776 = vmatprep.subr.mxu0 0.0
  %777 = vmatpush1.msra.mxu0 0.0
  %778 = vmatprep.subr.mxu0 0.0
  %779 = vmatpush1.msra.mxu0 0.0
  %780 = vmatprep.subr.mxu0 0.0
  %781 = vmatpush1.msra.mxu0 0.0
  %782 = vmatprep.subr.mxu0 0.0
  %783 = vmatpush1.msra.mxu0 0.0
  %784 = vmatprep.subr.mxu0 0.0
  %785 = vmatpush1.msra.mxu0 0.0
  %786 = vmatprep.subr.mxu0 0.0
  %787 = vmatpush1.msra.mxu0 0.0
  %788 = vmatprep.subr.mxu0 0.0
  %789 = vmatpush1.msra.mxu0 0.0
  %790 = vmatprep.subr.mxu0 0.0
  %791 = vmatpush1.msra.mxu0 0.0
  %792 = vmatprep.subr.mxu0 0.0
  %793 = vmatpush1.msra.mxu0 0.0
  %794 = vmatprep.mubr.f32.mxu0 0.0
  %795 = vmatmul.mubr.f32.gmra.mrb[0].mxu0 %v728
  %v796 = vpop.f32.mrb[0].mxu0
  %v797 = vadd.f32 0.0, %v796
  %v798 = vpop.f32.mrb[0].mxu0
  %799 = vdwg.mxu0
  %v801 = vsel %vm38, %v690, 0
  %803 = vmatprep.subr.mxu0 0.0
  %804 = vmatpush1.msra.mxu0 %v31
  %805 = vmatprep.subr.mxu0 0.0
  %806 = vmatpush1.msra.mxu0 0.0
  %807 = vmatprep.subr.mxu0 0.0
  %808 = vmatpush1.msra.mxu0 0.0
  %809 = vmatprep.subr.mxu0 0.0
  %810 = vmatpush1.msra.mxu0 0.0
  %811 = vmatprep.subr.mxu0 0.0
  %812 = vmatpush1.msra.mxu0 0.0
  %813 = vmatprep.subr.mxu0 0.0
  %814 = vmatpush1.msra.mxu0 0.0
  %815 = vmatprep.subr.mxu0 0.0
  %816 = vmatpush1.msra.mxu0 0.0
  %817 = vmatprep.subr.mxu0 0.0
  %818 = vmatpush1.msra.mxu0 0.0
  %819 = vmatprep.subr.mxu0 0.0
  %820 = vmatpush1.msra.mxu0 0.0
  %821 = vmatprep.subr.mxu0 0.0
  %822 = vmatpush1.msra.mxu0 0.0
  %823 = vmatprep.subr.mxu0 0.0
  %824 = vmatpush1.msra.mxu0 0.0
  %825 = vmatprep.subr.mxu0 0.0
  %826 = vmatpush1.msra.mxu0 0.0
  %827 = vmatprep.subr.mxu0 0.0
  %828 = vmatpush1.msra.mxu0 0.0
  %829 = vmatprep.subr.mxu0 0.0
  %830 = vmatpush1.msra.mxu0 0.0
  %831 = vmatprep.subr.mxu0 0.0
  %832 = vmatpush1.msra.mxu0 0.0
  %833 = vmatprep.subr.mxu0 0.0
  %834 = vmatpush1.msra.mxu0 0.0
  %835 = vmatprep.subr.mxu0 0.0
  %836 = vmatpush1.msra.mxu0 0.0
  %837 = vmatprep.subr.mxu0 0.0
  %838 = vmatpush1.msra.mxu0 0.0
  %839 = vmatprep.subr.mxu0 0.0
  %840 = vmatpush1.msra.mxu0 0.0
  %841 = vmatprep.subr.mxu0 0.0
  %842 = vmatpush1.msra.mxu0 0.0
  %843 = vmatprep.subr.mxu0 0.0
  %844 = vmatpush1.msra.mxu0 0.0
  %845 = vmatprep.subr.mxu0 0.0
  %846 = vmatpush1.msra.mxu0 0.0
  %847 = vmatprep.subr.mxu0 0.0
  %848 = vmatpush1.msra.mxu0 0.0
  %849 = vmatprep.subr.mxu0 0.0
  %850 = vmatpush1.msra.mxu0 0.0
  %851 = vmatprep.subr.mxu0 0.0
  %852 = vmatpush1.msra.mxu0 0.0
  %853 = vmatprep.subr.mxu0 0.0
  %854 = vmatpush1.msra.mxu0 0.0
  %855 = vmatprep.subr.mxu0 0.0
  %856 = vmatpush1.msra.mxu0 0.0
  %857 = vmatprep.subr.mxu0 0.0
  %858 = vmatpush1.msra.mxu0 0.0
  %859 = vmatprep.subr.mxu0 0.0
  %860 = vmatpush1.msra.mxu0 0.0
  %861 = vmatprep.subr.mxu0 0.0
  %862 = vmatpush1.msra.mxu0 0.0
  %863 = vmatprep.subr.mxu0 0.0
  %864 = vmatpush1.msra.mxu0 0.0
  %865 = vmatprep.subr.mxu0 0.0
  %866 = vmatpush1.msra.mxu0 0.0
  %867 = vmatprep.mubr.f32.mxu0 0.0
  %868 = vmatmul.mubr.f32.gmra.mrb[0].mxu0 %v801
  %v869 = vpop.f32.mrb[0].mxu0
  %v870 = vadd.f32 0.0, %v869
  %v871 = vpop.f32.mrb[0].mxu0
  %872 = vdwg.mxu0
  %v874 = vsel %vm38, %v692, 0
  %876 = vmatprep.subr.mxu0 0.0
  %877 = vmatpush1.msra.mxu0 %v32
  %878 = vmatprep.subr.mxu0 0.0
  %879 = vmatpush1.msra.mxu0 0.0
  %880 = vmatprep.subr.mxu0 0.0
  %881 = vmatpush1.msra.mxu0 0.0
  %882 = vmatprep.subr.mxu0 0.0
  %883 = vmatpush1.msra.mxu0 0.0
  %884 = vmatprep.subr.mxu0 0.0
  %885 = vmatpush1.msra.mxu0 0.0
  %886 = vmatprep.subr.mxu0 0.0
  %887 = vmatpush1.msra.mxu0 0.0
  %888 = vmatprep.subr.mxu0 0.0
  %889 = vmatpush1.msra.mxu0 0.0
  %890 = vmatprep.subr.mxu0 0.0
  %891 = vmatpush1.msra.mxu0 0.0
  %892 = vmatprep.subr.mxu0 0.0
  %893 = vmatpush1.msra.mxu0 0.0
  %894 = vmatprep.subr.mxu0 0.0
  %895 = vmatpush1.msra.mxu0 0.0
  %896 = vmatprep.subr.mxu0 0.0
  %897 = vmatpush1.msra.mxu0 0.0
  %898 = vmatprep.subr.mxu0 0.0
  %899 = vmatpush1.msra.mxu0 0.0
  %900 = vmatprep.subr.mxu0 0.0
  %901 = vmatpush1.msra.mxu0 0.0
  %902 = vmatprep.subr.mxu0 0.0
  %903 = vmatpush1.msra.mxu0 0.0
  %904 = vmatprep.subr.mxu0 0.0
  %905 = vmatpush1.msra.mxu0 0.0
  %906 = vmatprep.subr.mxu0 0.0
  %907 = vmatpush1.msra.mxu0 0.0
  %908 = vmatprep.subr.mxu0 0.0
  %909 = vmatpush1.msra.mxu0 0.0
  %910 = vmatprep.subr.mxu0 0.0
  %911 = vmatpush1.msra.mxu0 0.0
  %912 = vmatprep.subr.mxu0 0.0
  %913 = vmatpush1.msra.mxu0 0.0
  %914 = vmatprep.subr.mxu0 0.0
  %915 = vmatpush1.msra.mxu0 0.0
  %916 = vmatprep.subr.mxu0 0.0
  %917 = vmatpush1.msra.mxu0 0.0
  %918 = vmatprep.subr.mxu0 0.0
  %919 = vmatpush1.msra.mxu0 0.0
  %920 = vmatprep.subr.mxu0 0.0
  %921 = vmatpush1.msra.mxu0 0.0
  %922 = vmatprep.subr.mxu0 0.0
  %923 = vmatpush1.msra.mxu0 0.0
  %924 = vmatprep.subr.mxu0 0.0
  %925 = vmatpush1.msra.mxu0 0.0
  %926 = vmatprep.subr.mxu0 0.0
  %927 = vmatpush1.msra.mxu0 0.0
  %928 = vmatprep.subr.mxu0 0.0
  %929 = vmatpush1.msra.mxu0 0.0
  %930 = vmatprep.subr.mxu0 0.0
  %931 = vmatpush1.msra.mxu0 0.0
  %932 = vmatprep.subr.mxu0 0.0
  %933 = vmatpush1.msra.mxu0 0.0
  %934 = vmatprep.subr.mxu0 0.0
  %935 = vmatpush1.msra.mxu0 0.0
  %936 = vmatprep.subr.mxu0 0.0
  %937 = vmatpush1.msra.mxu0 0.0
  %938 = vmatprep.subr.mxu0 0.0
  %939 = vmatpush1.msra.mxu0 0.0
  %940 = vmatprep.mubr.f32.mxu0 0.0
  %941 = vmatmul.mubr.f32.gmra.mrb[0].mxu0 %v874
  %v942 = vpop.f32.mrb[0].mxu0
  %v943 = vadd.f32 0.0, %v942
  %v944 = vpop.f32.mrb[0].mxu0
  %945 = vdwg.mxu0
  %v947 = vsel %vm38, %v694, 0
  %949 = vmatprep.subr.mxu0 0.0
  %950 = vmatpush1.msra.mxu0 %v33
  %951 = vmatprep.subr.mxu0 0.0
  %952 = vmatpush1.msra.mxu0 0.0
  %953 = vmatprep.subr.mxu0 0.0
  %954 = vmatpush1.msra.mxu0 0.0
  %955 = vmatprep.subr.mxu0 0.0
  %956 = vmatpush1.msra.mxu0 0.0
  %957 = vmatprep.subr.mxu0 0.0
  %958 = vmatpush1.msra.mxu0 0.0
  %959 = vmatprep.subr.mxu0 0.0
  %960 = vmatpush1.msra.mxu0 0.0
  %961 = vmatprep.subr.mxu0 0.0
  %962 = vmatpush1.msra.mxu0 0.0
  %963 = vmatprep.subr.mxu0 0.0
  %964 = vmatpush1.msra.mxu0 0.0
  %965 = vmatprep.subr.mxu0 0.0
  %966 = vmatpush1.msra.mxu0 0.0
  %967 = vmatprep.subr.mxu0 0.0
  %968 = vmatpush1.msra.mxu0 0.0
  %969 = vmatprep.subr.mxu0 0.0
  %970 = vmatpush1.msra.mxu0 0.0
  %971 = vmatprep.subr.mxu0 0.0
  %972 = vmatpush1.msra.mxu0 0.0
  %973 = vmatprep.subr.mxu0 0.0
  %974 = vmatpush1.msra.mxu0 0.0
  %975 = vmatprep.subr.mxu0 0.0
  %976 = vmatpush1.msra.mxu0 0.0
  %977 = vmatprep.subr.mxu0 0.0
  %978 = vmatpush1.msra.mxu0 0.0
  %979 = vmatprep.subr.mxu0 0.0
  %980 = vmatpush1.msra.mxu0 0.0
  %981 = vmatprep.subr.mxu0 0.0
  %982 = vmatpush1.msra.mxu0 0.0
  %983 = vmatprep.subr.mxu0 0.0
  %984 = vmatpush1.msra.mxu0 0.0
  %985 = vmatprep.subr.mxu0 0.0
  %986 = vmatpush1.msra.mxu0 0.0
  %987 = vmatprep.subr.mxu0 0.0
  %988 = vmatpush1.msra.mxu0 0.0
  %989 = vmatprep.subr.mxu0 0.0
  %990 = vmatpush1.msra.mxu0 0.0
  %991 = vmatprep.subr.mxu0 0.0
  %992 = vmatpush1.msra.mxu0 0.0
  %993 = vmatprep.subr.mxu0 0.0
  %994 = vmatpush1.msra.mxu0 0.0
  %995 = vmatprep.subr.mxu0 0.0
  %996 = vmatpush1.msra.mxu0 0.0
  %997 = vmatprep.subr.mxu0 0.0
  %998 = vmatpush1.msra.mxu0 0.0
  %999 = vmatprep.subr.mxu0 0.0
  %1000 = vmatpush1.msra.mxu0 0.0
  %1001 = vmatprep.subr.mxu0 0.0
  %1002 = vmatpush1.msra.mxu0 0.0
  %1003 = vmatprep.subr.mxu0 0.0
  %1004 = vmatpush1.msra.mxu0 0.0
  %1005 = vmatprep.subr.mxu0 0.0
  %1006 = vmatpush1.msra.mxu0 0.0
  %1007 = vmatprep.subr.mxu0 0.0
  %1008 = vmatpush1.msra.mxu0 0.0
  %1009 = vmatprep.subr.mxu0 0.0
  %1010 = vmatpush1.msra.mxu0 0.0
  %1011 = vmatprep.subr.mxu0 0.0
  %1012 = vmatpush1.msra.mxu0 0.0
  %1013 = vmatprep.mubr.f32.mxu0 0.0
  %1014 = vmatmul.mubr.f32.gmra.mrb[0].mxu0 %v947
  %v1015 = vpop.f32.mrb[0].mxu0
  %v1016 = vadd.f32 0.0, %v1015
  %v1017 = vpop.f32.mrb[0].mxu0
  %1018 = vdwg.mxu0
  %v1020 = vsel %vm38, %v696, 0
  %1022 = vmatprep.subr.mxu0 0.0
  %1023 = vmatpush1.msra.mxu0 %v34
  %1024 = vmatprep.subr.mxu0 0.0
  %1025 = vmatpush1.msra.mxu0 0.0
  %1026 = vmatprep.subr.mxu0 0.0
  %1027 = vmatpush1.msra.mxu0 0.0
  %1028 = vmatprep.subr.mxu0 0.0
  %1029 = vmatpush1.msra.mxu0 0.0
  %1030 = vmatprep.subr.mxu0 0.0
  %1031 = vmatpush1.msra.mxu0 0.0
  %1032 = vmatprep.subr.mxu0 0.0
  %1033 = vmatpush1.msra.mxu0 0.0
  %1034 = vmatprep.subr.mxu0 0.0
  %1035 = vmatpush1.msra.mxu0 0.0
  %1036 = vmatprep.subr.mxu0 0.0
  %1037 = vmatpush1.msra.mxu0 0.0
  %1038 = vmatprep.subr.mxu0 0.0
  %1039 = vmatpush1.msra.mxu0 0.0
  %1040 = vmatprep.subr.mxu0 0.0
  %1041 = vmatpush1.msra.mxu0 0.0
  %1042 = vmatprep.subr.mxu0 0.0
  %1043 = vmatpush1.msra.mxu0 0.0
  %1044 = vmatprep.subr.mxu0 0.0
  %1045 = vmatpush1.msra.mxu0 0.0
  %1046 = vmatprep.subr.mxu0 0.0
  %1047 = vmatpush1.msra.mxu0 0.0
  %1048 = vmatprep.subr.mxu0 0.0
  %1049 = vmatpush1.msra.mxu0 0.0
  %1050 = vmatprep.subr.mxu0 0.0
  %1051 = vmatpush1.msra.mxu0 0.0
  %1052 = vmatprep.subr.mxu0 0.0
  %1053 = vmatpush1.msra.mxu0 0.0
  %1054 = vmatprep.subr.mxu0 0.0
  %1055 = vmatpush1.msra.mxu0 0.0
  %1056 = vmatprep.subr.mxu0 0.0
  %1057 = vmatpush1.msra.mxu0 0.0
  %1058 = vmatprep.subr.mxu0 0.0
  %1059 = vmatpush1.msra.mxu0 0.0
  %1060 = vmatprep.subr.mxu0 0.0
  %1061 = vmatpush1.msra.mxu0 0.0
  %1062 = vmatprep.subr.mxu0 0.0
  %1063 = vmatpush1.msra.mxu0 0.0
  %1064 = vmatprep.subr.mxu0 0.0
  %1065 = vmatpush1.msra.mxu0 0.0
  %1066 = vmatprep.subr.mxu0 0.0
  %1067 = vmatpush1.msra.mxu0 0.0
  %1068 = vmatprep.subr.mxu0 0.0
  %1069 = vmatpush1.msra.mxu0 0.0
  %1070 = vmatprep.subr.mxu0 0.0
  %1071 = vmatpush1.msra.mxu0 0.0
  %1072 = vmatprep.subr.mxu0 0.0
  %1073 = vmatpush1.msra.mxu0 0.0
  %1074 = vmatprep.subr.mxu0 0.0
  %1075 = vmatpush1.msra.mxu0 0.0
  %1076 = vmatprep.subr.mxu0 0.0
  %1077 = vmatpush1.msra.mxu0 0.0
  %1078 = vmatprep.subr.mxu0 0.0
  %1079 = vmatpush1.msra.mxu0 0.0
  %1080 = vmatprep.subr.mxu0 0.0
  %1081 = vmatpush1.msra.mxu0 0.0
  %1082 = vmatprep.subr.mxu0 0.0
  %1083 = vmatpush1.msra.mxu0 0.0
  %1084 = vmatprep.subr.mxu0 0.0
  %1085 = vmatpush1.msra.mxu0 0.0
  %1086 = vmatprep.mubr.f32.mxu0 0.0
  %1087 = vmatmul.mubr.f32.gmra.mrb[0].mxu0 %v1020
  %v1088 = vpop.f32.mrb[0].mxu0
  %v1089 = vadd.f32 0.0, %v1088
  %v1090 = vpop.f32.mrb[0].mxu0
  %1091 = vdwg.mxu0
  %v1093 = vsel %vm38, %v698, 0
  %1095 = vmatprep.subr.mxu0 0.0
  %1096 = vmatpush1.msra.mxu0 %v35
  %1097 = vmatprep.subr.mxu0 0.0
  %1098 = vmatpush1.msra.mxu0 0.0
  %1099 = vmatprep.subr.mxu0 0.0
  %1100 = vmatpush1.msra.mxu0 0.0
  %1101 = vmatprep.subr.mxu0 0.0
  %1102 = vmatpush1.msra.mxu0 0.0
  %1103 = vmatprep.subr.mxu0 0.0
  %1104 = vmatpush1.msra.mxu0 0.0
  %1105 = vmatprep.subr.mxu0 0.0
  %1106 = vmatpush1.msra.mxu0 0.0
  %1107 = vmatprep.subr.mxu0 0.0
  %1108 = vmatpush1.msra.mxu0 0.0
  %1109 = vmatprep.subr.mxu0 0.0
  %1110 = vmatpush1.msra.mxu0 0.0
  %1111 = vmatprep.subr.mxu0 0.0
  %1112 = vmatpush1.msra.mxu0 0.0
  %1113 = vmatprep.subr.mxu0 0.0
  %1114 = vmatpush1.msra.mxu0 0.0
  %1115 = vmatprep.subr.mxu0 0.0
  %1116 = vmatpush1.msra.mxu0 0.0
  %1117 = vmatprep.subr.mxu0 0.0
  %1118 = vmatpush1.msra.mxu0 0.0
  %1119 = vmatprep.subr.mxu0 0.0
  %1120 = vmatpush1.msra.mxu0 0.0
  %1121 = vmatprep.subr.mxu0 0.0
  %1122 = vmatpush1.msra.mxu0 0.0
  %1123 = vmatprep.subr.mxu0 0.0
  %1124 = vmatpush1.msra.mxu0 0.0
  %1125 = vmatprep.subr.mxu0 0.0
  %1126 = vmatpush1.msra.mxu0 0.0
  %1127 = vmatprep.subr.mxu0 0.0
  %1128 = vmatpush1.msra.mxu0 0.0
  %1129 = vmatprep.subr.mxu0 0.0
  %1130 = vmatpush1.msra.mxu0 0.0
  %1131 = vmatprep.subr.mxu0 0.0
  %1132 = vmatpush1.msra.mxu0 0.0
  %1133 = vmatprep.subr.mxu0 0.0
  %1134 = vmatpush1.msra.mxu0 0.0
  %1135 = vmatprep.subr.mxu0 0.0
  %1136 = vmatpush1.msra.mxu0 0.0
  %1137 = vmatprep.subr.mxu0 0.0
  %1138 = vmatpush1.msra.mxu0 0.0
  %1139 = vmatprep.subr.mxu0 0.0
  %1140 = vmatpush1.msra.mxu0 0.0
  %1141 = vmatprep.subr.mxu0 0.0
  %1142 = vmatpush1.msra.mxu0 0.0
  %1143 = vmatprep.subr.mxu0 0.0
  %1144 = vmatpush1.msra.mxu0 0.0
  %1145 = vmatprep.subr.mxu0 0.0
  %1146 = vmatpush1.msra.mxu0 0.0
  %1147 = vmatprep.subr.mxu0 0.0
  %1148 = vmatpush1.msra.mxu0 0.0
  %1149 = vmatprep.subr.mxu0 0.0
  %1150 = vmatpush1.msra.mxu0 0.0
  %1151 = vmatprep.subr.mxu0 0.0
  %1152 = vmatpush1.msra.mxu0 0.0
  %1153 = vmatprep.subr.mxu0 0.0
  %1154 = vmatpush1.msra.mxu0 0.0
  %1155 = vmatprep.subr.mxu0 0.0
  %1156 = vmatpush1.msra.mxu0 0.0
  %1157 = vmatprep.subr.mxu0 0.0
  %1158 = vmatpush1.msra.mxu0 0.0
  %1159 = vmatprep.mubr.f32.mxu0 0.0
  %1160 = vmatmul.mubr.f32.gmra.mrb[0].mxu0 %v1093
  %v1161 = vpop.f32.mrb[0].mxu0
  %v1162 = vadd.f32 0.0, %v1161
  %v1163 = vpop.f32.mrb[0].mxu0
  %1164 = vdwg.mxu0
  %v1166 = vsel %vm38, %v700, 0
  %1168 = vmatprep.subr.mxu0 0.0
  %1169 = vmatpush1.msra.mxu0 %v36
  %1170 = vmatprep.subr.mxu0 0.0
  %1171 = vmatpush1.msra.mxu0 0.0
  %1172 = vmatprep.subr.mxu0 0.0
  %1173 = vmatpush1.msra.mxu0 0.0
  %1174 = vmatprep.subr.mxu0 0.0
  %1175 = vmatpush1.msra.mxu0 0.0
  %1176 = vmatprep.subr.mxu0 0.0
  %1177 = vmatpush1.msra.mxu0 0.0
  %1178 = vmatprep.subr.mxu0 0.0
  %1179 = vmatpush1.msra.mxu0 0.0
  %1180 = vmatprep.subr.mxu0 0.0
  %1181 = vmatpush1.msra.mxu0 0.0
  %1182 = vmatprep.subr.mxu0 0.0
  %1183 = vmatpush1.msra.mxu0 0.0
  %1184 = vmatprep.subr.mxu0 0.0
  %1185 = vmatpush1.msra.mxu0 0.0
  %1186 = vmatprep.subr.mxu0 0.0
  %1187 = vmatpush1.msra.mxu0 0.0
  %1188 = vmatprep.subr.mxu0 0.0
  %1189 = vmatpush1.msra.mxu0 0.0
  %1190 = vmatprep.subr.mxu0 0.0
  %1191 = vmatpush1.msra.mxu0 0.0
  %1192 = vmatprep.subr.mxu0 0.0
  %1193 = vmatpush1.msra.mxu0 0.0
  %1194 = vmatprep.subr.mxu0 0.0
  %1195 = vmatpush1.msra.mxu0 0.0
  %1196 = vmatprep.subr.mxu0 0.0
  %1197 = vmatpush1.msra.mxu0 0.0
  %1198 = vmatprep.subr.mxu0 0.0
  %1199 = vmatpush1.msra.mxu0 0.0
  %1200 = vmatprep.subr.mxu0 0.0
  %1201 = vmatpush1.msra.mxu0 0.0
  %1202 = vmatprep.subr.mxu0 0.0
  %1203 = vmatpush1.msra.mxu0 0.0
  %1204 = vmatprep.subr.mxu0 0.0
  %1205 = vmatpush1.msra.mxu0 0.0
  %1206 = vmatprep.subr.mxu0 0.0
  %1207 = vmatpush1.msra.mxu0 0.0
  %1208 = vmatprep.subr.mxu0 0.0
  %1209 = vmatpush1.msra.mxu0 0.0
  %1210 = vmatprep.subr.mxu0 0.0
  %1211 = vmatpush1.msra.mxu0 0.0
  %1212 = vmatprep.subr.mxu0 0.0
  %1213 = vmatpush1.msra.mxu0 0.0
  %1214 = vmatprep.subr.mxu0 0.0
  %1215 = vmatpush1.msra.mxu0 0.0
  %1216 = vmatprep.subr.mxu0 0.0
  %1217 = vmatpush1.msra.mxu0 0.0
  %1218 = vmatprep.subr.mxu0 0.0
  %1219 = vmatpush1.msra.mxu0 0.0
  %1220 = vmatprep.subr.mxu0 0.0
  %1221 = vmatpush1.msra.mxu0 0.0
  %1222 = vmatprep.subr.mxu0 0.0
  %1223 = vmatpush1.msra.mxu0 0.0
  %1224 = vmatprep.subr.mxu0 0.0
  %1225 = vmatpush1.msra.mxu0 0.0
  %1226 = vmatprep.subr.mxu0 0.0
  %1227 = vmatpush1.msra.mxu0 0.0
  %1228 = vmatprep.subr.mxu0 0.0
  %1229 = vmatpush1.msra.mxu0 0.0
  %1230 = vmatprep.subr.mxu0 0.0
  %1231 = vmatpush1.msra.mxu0 0.0
  %1232 = vmatprep.mubr.f32.mxu0 0.0
  %1233 = vmatmul.mubr.f32.gmra.mrb[0].mxu0 %v1166
  %v1234 = vpop.f32.mrb[0].mxu0
  %v1235 = vadd.f32 0.0, %v1234
  %v1236 = vpop.f32.mrb[0].mxu0
  %1237 = vdwg.mxu0
  %v1239 = vsel %vm38, %v702, 0
  %1241 = vmatprep.subr.mxu0 0.0
  %1242 = vmatpush1.msra.mxu0 %v37
  %1243 = vmatprep.subr.mxu0 0.0
  %1244 = vmatpush1.msra.mxu0 0.0
  %1245 = vmatprep.subr.mxu0 0.0
  %1246 = vmatpush1.msra.mxu0 0.0
  %1247 = vmatprep.subr.mxu0 0.0
  %1248 = vmatpush1.msra.mxu0 0.0
  %1249 = vmatprep.subr.mxu0 0.0
  %1250 = vmatpush1.msra.mxu0 0.0
  %1251 = vmatprep.subr.mxu0 0.0
  %1252 = vmatpush1.msra.mxu0 0.0
  %1253 = vmatprep.subr.mxu0 0.0
  %1254 = vmatpush1.msra.mxu0 0.0
  %1255 = vmatprep.subr.mxu0 0.0
  %1256 = vmatpush1.msra.mxu0 0.0
  %1257 = vmatprep.subr.mxu0 0.0
  %1258 = vmatpush1.msra.mxu0 0.0
  %1259 = vmatprep.subr.mxu0 0.0
  %1260 = vmatpush1.msra.mxu0 0.0
  %1261 = vmatprep.subr.mxu0 0.0
  %1262 = vmatpush1.msra.mxu0 0.0
  %1263 = vmatprep.subr.mxu0 0.0
  %1264 = vmatpush1.msra.mxu0 0.0
  %1265 = vmatprep.subr.mxu0 0.0
  %1266 = vmatpush1.msra.mxu0 0.0
  %1267 = vmatprep.subr.mxu0 0.0
  %1268 = vmatpush1.msra.mxu0 0.0
  %1269 = vmatprep.subr.mxu0 0.0
  %1270 = vmatpush1.msra.mxu0 0.0
  %1271 = vmatprep.subr.mxu0 0.0
  %1272 = vmatpush1.msra.mxu0 0.0
  %1273 = vmatprep.subr.mxu0 0.0
  %1274 = vmatpush1.msra.mxu0 0.0
  %1275 = vmatprep.subr.mxu0 0.0
  %1276 = vmatpush1.msra.mxu0 0.0
  %1277 = vmatprep.subr.mxu0 0.0
  %1278 = vmatpush1.msra.mxu0 0.0
  %1279 = vmatprep.subr.mxu0 0.0
  %1280 = vmatpush1.msra.mxu0 0.0
  %1281 = vmatprep.subr.mxu0 0.0
  %1282 = vmatpush1.msra.mxu0 0.0
  %1283 = vmatprep.subr.mxu0 0.0
  %1284 = vmatpush1.msra.mxu0 0.0
  %1285 = vmatprep.subr.mxu0 0.0
  %1286 = vmatpush1.msra.mxu0 0.0
  %1287 = vmatprep.subr.mxu0 0.0
  %1288 = vmatpush1.msra.mxu0 0.0
  %1289 = vmatprep.subr.mxu0 0.0
  %1290 = vmatpush1.msra.mxu0 0.0
  %1291 = vmatprep.subr.mxu0 0.0
  %1292 = vmatpush1.msra.mxu0 0.0
  %1293 = vmatprep.subr.mxu0 0.0
  %1294 = vmatpush1.msra.mxu0 0.0
  %1295 = vmatprep.subr.mxu0 0.0
  %1296 = vmatpush1.msra.mxu0 0.0
  %1297 = vmatprep.subr.mxu0 0.0
  %1298 = vmatpush1.msra.mxu0 0.0
  %1299 = vmatprep.subr.mxu0 0.0
  %1300 = vmatpush1.msra.mxu0 0.0
  %1301 = vmatprep.subr.mxu0 0.0
  %1302 = vmatpush1.msra.mxu0 0.0
  %1303 = vmatprep.subr.mxu0 0.0
  %1304 = vmatpush1.msra.mxu0 0.0
  %1305 = vmatprep.mubr.f32.mxu0 0.0
  %1306 = vmatmul.mubr.f32.gmra.mrb[0].mxu0 %v1239
  %v1307 = vpop.f32.mrb[0].mxu0
  %v1308 = vadd.f32 0.0, %v1307
  %v1309 = vpop.f32.mrb[0].mxu0
  %1310 = vdwg.mxu0
  %v1311 = vrcp.pop %v705
  %v1312 = vmul.f32 %v797, %v1311
  %v1313 = vrcp.pop %v708
  %v1314 = vmul.f32 %v870, %v1313
  %v1315 = vrcp.pop %v711
  %v1316 = vmul.f32 %v943, %v1315
  %v1317 = vrcp.pop %v714
  %v1318 = vmul.f32 %v1016, %v1317
  %v1319 = vrcp.pop %v717
  %v1320 = vmul.f32 %v1089, %v1319
  %v1321 = vrcp.pop %v720
  %v1322 = vmul.f32 %v1162, %v1321
  %v1323 = vrcp.pop %v723
  %v1324 = vmul.f32 %v1235, %v1323
  %v1325 = vrcp.pop %v726
  %v1326 = vmul.f32 %v1308, %v1325
  %1327 = vst.msk [vmem:[%s3] sm:$0xff] %vm38, %v1312
  %1328 = vst.msk [vmem:[%s3 + $0x8] sm:$0xff] %vm38, %v1314
  %1329 = vst.msk [vmem:[%s3 + $0x10] sm:$0xff] %vm38, %v1316
  %1330 = vst.msk [vmem:[%s3 + $0x18] sm:$0xff] %vm38, %v1318
  %1331 = vst.msk [vmem:[%s3 + $0x20] sm:$0xff] %vm38, %v1320
  %1332 = vst.msk [vmem:[%s3 + $0x28] sm:$0xff] %vm38, %v1322
  %1333 = vst.msk [vmem:[%s3 + $0x30] sm:$0xff] %vm38, %v1324
  %1334 = vst.msk [vmem:[%s3 + $0x38] sm:$0xff] %vm38, %v1326
  // Predicated region
  $region14: #{transformer_encoder_forward.11} parent=0 // pred_check
    _
  $region15: #{transformer_encoder_forward.11} parent=0 // pred_check_branch
    %1336 = sbr.rel (0) target = $region17
  $region16: #{transformer_encoder_forward.11} parent=0 // pred_region
    _
  $region17: #{transformer_encoder_forward.11} parent=0 // pred_fallthru
    _
  // Predicated region
  $region18: #{transformer_encoder_forward.11} parent=0 // pred_check
    _
  $region19: #{transformer_encoder_forward.11} parent=0 // pred_check_branch
    %1338 = sbr.rel (0) target = $region21
  $region20: #{transformer_encoder_forward.11} parent=0 // pred_region
    _
  $region21: #{transformer_encoder_forward.11} parent=0 // pred_fallthru
    _

// kernel: transformer_encoder_forward.12
$region0: #{transformer_encoder_forward.12}
  #allocation0 [shape = 'u32[]', space=smem, size = 0x4, offset = 0x4, fixed_abs, tag = 'smem constant byte address 0x4 - core index']
  #allocation1 [shape = 'u32[144,128]{1,0:T(1,128)}', space=vmem, size = 0x12000, scoped, tag = 'internal scratch']
  %s0 = inlined_call_operand.vmem [shape: f32[16,32], index: 0, kind: input, shape index: {}]
  %s1 = inlined_call_operand.vmem [shape: f32[32,32], index: 1, kind: input, shape index: {}]
  %s2 = inlined_call_operand.vmem [shape: f32[1,32], index: 2, kind: input, shape index: {}]
  %s3 = inlined_call_operand.vmem [shape: f32[16,32], index: 3, kind: input, shape index: {}]
  %s4 = inlined_call_operand.vmem [shape: f32[1,32], index: 4, kind: input, shape index: {}]
  %s5 = inlined_call_operand.vmem [shape: f32[1,32], index: 5, kind: input, shape index: {}]
  %s6 = inlined_call_operand.vmem [shape: f32[16,32], index: 6, kind: output, shape index: {}]
  %s7 = sld [smem:[#allocation0]]
  $region34: #{transformer_encoder_forward.12} parent=0
    _
  %s9 = ssub.s32 1, %s7
  %s10 = scalar_select 0, %s9, %s7
  // Predicated region
  $region2: #{transformer_encoder_forward.12} parent=0 // pred_check
    _
  $region3: #{transformer_encoder_forward.12} parent=0 // pred_check_branch
    %12 = sbr.rel (0) target = $region5
  $region4: #{transformer_encoder_forward.12} parent=0 // pred_region
    _
  $region5: #{transformer_encoder_forward.12} parent=0 // pred_fallthru
    _
  // Predicated region
  $region6: #{transformer_encoder_forward.12} parent=0 // pred_check
    _
  $region7: #{transformer_encoder_forward.12} parent=0 // pred_check_branch
    %14 = sbr.rel (0) target = $region9
  $region8: #{transformer_encoder_forward.12} parent=0 // pred_region
    _
  $region9: #{transformer_encoder_forward.12} parent=0 // pred_fallthru
    _
  // Predicated region
  $region10: #{transformer_encoder_forward.12} parent=0 // pred_check
    _
  $region11: #{transformer_encoder_forward.12} parent=0 // pred_check_branch
    %16 = sbr.rel (0) target = $region13
  $region12: #{transformer_encoder_forward.12} parent=0 // pred_region
    _
  $region13: #{transformer_encoder_forward.12} parent=0 // pred_fallthru
    _
  // Predicated region
  $region14: #{transformer_encoder_forward.12} parent=0 // pred_check
    _
  $region15: #{transformer_encoder_forward.12} parent=0 // pred_check_branch
    %18 = sbr.rel (0) target = $region17
  $region16: #{transformer_encoder_forward.12} parent=0 // pred_region
    _
  $region17: #{transformer_encoder_forward.12} parent=0 // pred_fallthru
    _
  // Predicated region
  $region18: #{transformer_encoder_forward.12} parent=0 // pred_check
    _
  $region19: #{transformer_encoder_forward.12} parent=0 // pred_check_branch
    %20 = sbr.rel (0) target = $region21
  $region20: #{transformer_encoder_forward.12} parent=0 // pred_region
    _
  $region21: #{transformer_encoder_forward.12} parent=0 // pred_fallthru
    _
  // Predicated region
  $region22: #{transformer_encoder_forward.12} parent=0 // pred_check
    _
  $region23: #{transformer_encoder_forward.12} parent=0 // pred_check_branch
    %22 = sbr.rel (0) target = $region25
  $region24: #{transformer_encoder_forward.12} parent=0 // pred_region
    _
  $region25: #{transformer_encoder_forward.12} parent=0 // pred_fallthru
    _
  %v23 = vld [vmem:[%s0] sm:$0xff]
  %v24 = vld [vmem:[%s0 + $0x8] sm:$0xff]
  %v25 = vld [vmem:[%s1] sm:$0xff]
  %v26 = vld [vmem:[%s1 + $0x8] sm:$0xff]
  %v27 = vld [vmem:[%s1 + $0x10] sm:$0xff]
  %v28 = vld [vmem:[%s1 + $0x18] sm:$0xff]
  %v29 = vld [vmem:[%s2] sm:$0x1]
  %v31 = vlaneseq
  %v32 = vshrl.u32 %v31, 7
  %v33 = vsub.s32 0, %v32
  %v34 = vrot.slane %v29, %v33
  %vm36 = vcmask 261120
  %v38 = vsel %vm36, %v23, 0
  %v41 = vsel %vm36, %v24, 0
  %43 = vmatprep.subr.mxu0 0.0
  %44 = vmatpush1.msra.mxu0 %v25
  %45 = vmatprep.subr.mxu0 0.0
  %46 = vmatpush1.msra.mxu0 %v26
  %47 = vmatprep.subr.mxu0 0.0
  %48 = vmatpush1.msra.mxu0 %v27
  %49 = vmatprep.subr.mxu0 0.0
  %50 = vmatpush1.msra.mxu0 %v28
  %51 = vmatprep.subr.mxu0 0.0
  %52 = vmatpush1.msra.mxu0 0.0
  %53 = vmatprep.subr.mxu0 0.0
  %54 = vmatpush1.msra.mxu0 0.0
  %55 = vmatprep.subr.mxu0 0.0
  %56 = vmatpush1.msra.mxu0 0.0
  %57 = vmatprep.subr.mxu0 0.0
  %58 = vmatpush1.msra.mxu0 0.0
  %59 = vmatprep.subr.mxu0 0.0
  %60 = vmatpush1.msra.mxu0 0.0
  %61 = vmatprep.subr.mxu0 0.0
  %62 = vmatpush1.msra.mxu0 0.0
  %63 = vmatprep.subr.mxu0 0.0
  %64 = vmatpush1.msra.mxu0 0.0
  %65 = vmatprep.subr.mxu0 0.0
  %66 = vmatpush1.msra.mxu0 0.0
  %67 = vmatprep.subr.mxu0 0.0
  %68 = vmatpush1.msra.mxu0 0.0
  %69 = vmatprep.subr.mxu0 0.0
  %70 = vmatpush1.msra.mxu0 0.0
  %71 = vmatprep.subr.mxu0 0.0
  %72 = vmatpush1.msra.mxu0 0.0
  %73 = vmatprep.subr.mxu0 0.0
  %74 = vmatpush1.msra.mxu0 0.0
  %75 = vmatprep.subr.mxu0 0.0
  %76 = vmatpush1.msra.mxu0 0.0
  %77 = vmatprep.subr.mxu0 0.0
  %78 = vmatpush1.msra.mxu0 0.0
  %79 = vmatprep.subr.mxu0 0.0
  %80 = vmatpush1.msra.mxu0 0.0
  %81 = vmatprep.subr.mxu0 0.0
  %82 = vmatpush1.msra.mxu0 0.0
  %83 = vmatprep.subr.mxu0 0.0
  %84 = vmatpush1.msra.mxu0 0.0
  %85 = vmatprep.subr.mxu0 0.0
  %86 = vmatpush1.msra.mxu0 0.0
  %87 = vmatprep.subr.mxu0 0.0
  %88 = vmatpush1.msra.mxu0 0.0
  %89 = vmatprep.subr.mxu0 0.0
  %90 = vmatpush1.msra.mxu0 0.0
  %91 = vmatprep.subr.mxu0 0.0
  %92 = vmatpush1.msra.mxu0 0.0
  %93 = vmatprep.subr.mxu0 0.0
  %94 = vmatpush1.msra.mxu0 0.0
  %95 = vmatprep.subr.mxu0 0.0
  %96 = vmatpush1.msra.mxu0 0.0
  %97 = vmatprep.subr.mxu0 0.0
  %98 = vmatpush1.msra.mxu0 0.0
  %99 = vmatprep.subr.mxu0 0.0
  %100 = vmatpush1.msra.mxu0 0.0
  %101 = vmatprep.subr.mxu0 0.0
  %102 = vmatpush1.msra.mxu0 0.0
  %103 = vmatprep.subr.mxu0 0.0
  %104 = vmatpush1.msra.mxu0 0.0
  %105 = vmatprep.subr.mxu0 0.0
  %106 = vmatpush1.msra.mxu0 0.0
  %107 = vmatprep.mubr.f32.mxu0 0.0
  %108 = vmatmul.mubr.f32.gmra.mrb[0].mxu0 %v38
  %v109 = vpop.f32.mrb[0].mxu0
  %v110 = vadd.f32 %v34, %v109
  %v111 = vpop.f32.mrb[0].mxu0
  %112 = vmatprep.mubr.f32.mxu0 0.0
  %113 = vmatmul.mubr.f32.gmra.mrb[0].mxu0 %v41
  %v114 = vpop.f32.mrb[0].mxu0
  %v115 = vadd.f32 %v34, %v114
  %v116 = vpop.f32.mrb[0].mxu0
  %117 = vdwg.mxu0
  %v118 = vld [vmem:[%s3] sm:$0xff]
  %v119 = vld [vmem:[%s3 + $0x8] sm:$0xff]
  %v120 = vadd.f32 %v110, %v118
  %v121 = vadd.f32 %v115, %v119
  %v122 = vsel %vm36, %v120, 0.0
  %123 = vadd.xlane.f32.xlu0 %v122
  %v124 = vpop.xlane.xlu0 %123
  %v125 = vsel %vm36, %v121, 0.0
  %126 = vadd.xlane.f32.xlu0 %v125
  %v127 = vpop.xlane.xlu0 %126
  %v128 = vrcp.pop 32.0
  %v129 = vmul.f32 %v124, %v128
  %v130 = vmul.f32 %v127, %v128
  %v131 = vsub.f32 %v120, %v129
  %v132 = vsub.f32 %v121, %v130
  %v133 = vmul.f32 %v131, %v131
  %v134 = vmul.f32 %v132, %v132
  %v135 = vsel %vm36, %v133, 0.0
  %136 = vadd.xlane.f32.xlu0 %v135
  %v137 = vpop.xlane.xlu0 %136
  %v138 = vsel %vm36, %v134, 0.0
  %139 = vadd.xlane.f32.xlu0 %v138
  %v140 = vpop.xlane.xlu0 %139
  %v141 = vmul.f32 %v137, %v128
  %v142 = vmul.f32 %v140, %v128
  %v143 = vadd.f32 %v141, 1e-05
  %v144 = vadd.f32 %v142, 1e-05
  %v145 = vrsqrt.pop %v143
  %v146 = vrsqrt.pop %v144
  %v147 = vmul.f32 %v131, %v145
  %v148 = vmul.f32 %v132, %v146
  %v149 = vld [vmem:[%s4] sm:$0x1]
  %v151 = vlaneseq
  %v152 = vshrl.u32 %v151, 7
  %v153 = vsub.s32 0, %v152
  %v154 = vrot.slane %v149, %v153
  %v156 = vmul.f32 %v147, %v154
  %v157 = vmul.f32 %v148, %v154
  %v158 = vld [vmem:[%s5] sm:$0x1]
  %v160 = vlaneseq
  %v161 = vshrl.u32 %v160, 7
  %v162 = vsub.s32 0, %v161
  %v163 = vrot.slane %v158, %v162
  %v165 = vadd.f32 %v156, %v163
  %v166 = vadd.f32 %v157, %v163
  %167 = vst.msk [vmem:[%s6] sm:$0xff] %vm36, %v165
  %168 = vst.msk [vmem:[%s6 + $0x8] sm:$0xff] %vm36, %v166
  // Predicated region
  $region26: #{transformer_encoder_forward.12} parent=0 // pred_check
    _
  $region27: #{transformer_encoder_forward.12} parent=0 // pred_check_branch
    %170 = sbr.rel (0) target = $region29
  $region28: #{transformer_encoder_forward.12} parent=0 // pred_region
    _
  $region29: #{transformer_encoder_forward.12} parent=0 // pred_fallthru
    _
  // Predicated region
  $region30: #{transformer_encoder_forward.12} parent=0 // pred_check
    _
  $region31: #{transformer_encoder_forward.12} parent=0 // pred_check_branch
    %172 = sbr.rel (0) target = $region33
  $region32: #{transformer_encoder_forward.12} parent=0 // pred_region
    _
  $region33: #{transformer_encoder_forward.12} parent=0 // pred_fallthru
    _

// kernel: transformer_encoder_forward.17
$region0: #{transformer_encoder_forward.17}
  #allocation0 [shape = 'u32[]', space=smem, size = 0x4, offset = 0x4, fixed_abs, tag = 'smem constant byte address 0x4 - core index']
  #allocation1 [shape = 'u32[144,128]{1,0:T(1,128)}', space=vmem, size = 0x12000, scoped, tag = 'internal scratch']
  %s0 = inlined_call_operand.vmem [shape: f32[16,32], index: 0, kind: input, shape index: {}]
  %s1 = inlined_call_operand.vmem [shape: f32[32,64], index: 1, kind: input, shape index: {}]
  %s2 = inlined_call_operand.vmem [shape: f32[1,64], index: 2, kind: input, shape index: {}]
  %s3 = inlined_call_operand.vmem [shape: f32[64,32], index: 3, kind: input, shape index: {}]
  %s4 = inlined_call_operand.vmem [shape: f32[1,32], index: 4, kind: input, shape index: {}]
  %s5 = inlined_call_operand.vmem [shape: f32[1,32], index: 5, kind: input, shape index: {}]
  %s6 = inlined_call_operand.vmem [shape: f32[1,32], index: 6, kind: input, shape index: {}]
  %s7 = inlined_call_operand.hbm [shape: f32[16,32], index: 7, kind: output, shape index: {}]
  %s8 = sld [smem:[#allocation0]]
  $region38: #{transformer_encoder_forward.17} parent=0
    _
  %s10 = ssub.s32 1, %s8
  %s11 = scalar_select 0, %s10, %s8
  $region1: #{transformer_encoder_forward.17} parent=0
    #allocation2 [shape = 'u8[8192]{0}', space=vmem, size = 0x2000, scoped, tag = 'output window, operand 0, single buffered']
    #allocation3 [shape = 's32[1]{0}', space=sflag, size = 0x4, scoped, tag = 'scoped memory for transformer_encoder_forward.17']
    %12 = vsyncpa [#allocation3], 0
    // Predicated region
    $region2: #{transformer_encoder_forward.17} parent=1 // pred_check
      _
    $region3: #{transformer_encoder_forward.17} parent=1 // pred_check_branch
      %14 = sbr.rel (0) target = $region5
    $region4: #{transformer_encoder_forward.17} parent=1 // pred_region
      _
    $region5: #{transformer_encoder_forward.17} parent=1 // pred_fallthru
      _
    // Predicated region
    $region6: #{transformer_encoder_forward.17} parent=1 // pred_check
      _
    $region7: #{transformer_encoder_forward.17} parent=1 // pred_check_branch
      %16 = sbr.rel (0) target = $region9
    $region8: #{transformer_encoder_forward.17} parent=1 // pred_region
      _
    $region9: #{transformer_encoder_forward.17} parent=1 // pred_fallthru
      _
    // Predicated region
    $region10: #{transformer_encoder_forward.17} parent=1 // pred_check
      _
    $region11: #{transformer_encoder_forward.17} parent=1 // pred_check_branch
      %18 = sbr.rel (0) target = $region13
    $region12: #{transformer_encoder_forward.17} parent=1 // pred_region
      _
    $region13: #{transformer_encoder_forward.17} parent=1 // pred_fallthru
      _
    // Predicated region
    $region14: #{transformer_encoder_forward.17} parent=1 // pred_check
      _
    $region15: #{transformer_encoder_forward.17} parent=1 // pred_check_branch
      %20 = sbr.rel (0) target = $region17
    $region16: #{transformer_encoder_forward.17} parent=1 // pred_region
      _
    $region17: #{transformer_encoder_forward.17} parent=1 // pred_fallthru
      _
    // Predicated region
    $region18: #{transformer_encoder_forward.17} parent=1 // pred_check
      _
    $region19: #{transformer_encoder_forward.17} parent=1 // pred_check_branch
      %22 = sbr.rel (0) target = $region21
    $region20: #{transformer_encoder_forward.17} parent=1 // pred_region
      _
    $region21: #{transformer_encoder_forward.17} parent=1 // pred_fallthru
      _
    // Predicated region
    $region22: #{transformer_encoder_forward.17} parent=1 // pred_check
      _
    $region23: #{transformer_encoder_forward.17} parent=1 // pred_check_branch
      %24 = sbr.rel (0) target = $region25
    $region24: #{transformer_encoder_forward.17} parent=1 // pred_region
      _
    $region25: #{transformer_encoder_forward.17} parent=1 // pred_fallthru
      _
    // Predicated region
    $region26: #{transformer_encoder_forward.17} parent=1 // pred_check
      _
    $region27: #{transformer_encoder_forward.17} parent=1 // pred_check_branch
      %26 = sbr.rel (0) target = $region29
    $region28: #{transformer_encoder_forward.17} parent=1 // pred_region
      _
    $region29: #{transformer_encoder_forward.17} parent=1 // pred_fallthru
      _
    %v27 = vld [vmem:[%s0] sm:$0xff]
    %v28 = vld [vmem:[%s0 + $0x8] sm:$0xff]
    %v29 = vld [vmem:[%s1] sm:$0xff]
    %v30 = vld [vmem:[%s1 + $0x8] sm:$0xff]
    %v31 = vld [vmem:[%s1 + $0x10] sm:$0xff]
    %v32 = vld [vmem:[%s1 + $0x18] sm:$0xff]
    %v33 = vld [vmem:[%s2] sm:$0x1]
    %v35 = vlaneseq
    %v36 = vshrl.u32 %v35, 7
    %v37 = vsub.s32 0, %v36
    %v38 = vrot.slane %v33, %v37
    %vm40 = vcmask 261120
    %v42 = vsel %vm40, %v27, 0
    %v45 = vsel %vm40, %v28, 0
    %47 = vmatprep.subr.mxu0 0.0
    %48 = vmatpush1.msra.mxu0 %v29
    %49 = vmatprep.subr.mxu0 0.0
    %50 = vmatpush1.msra.mxu0 %v30
    %51 = vmatprep.subr.mxu0 0.0
    %52 = vmatpush1.msra.mxu0 %v31
    %53 = vmatprep.subr.mxu0 0.0
    %54 = vmatpush1.msra.mxu0 %v32
    %55 = vmatprep.subr.mxu0 0.0
    %56 = vmatpush1.msra.mxu0 0.0
    %57 = vmatprep.subr.mxu0 0.0
    %58 = vmatpush1.msra.mxu0 0.0
    %59 = vmatprep.subr.mxu0 0.0
    %60 = vmatpush1.msra.mxu0 0.0
    %61 = vmatprep.subr.mxu0 0.0
    %62 = vmatpush1.msra.mxu0 0.0
    %63 = vmatprep.subr.mxu0 0.0
    %64 = vmatpush1.msra.mxu0 0.0
    %65 = vmatprep.subr.mxu0 0.0
    %66 = vmatpush1.msra.mxu0 0.0
    %67 = vmatprep.subr.mxu0 0.0
    %68 = vmatpush1.msra.mxu0 0.0
    %69 = vmatprep.subr.mxu0 0.0
    %70 = vmatpush1.msra.mxu0 0.0
    %71 = vmatprep.subr.mxu0 0.0
    %72 = vmatpush1.msra.mxu0 0.0
    %73 = vmatprep.subr.mxu0 0.0
    %74 = vmatpush1.msra.mxu0 0.0
    %75 = vmatprep.subr.mxu0 0.0
    %76 = vmatpush1.msra.mxu0 0.0
    %77 = vmatprep.subr.mxu0 0.0
    %78 = vmatpush1.msra.mxu0 0.0
    %79 = vmatprep.subr.mxu0 0.0
    %80 = vmatpush1.msra.mxu0 0.0
    %81 = vmatprep.subr.mxu0 0.0
    %82 = vmatpush1.msra.mxu0 0.0
    %83 = vmatprep.subr.mxu0 0.0
    %84 = vmatpush1.msra.mxu0 0.0
    %85 = vmatprep.subr.mxu0 0.0
    %86 = vmatpush1.msra.mxu0 0.0
    %87 = vmatprep.subr.mxu0 0.0
    %88 = vmatpush1.msra.mxu0 0.0
    %89 = vmatprep.subr.mxu0 0.0
    %90 = vmatpush1.msra.mxu0 0.0
    %91 = vmatprep.subr.mxu0 0.0
    %92 = vmatpush1.msra.mxu0 0.0
    %93 = vmatprep.subr.mxu0 0.0
    %94 = vmatpush1.msra.mxu0 0.0
    %95 = vmatprep.subr.mxu0 0.0
    %96 = vmatpush1.msra.mxu0 0.0
    %97 = vmatprep.subr.mxu0 0.0
    %98 = vmatpush1.msra.mxu0 0.0
    %99 = vmatprep.subr.mxu0 0.0
    %100 = vmatpush1.msra.mxu0 0.0
    %101 = vmatprep.subr.mxu0 0.0
    %102 = vmatpush1.msra.mxu0 0.0
    %103 = vmatprep.subr.mxu0 0.0
    %104 = vmatpush1.msra.mxu0 0.0
    %105 = vmatprep.subr.mxu0 0.0
    %106 = vmatpush1.msra.mxu0 0.0
    %107 = vmatprep.subr.mxu0 0.0
    %108 = vmatpush1.msra.mxu0 0.0
    %109 = vmatprep.subr.mxu0 0.0
    %110 = vmatpush1.msra.mxu0 0.0
    %111 = vmatprep.mubr.f32.mxu0 0.0
    %112 = vmatmul.mubr.f32.gmra.mrb[0].mxu0 %v42
    %v113 = vpop.f32.mrb[0].mxu0
    %v114 = vadd.f32 %v38, %v113
    %v115 = vpop.f32.mrb[0].mxu0
    %116 = vmatprep.mubr.f32.mxu0 0.0
    %117 = vmatmul.mubr.f32.gmra.mrb[0].mxu0 %v45
    %v118 = vpop.f32.mrb[0].mxu0
    %v119 = vadd.f32 %v38, %v118
    %v120 = vpop.f32.mrb[0].mxu0
    %121 = vdwg.mxu0
    %v122 = vmax.f32 %v114, 0.0
    %v123 = vmax.f32 %v119, 0.0
    %v124 = vld [vmem:[%s3] sm:$0xff]
    %v125 = vld [vmem:[%s3 + $0x8] sm:$0xff]
    %v126 = vld [vmem:[%s3 + $0x10] sm:$0xff]
    %v127 = vld [vmem:[%s3 + $0x18] sm:$0xff]
    %v128 = vld [vmem:[%s3 + $0x20] sm:$0xff]
    %v129 = vld [vmem:[%s3 + $0x28] sm:$0xff]
    %v130 = vld [vmem:[%s3 + $0x30] sm:$0xff]
    %v131 = vld [vmem:[%s3 + $0x38] sm:$0xff]
    %v132 = vld [vmem:[%s4] sm:$0x1]
    %v134 = vlaneseq
    %v135 = vshrl.u32 %v134, 7
    %v136 = vsub.s32 0, %v135
    %v137 = vrot.slane %v132, %v136
    %vm139 = vcmask 523264
    %v141 = vsel %vm139, %v122, 0
    %v144 = vsel %vm139, %v123, 0
    %146 = vmatprep.subr.mxu0 0.0
    %147 = vmatpush1.msra.mxu0 %v124
    %148 = vmatprep.subr.mxu0 0.0
    %149 = vmatpush1.msra.mxu0 %v125
    %150 = vmatprep.subr.mxu0 0.0
    %151 = vmatpush1.msra.mxu0 %v126
    %152 = vmatprep.subr.mxu0 0.0
    %153 = vmatpush1.msra.mxu0 %v127
    %154 = vmatprep.subr.mxu0 0.0
    %155 = vmatpush1.msra.mxu0 %v128
    %156 = vmatprep.subr.mxu0 0.0
    %157 = vmatpush1.msra.mxu0 %v129
    %158 = vmatprep.subr.mxu0 0.0
    %159 = vmatpush1.msra.mxu0 %v130
    %160 = vmatprep.subr.mxu0 0.0
    %161 = vmatpush1.msra.mxu0 %v131
    %162 = vmatprep.subr.mxu0 0.0
    %163 = vmatpush1.msra.mxu0 0.0
    %164 = vmatprep.subr.mxu0 0.0
    %165 = vmatpush1.msra.mxu0 0.0
    %166 = vmatprep.subr.mxu0 0.0
    %167 = vmatpush1.msra.mxu0 0.0
    %168 = vmatprep.subr.mxu0 0.0
    %169 = vmatpush1.msra.mxu0 0.0
    %170 = vmatprep.subr.mxu0 0.0
    %171 = vmatpush1.msra.mxu0 0.0
    %172 = vmatprep.subr.mxu0 0.0
    %173 = vmatpush1.msra.mxu0 0.0
    %174 = vmatprep.subr.mxu0 0.0
    %175 = vmatpush1.msra.mxu0 0.0
    %176 = vmatprep.subr.mxu0 0.0
    %177 = vmatpush1.msra.mxu0 0.0
    %178 = vmatprep.subr.mxu0 0.0
    %179 = vmatpush1.msra.mxu0 0.0
    %180 = vmatprep.subr.mxu0 0.0
    %181 = vmatpush1.msra.mxu0 0.0
    %182 = vmatprep.subr.mxu0 0.0
    %183 = vmatpush1.msra.mxu0 0.0
    %184 = vmatprep.subr.mxu0 0.0
    %185 = vmatpush1.msra.mxu0 0.0
    %186 = vmatprep.subr.mxu0 0.0
    %187 = vmatpush1.msra.mxu0 0.0
    %188 = vmatprep.subr.mxu0 0.0
    %189 = vmatpush1.msra.mxu0 0.0
    %190 = vmatprep.subr.mxu0 0.0
    %191 = vmatpush1.msra.mxu0 0.0
    %192 = vmatprep.subr.mxu0 0.0
    %193 = vmatpush1.msra.mxu0 0.0
    %194 = vmatprep.subr.mxu0 0.0
    %195 = vmatpush1.msra.mxu0 0.0
    %196 = vmatprep.subr.mxu0 0.0
    %197 = vmatpush1.msra.mxu0 0.0
    %198 = vmatprep.subr.mxu0 0.0
    %199 = vmatpush1.msra.mxu0 0.0
    %200 = vmatprep.subr.mxu0 0.0
    %201 = vmatpush1.msra.mxu0 0.0
    %202 = vmatprep.subr.mxu0 0.0
    %203 = vmatpush1.msra.mxu0 0.0
    %204 = vmatprep.subr.mxu0 0.0
    %205 = vmatpush1.msra.mxu0 0.0
    %206 = vmatprep.subr.mxu0 0.0
    %207 = vmatpush1.msra.mxu0 0.0
    %208 = vmatprep.subr.mxu0 0.0
    %209 = vmatpush1.msra.mxu0 0.0
    %210 = vmatprep.mubr.f32.mxu0 0.0
    %211 = vmatmul.mubr.f32.gmra.mrb[0].mxu0 %v141
    %v212 = vpop.f32.mrb[0].mxu0
    %v213 = vadd.f32 %v137, %v212
    %v214 = vpop.f32.mrb[0].mxu0
    %215 = vmatprep.mubr.f32.mxu0 0.0
    %216 = vmatmul.mubr.f32.gmra.mrb[0].mxu0 %v144
    %v217 = vpop.f32.mrb[0].mxu0
    %v218 = vadd.f32 %v137, %v217
    %v219 = vpop.f32.mrb[0].mxu0
    %220 = vdwg.mxu0
    %v221 = vadd.f32 %v213, %v27
    %v222 = vadd.f32 %v218, %v28
    %v223 = vsel %vm40, %v221, 0.0
    %224 = vadd.xlane.f32.xlu0 %v223
    %v225 = vpop.xlane.xlu0 %224
    %v226 = vsel %vm40, %v222, 0.0
    %227 = vadd.xlane.f32.xlu0 %v226
    %v228 = vpop.xlane.xlu0 %227
    %v229 = vrcp.pop 32.0
    %v230 = vmul.f32 %v225, %v229
    %v231 = vmul.f32 %v228, %v229
    %v232 = vsub.f32 %v221, %v230
    %v233 = vsub.f32 %v222, %v231
    %v234 = vmul.f32 %v232, %v232
    %v235 = vmul.f32 %v233, %v233
    %v236 = vsel %vm40, %v234, 0.0
    %237 = vadd.xlane.f32.xlu0 %v236
    %v238 = vpop.xlane.xlu0 %237
    %v239 = vsel %vm40, %v235, 0.0
    %240 = vadd.xlane.f32.xlu0 %v239
    %v241 = vpop.xlane.xlu0 %240
    %v242 = vmul.f32 %v238, %v229
    %v243 = vmul.f32 %v241, %v229
    %v244 = vadd.f32 %v242, 1e-05
    %v245 = vadd.f32 %v243, 1e-05
    %v246 = vrsqrt.pop %v244
    %v247 = vrsqrt.pop %v245
    %v248 = vmul.f32 %v232, %v246
    %v249 = vmul.f32 %v233, %v247
    %v250 = vld [vmem:[%s5] sm:$0x1]
    %v252 = vlaneseq
    %v253 = vshrl.u32 %v252, 7
    %v254 = vsub.s32 0, %v253
    %v255 = vrot.slane %v250, %v254
    %v257 = vmul.f32 %v248, %v255
    %v258 = vmul.f32 %v249, %v255
    %v259 = vld [vmem:[%s6] sm:$0x1]
    %v261 = vlaneseq
    %v262 = vshrl.u32 %v261, 7
    %v263 = vsub.s32 0, %v262
    %v264 = vrot.slane %v259, %v263
    %v266 = vadd.f32 %v257, %v264
    %v267 = vadd.f32 %v258, %v264
    %268 = vst.msk [vmem:[#allocation2] sm:$0xff] %vm40, %v266
    %269 = vst.msk [vmem:[#allocation2 + $0x8] sm:$0xff] %vm40, %v267
    // Predicated region
    $region30: #{transformer_encoder_forward.17} parent=1 // pred_check
      _
    $region31: #{transformer_encoder_forward.17} parent=1 // pred_check_branch
      %271 = sbr.rel (0) target = $region33
    $region32: #{transformer_encoder_forward.17} parent=1 // pred_region
      %s273 = ssub.s32 256, 256
      %274 = vsyncadd [#allocation3], %s273
      %s275 = sshll.u32 [#allocation2], 4
      %s276 = int_to_ptr.vmem [resolvable:$true] %s275
      %281 = dma.vmem_to_hbm [thread:$0]  %s276, 256, %s7, [#allocation3], 128, 128, 8
    $region33: #{transformer_encoder_forward.17} parent=1 // pred_fallthru
      _
    // Predicated region
    $region34: #{transformer_encoder_forward.17} parent=1 // pred_check
      _
    $region35: #{transformer_encoder_forward.17} parent=1 // pred_check_branch
      %283 = sbr.rel (0) target = $region37
    $region36: #{transformer_encoder_forward.17} parent=1 // pred_region
      %284 = dma.done [#allocation3], 256
    $region37: #{transformer_encoder_forward.17} parent=1 // pred_fallthru
      _
    %285 = vsyncpa [#allocation3], 1

// kernel: transformer_encoder_forward.13
$region0: #{transformer_encoder_forward.13}
  #allocation0 [shape = 'u32[]', space=smem, size = 0x4, offset = 0x4, fixed_abs, tag = 'smem constant byte address 0x4 - core index']
  #allocation1 [shape = 'u32[144,128]{1,0:T(1,128)}', space=vmem, size = 0x12000, scoped, tag = 'internal scratch']
  %s0 = inlined_call_operand.vmem [shape: f32[16,32], index: 0, kind: input, shape index: {}]
  %s1 = inlined_call_operand.vmem [shape: f32[32,64], index: 1, kind: input, shape index: {}]
  %s2 = inlined_call_operand.vmem [shape: f32[1,64], index: 2, kind: input, shape index: {}]
  %s3 = inlined_call_operand.vmem [shape: f32[64,32], index: 3, kind: input, shape index: {}]
  %s4 = inlined_call_operand.vmem [shape: f32[1,32], index: 4, kind: input, shape index: {}]
  %s5 = inlined_call_operand.vmem [shape: f32[1,32], index: 5, kind: input, shape index: {}]
  %s6 = inlined_call_operand.vmem [shape: f32[1,32], index: 6, kind: input, shape index: {}]
  %s7 = inlined_call_operand.vmem [shape: f32[16,32], index: 7, kind: output, shape index: {}]
  %s8 = sld [smem:[#allocation0]]
  $region38: #{transformer_encoder_forward.13} parent=0
    _
  %s10 = ssub.s32 1, %s8
  %s11 = scalar_select 0, %s10, %s8
  // Predicated region
  $region2: #{transformer_encoder_forward.13} parent=0 // pred_check
    _
  $region3: #{transformer_encoder_forward.13} parent=0 // pred_check_branch
    %13 = sbr.rel (0) target = $region5
  $region4: #{transformer_encoder_forward.13} parent=0 // pred_region
    _
  $region5: #{transformer_encoder_forward.13} parent=0 // pred_fallthru
    _
  // Predicated region
  $region6: #{transformer_encoder_forward.13} parent=0 // pred_check
    _
  $region7: #{transformer_encoder_forward.13} parent=0 // pred_check_branch
    %15 = sbr.rel (0) target = $region9
  $region8: #{transformer_encoder_forward.13} parent=0 // pred_region
    _
  $region9: #{transformer_encoder_forward.13} parent=0 // pred_fallthru
    _
  // Predicated region
  $region10: #{transformer_encoder_forward.13} parent=0 // pred_check
    _
  $region11: #{transformer_encoder_forward.13} parent=0 // pred_check_branch
    %17 = sbr.rel (0) target = $region13
  $region12: #{transformer_encoder_forward.13} parent=0 // pred_region
    _
  $region13: #{transformer_encoder_forward.13} parent=0 // pred_fallthru
    _
  // Predicated region
  $region14: #{transformer_encoder_forward.13} parent=0 // pred_check
    _
  $region15: #{transformer_encoder_forward.13} parent=0 // pred_check_branch
    %19 = sbr.rel (0) target = $region17
  $region16: #{transformer_encoder_forward.13} parent=0 // pred_region
    _
  $region17: #{transformer_encoder_forward.13} parent=0 // pred_fallthru
    _
  // Predicated region
  $region18: #{transformer_encoder_forward.13} parent=0 // pred_check
    _
  $region19: #{transformer_encoder_forward.13} parent=0 // pred_check_branch
    %21 = sbr.rel (0) target = $region21
  $region20: #{transformer_encoder_forward.13} parent=0 // pred_region
    _
  $region21: #{transformer_encoder_forward.13} parent=0 // pred_fallthru
    _
  // Predicated region
  $region22: #{transformer_encoder_forward.13} parent=0 // pred_check
    _
  $region23: #{transformer_encoder_forward.13} parent=0 // pred_check_branch
    %23 = sbr.rel (0) target = $region25
  $region24: #{transformer_encoder_forward.13} parent=0 // pred_region
    _
  $region25: #{transformer_encoder_forward.13} parent=0 // pred_fallthru
    _
  // Predicated region
  $region26: #{transformer_encoder_forward.13} parent=0 // pred_check
    _
  $region27: #{transformer_encoder_forward.13} parent=0 // pred_check_branch
    %25 = sbr.rel (0) target = $region29
  $region28: #{transformer_encoder_forward.13} parent=0 // pred_region
    _
  $region29: #{transformer_encoder_forward.13} parent=0 // pred_fallthru
    _
  %v26 = vld [vmem:[%s0] sm:$0xff]
  %v27 = vld [vmem:[%s0 + $0x8] sm:$0xff]
  %v28 = vld [vmem:[%s1] sm:$0xff]
  %v29 = vld [vmem:[%s1 + $0x8] sm:$0xff]
  %v30 = vld [vmem:[%s1 + $0x10] sm:$0xff]
  %v31 = vld [vmem:[%s1 + $0x18] sm:$0xff]
  %v32 = vld [vmem:[%s2] sm:$0x1]
  %v34 = vlaneseq
  %v35 = vshrl.u32 %v34, 7
  %v36 = vsub.s32 0, %v35
  %v37 = vrot.slane %v32, %v36
  %vm39 = vcmask 261120
  %v41 = vsel %vm39, %v26, 0
  %v44 = vsel %vm39, %v27, 0
  %46 = vmatprep.subr.mxu0 0.0
  %47 = vmatpush1.msra.mxu0 %v28
  %48 = vmatprep.subr.mxu0 0.0
  %49 = vmatpush1.msra.mxu0 %v29
  %50 = vmatprep.subr.mxu0 0.0
  %51 = vmatpush1.msra.mxu0 %v30
  %52 = vmatprep.subr.mxu0 0.0
  %53 = vmatpush1.msra.mxu0 %v31
  %54 = vmatprep.subr.mxu0 0.0
  %55 = vmatpush1.msra.mxu0 0.0
  %56 = vmatprep.subr.mxu0 0.0
  %57 = vmatpush1.msra.mxu0 0.0
  %58 = vmatprep.subr.mxu0 0.0
  %59 = vmatpush1.msra.mxu0 0.0
  %60 = vmatprep.subr.mxu0 0.0
  %61 = vmatpush1.msra.mxu0 0.0
  %62 = vmatprep.subr.mxu0 0.0
  %63 = vmatpush1.msra.mxu0 0.0
  %64 = vmatprep.subr.mxu0 0.0
  %65 = vmatpush1.msra.mxu0 0.0
  %66 = vmatprep.subr.mxu0 0.0
  %67 = vmatpush1.msra.mxu0 0.0
  %68 = vmatprep.subr.mxu0 0.0
  %69 = vmatpush1.msra.mxu0 0.0
  %70 = vmatprep.subr.mxu0 0.0
  %71 = vmatpush1.msra.mxu0 0.0
  %72 = vmatprep.subr.mxu0 0.0
  %73 = vmatpush1.msra.mxu0 0.0
  %74 = vmatprep.subr.mxu0 0.0
  %75 = vmatpush1.msra.mxu0 0.0
  %76 = vmatprep.subr.mxu0 0.0
  %77 = vmatpush1.msra.mxu0 0.0
  %78 = vmatprep.subr.mxu0 0.0
  %79 = vmatpush1.msra.mxu0 0.0
  %80 = vmatprep.subr.mxu0 0.0
  %81 = vmatpush1.msra.mxu0 0.0
  %82 = vmatprep.subr.mxu0 0.0
  %83 = vmatpush1.msra.mxu0 0.0
  %84 = vmatprep.subr.mxu0 0.0
  %85 = vmatpush1.msra.mxu0 0.0
  %86 = vmatprep.subr.mxu0 0.0
  %87 = vmatpush1.msra.mxu0 0.0
  %88 = vmatprep.subr.mxu0 0.0
  %89 = vmatpush1.msra.mxu0 0.0
  %90 = vmatprep.subr.mxu0 0.0
  %91 = vmatpush1.msra.mxu0 0.0
  %92 = vmatprep.subr.mxu0 0.0
  %93 = vmatpush1.msra.mxu0 0.0
  %94 = vmatprep.subr.mxu0 0.0
  %95 = vmatpush1.msra.mxu0 0.0
  %96 = vmatprep.subr.mxu0 0.0
  %97 = vmatpush1.msra.mxu0 0.0
  %98 = vmatprep.subr.mxu0 0.0
  %99 = vmatpush1.msra.mxu0 0.0
  %100 = vmatprep.subr.mxu0 0.0
  %101 = vmatpush1.msra.mxu0 0.0
  %102 = vmatprep.subr.mxu0 0.0
  %103 = vmatpush1.msra.mxu0 0.0
  %104 = vmatprep.subr.mxu0 0.0
  %105 = vmatpush1.msra.mxu0 0.0
  %106 = vmatprep.subr.mxu0 0.0
  %107 = vmatpush1.msra.mxu0 0.0
  %108 = vmatprep.subr.mxu0 0.0
  %109 = vmatpush1.msra.mxu0 0.0
  %110 = vmatprep.mubr.f32.mxu0 0.0
  %111 = vmatmul.mubr.f32.gmra.mrb[0].mxu0 %v41
  %v112 = vpop.f32.mrb[0].mxu0
  %v113 = vadd.f32 %v37, %v112
  %v114 = vpop.f32.mrb[0].mxu0
  %115 = vmatprep.mubr.f32.mxu0 0.0
  %116 = vmatmul.mubr.f32.gmra.mrb[0].mxu0 %v44
  %v117 = vpop.f32.mrb[0].mxu0
  %v118 = vadd.f32 %v37, %v117
  %v119 = vpop.f32.mrb[0].mxu0
  %120 = vdwg.mxu0
  %v121 = vmax.f32 %v113, 0.0
  %v122 = vmax.f32 %v118, 0.0
  %v123 = vld [vmem:[%s3] sm:$0xff]
  %v124 = vld [vmem:[%s3 + $0x8] sm:$0xff]
  %v125 = vld [vmem:[%s3 + $0x10] sm:$0xff]
  %v126 = vld [vmem:[%s3 + $0x18] sm:$0xff]
  %v127 = vld [vmem:[%s3 + $0x20] sm:$0xff]
  %v128 = vld [vmem:[%s3 + $0x28] sm:$0xff]
  %v129 = vld [vmem:[%s3 + $0x30] sm:$0xff]
  %v130 = vld [vmem:[%s3 + $0x38] sm:$0xff]
  %v131 = vld [vmem:[%s4] sm:$0x1]
  %v133 = vlaneseq
  %v134 = vshrl.u32 %v133, 7
  %v135 = vsub.s32 0, %v134
  %v136 = vrot.slane %v131, %v135
  %vm138 = vcmask 523264
  %v140 = vsel %vm138, %v121, 0
  %v143 = vsel %vm138, %v122, 0
  %145 = vmatprep.subr.mxu0 0.0
  %146 = vmatpush1.msra.mxu0 %v123
  %147 = vmatprep.subr.mxu0 0.0
  %148 = vmatpush1.msra.mxu0 %v124
  %149 = vmatprep.subr.mxu0 0.0
  %150 = vmatpush1.msra.mxu0 %v125
  %151 = vmatprep.subr.mxu0 0.0
  %152 = vmatpush1.msra.mxu0 %v126
  %153 = vmatprep.subr.mxu0 0.0
  %154 = vmatpush1.msra.mxu0 %v127
  %155 = vmatprep.subr.mxu0 0.0
  %156 = vmatpush1.msra.mxu0 %v128
  %157 = vmatprep.subr.mxu0 0.0
  %158 = vmatpush1.msra.mxu0 %v129
  %159 = vmatprep.subr.mxu0 0.0
  %160 = vmatpush1.msra.mxu0 %v130
  %161 = vmatprep.subr.mxu0 0.0
  %162 = vmatpush1.msra.mxu0 0.0
  %163 = vmatprep.subr.mxu0 0.0
  %164 = vmatpush1.msra.mxu0 0.0
  %165 = vmatprep.subr.mxu0 0.0
  %166 = vmatpush1.msra.mxu0 0.0
  %167 = vmatprep.subr.mxu0 0.0
  %168 = vmatpush1.msra.mxu0 0.0
  %169 = vmatprep.subr.mxu0 0.0
  %170 = vmatpush1.msra.mxu0 0.0
  %171 = vmatprep.subr.mxu0 0.0
  %172 = vmatpush1.msra.mxu0 0.0
  %173 = vmatprep.subr.mxu0 0.0
  %174 = vmatpush1.msra.mxu0 0.0
  %175 = vmatprep.subr.mxu0 0.0
  %176 = vmatpush1.msra.mxu0 0.0
  %177 = vmatprep.subr.mxu0 0.0
  %178 = vmatpush1.msra.mxu0 0.0
  %179 = vmatprep.subr.mxu0 0.0
  %180 = vmatpush1.msra.mxu0 0.0
  %181 = vmatprep.subr.mxu0 0.0
  %182 = vmatpush1.msra.mxu0 0.0
  %183 = vmatprep.subr.mxu0 0.0
  %184 = vmatpush1.msra.mxu0 0.0
  %185 = vmatprep.subr.mxu0 0.0
  %186 = vmatpush1.msra.mxu0 0.0
  %187 = vmatprep.subr.mxu0 0.0
  %188 = vmatpush1.msra.mxu0 0.0
  %189 = vmatprep.subr.mxu0 0.0
  %190 = vmatpush1.msra.mxu0 0.0
  %191 = vmatprep.subr.mxu0 0.0
  %192 = vmatpush1.msra.mxu0 0.0
  %193 = vmatprep.subr.mxu0 0.0
  %194 = vmatpush1.msra.mxu0 0.0
  %195 = vmatprep.subr.mxu0 0.0
  %196 = vmatpush1.msra.mxu0 0.0
  %197 = vmatprep.subr.mxu0 0.0
  %198 = vmatpush1.msra.mxu0 0.0
  %199 = vmatprep.subr.mxu0 0.0
  %200 = vmatpush1.msra.mxu0 0.0
  %201 = vmatprep.subr.mxu0 0.0
  %202 = vmatpush1.msra.mxu0 0.0
  %203 = vmatprep.subr.mxu0 0.0
  %204 = vmatpush1.msra.mxu0 0.0
  %205 = vmatprep.subr.mxu0 0.0
  %206 = vmatpush1.msra.mxu0 0.0
  %207 = vmatprep.subr.mxu0 0.0
  %208 = vmatpush1.msra.mxu0 0.0
  %209 = vmatprep.mubr.f32.mxu0 0.0
  %210 = vmatmul.mubr.f32.gmra.mrb[0].mxu0 %v140
  %v211 = vpop.f32.mrb[0].mxu0
  %v212 = vadd.f32 %v136, %v211
  %v213 = vpop.f32.mrb[0].mxu0
  %214 = vmatprep.mubr.f32.mxu0 0.0
  %215 = vmatmul.mubr.f32.gmra.mrb[0].mxu0 %v143
  %v216 = vpop.f32.mrb[0].mxu0
  %v217 = vadd.f32 %v136, %v216
  %v218 = vpop.f32.mrb[0].mxu0
  %219 = vdwg.mxu0
  %v220 = vadd.f32 %v212, %v26
  %v221 = vadd.f32 %v217, %v27
  %v222 = vsel %vm39, %v220, 0.0
  %223 = vadd.xlane.f32.xlu0 %v222
  %v224 = vpop.xlane.xlu0 %223
  %v225 = vsel %vm39, %v221, 0.0
  %226 = vadd.xlane.f32.xlu0 %v225
  %v227 = vpop.xlane.xlu0 %226
  %v228 = vrcp.pop 32.0
  %v229 = vmul.f32 %v224, %v228
  %v230 = vmul.f32 %v227, %v228
  %v231 = vsub.f32 %v220, %v229
  %v232 = vsub.f32 %v221, %v230
  %v233 = vmul.f32 %v231, %v231
  %v234 = vmul.f32 %v232, %v232
  %v235 = vsel %vm39, %v233, 0.0
  %236 = vadd.xlane.f32.xlu0 %v235
  %v237 = vpop.xlane.xlu0 %236
  %v238 = vsel %vm39, %v234, 0.0
  %239 = vadd.xlane.f32.xlu0 %v238
  %v240 = vpop.xlane.xlu0 %239
  %v241 = vmul.f32 %v237, %v228
  %v242 = vmul.f32 %v240, %v228
  %v243 = vadd.f32 %v241, 1e-05
  %v244 = vadd.f32 %v242, 1e-05
  %v245 = vrsqrt.pop %v243
  %v246 = vrsqrt.pop %v244
  %v247 = vmul.f32 %v231, %v245
  %v248 = vmul.f32 %v232, %v246
  %v249 = vld [vmem:[%s5] sm:$0x1]
  %v251 = vlaneseq
  %v252 = vshrl.u32 %v251, 7
  %v253 = vsub.s32 0, %v252
  %v254 = vrot.slane %v249, %v253
  %v256 = vmul.f32 %v247, %v254
  %v257 = vmul.f32 %v248, %v254
  %v258 = vld [vmem:[%s6] sm:$0x1]
  %v260 = vlaneseq
  %v261 = vshrl.u32 %v260, 7
  %v262 = vsub.s32 0, %v261
  %v263 = vrot.slane %v258, %v262
  %v265 = vadd.f32 %v256, %v263
  %v266 = vadd.f32 %v257, %v263
  %267 = vst.msk [vmem:[%s7] sm:$0xff] %vm39, %v265
  %268 = vst.msk [vmem:[%s7 + $0x8] sm:$0xff] %vm39, %v266
  // Predicated region
  $region30: #{transformer_encoder_forward.13} parent=0 // pred_check
    _
  $region31: #{transformer_encoder_forward.13} parent=0 // pred_check_branch
    %270 = sbr.rel (0) target = $region33
  $region32: #{transformer_encoder_forward.13} parent=0 // pred_region
    _
  $region33: #{transformer_encoder_forward.13} parent=0 // pred_fallthru
    _
  // Predicated region
  $region34: #{transformer_encoder_forward.13} parent=0 // pred_check
    _
  $region35: #{transformer_encoder_forward.13} parent=0 // pred_check_branch
    %272 = sbr.rel (0) target = $region37
  $region36: #{transformer_encoder_forward.13} parent=0 // pred_region
    _
  $region37: #{transformer_encoder_forward.13} parent=0 // pred_fallthru
    _

</llo_original>
